<compile_context>
chip_gen: v7x
topology: tpu7x:2x2x1
jax: 0.10.0
libtpu: 0.0.40
codegen_flags: <defaults>
</compile_context>

<pallas_src>
import functools
from typing import NamedTuple, Tuple

import jax
import jax.numpy as jnp
from jax.experimental import pallas as pl
from jax.experimental.pallas import tpu as pltpu


# ----------------------------------------------------------------------------
# Flat, lane-dense layout geometry.
#
# Each zero-padded Hp x Wp image grid is flattened onto the lane axis and
# rounded up to a multiple of 128 lanes ("lseg"); channels sit on sublanes.
# A 3x3 'SAME' conv then becomes, per image, 9 accumulating
# (OC, Cp) x (Cp, lseg) MXU dots whose RHS is the image rolled by the tap's
# flat offset.
#
# INVARIANT (relied upon, do not break): rolled taps wrap around the image's
# lane segment, so output lanes on the padded-grid border ring and in the
# [Hp*Wp, lseg) tail are garbage.  Every *interior* output lane only reads
# lanes of its own image inside [0, Hp*Wp), so it is exact.  The wrapper
# either slices the interior out (final unflatten) or re-zeroes border/tail
# lanes (fused BN step) before the next conv consumes them as zero padding.
# ----------------------------------------------------------------------------
class _Geom(NamedTuple):
    h: int
    w: int
    ph: int
    pw: int
    hp: int
    wp: int
    lseg: int
    shifts: Tuple[int, ...]


def _make_geom(H, W, KH, KW):
    ph, pw = KH // 2, KW // 2
    hp, wp = H + 2 * ph, W + 2 * pw
    lseg = pl.cdiv(hp * wp, 128) * 128
    shifts = tuple((kh - ph) * wp + (kw - pw)
                   for kh in range(KH) for kw in range(KW))
    return _Geom(H, W, ph, pw, hp, wp, lseg, shifts)


def _interior_mask(g: _Geom, dtype=jnp.float32):
    """(1, 1, lseg) mask: 1.0 at real interior pixels, 0.0 at pad/tail lanes."""
    q = jnp.arange(g.lseg, dtype=jnp.int32)
    i, j = q // g.wp, q % g.wp
    valid = ((q < g.hp * g.wp) & (i >= g.ph) & (i < g.ph + g.h)
             & (j >= g.pw) & (j < g.pw + g.w))
    return valid.astype(dtype).reshape(1, 1, g.lseg)


def _to_flat(x4, g: _Geom):
    """(N, C, H, W) -> flat (N, C, lseg): zero 'SAME' padding + lane-tail pad."""
    n, c = x4.shape[:2]
    xp = jnp.pad(x4, ((0, 0), (0, 0), (g.ph, g.ph), (g.pw, g.pw)))
    xf = xp.reshape(n, c, g.hp * g.wp)
    return jnp.pad(xf, ((0, 0), (0, 0), (0, g.lseg - g.hp * g.wp)))


def _from_flat(y_flat, g: _Geom):
    """flat (N, OC, lseg) -> (N, OC, H, W): drops pad-border / tail lanes."""
    n, oc = y_flat.shape[:2]
    y = y_flat[:, :, : g.hp * g.wp].reshape(n, oc, g.hp, g.wp)
    return y[:, :, g.ph: g.ph + g.h, g.pw: g.pw + g.w]


# ----------------------------------------------------------------------------
# Pallas kernel: 3x3 'SAME' conv on k_img flat images.
#   x_ref : (k_img, Cp, lseg)   input block (channels on sublanes)
#   w_ref : (KH*KW, OC, Cp)     per-tap weight matrices
#   b_ref : (OC, 1)             bias
#   o_ref : (k_img, OC, lseg)   output block (full-width, unmasked stores)
# ----------------------------------------------------------------------------
def _conv_taps_kernel(x_ref, w_ref, b_ref, o_ref, *, shifts):
    k_img = x_ref.shape[0]
    lseg = x_ref.shape[2]
    ntaps, oc, _ = w_ref.shape
    shift_amts = [(-s) % lseg for s in shifts]
    w_taps = [w_ref[t].astype(jnp.float32) for t in range(ntaps)]  # tiny
    b = b_ref[...].astype(jnp.float32)                             # (OC, 1)
    for n in range(k_img):                                         # small, unrolled
        x = x_ref[n].astype(jnp.float32)                           # (Cp, lseg)
        acc = jnp.zeros((oc, lseg), jnp.float32)
        for t in range(ntaps):
            sh = shift_amts[t]
            xs = pltpu.roll(x, shift=sh, axis=1) if sh else x      # XLU, ~free
            acc = acc + jnp.dot(w_taps[t], xs,
                                preferred_element_type=jnp.float32)
        o_ref[n] = (acc + b).astype(o_ref.dtype)


def _pick_images_per_block(n_images, lseg, *, max_block_lanes=8192):
    """As many images per block as fit, while keeping the grid deep enough for
    DMA/compute overlap (>= 8 steps covers v7x's 2 TCs x 4 steps each)."""
    divisors = [k for k in range(1, n_images + 1) if n_images % k == 0]
    fitting = [k for k in divisors if k * lseg <= max_block_lanes] or [1]
    for min_steps in (8, 4, 2, 1):
        deep = [k for k in fitting if n_images // k >= min_steps]
        if deep:
            return max(deep)
    return 1


def _conv2d_flat(x_flat, w_oihw, bias, g: _Geom):
    """Conv2d(3x3, stride 1, 'SAME') + bias on flat (N, Cin, lseg) activations.

    Returns (N, OC, lseg).  Border/tail lanes of the result are garbage (see
    the layout invariant above)."""
    n_img, cin, lseg = x_flat.shape
    oc, w_cin, kh, kw = w_oihw.shape
    assert w_cin == cin and lseg == g.lseg
    cp = pl.cdiv(cin, 8) * 8                        # sublane-align channels
    if cp != cin:
        x_flat = jnp.pad(x_flat, ((0, 0), (0, cp - cin), (0, 0)))
    wp_ = jnp.pad(w_oihw, ((0, 0), (0, cp - cin), (0, 0), (0, 0)))
    w_taps = jnp.transpose(wp_, (2, 3, 0, 1)).reshape(kh * kw, oc, cp)
    b2 = bias.reshape(oc, 1).astype(jnp.float32)

    k_img = _pick_images_per_block(n_img, lseg)
    grid = (n_img // k_img,)

    itemsize = jnp.dtype(x_flat.dtype).itemsize
    cost = pl.CostEstimate(
        flops=2 * n_img * lseg * kh * kw * cp * oc,
        transcendentals=0,
        bytes_accessed=(n_img * cp * lseg + n_img * oc * lseg) * itemsize
        + (kh * kw * oc * cp + oc) * 4,
    )

    kernel = functools.partial(_conv_taps_kernel, shifts=g.shifts)
    return pl.pallas_call(
        kernel,
        out_shape=jax.ShapeDtypeStruct((n_img, oc, lseg), x_flat.dtype),
        grid=grid,
        in_specs=[
            pl.BlockSpec((k_img, cp, lseg), lambda i: (i, 0, 0)),
            pl.BlockSpec((kh * kw, oc, cp), lambda i: (0, 0, 0)),
            pl.BlockSpec((oc, 1), lambda i: (0, 0)),
        ],
        out_specs=pl.BlockSpec((k_img, oc, lseg), lambda i: (i, 0, 0)),
        compiler_params=pltpu.CompilerParams(
            dimension_semantics=("parallel",)),
        cost_estimate=cost,
    )(x_flat, w_taps, b2)


# ----------------------------------------------------------------------------
# BatchNorm3d (training-mode batch stats, biased variance) + ReLU applied in
# the flat (N, OC, lseg) layout.  Reproduces PyTorch's semantics where BN sees
# the conv output through the raw .view(B, OC, T, H, W): the element at
# (image n, conv channel oc) belongs to BN channel c = ((n*OC + oc) // T) % OC.
# Re-zeroes pad-border / tail lanes so the result feeds the next conv directly
# as its zero padding.
# ----------------------------------------------------------------------------
def _bn3d_relu_flat(y_flat, gamma, beta, g: _Geom, B, T, eps=1e-5):
    n_img, oc, _ = y_flat.shape
    mask = _interior_mask(g, y_flat.dtype)                 # (1, 1, lseg)
    ym = y_flat * mask
    s1 = jnp.sum(ym, axis=2)                               # (N, OC) per-image sums
    s2 = jnp.sum(jnp.square(ym), axis=2)                   # (N, OC)
    # Regroup per-(image, conv-channel) partials into BN channels exactly as
    # the raw row-major view does (cheap: (N*OC,) elements).
    sum_c = jnp.sum(s1.reshape(B, oc, T), axis=(0, 2))     # (OC,)
    sumsq_c = jnp.sum(s2.reshape(B, oc, T), axis=(0, 2))   # (OC,)
    count = jnp.asarray(B * T * g.h * g.w, jnp.float32)
    mean_c = sum_c / count
    var_c = sumsq_c / count - jnp.square(mean_c)           # biased variance
    inv_c = jax.lax.rsqrt(var_c + eps)
    scale_c = gamma * inv_c
    shift_c = beta - mean_c * scale_c
    c_of = (jnp.arange(n_img * oc) // T) % oc
    scale = scale_c[c_of].reshape(n_img, oc, 1)
    shift = shift_c[c_of].reshape(n_img, oc, 1)
    return jnp.maximum(y_flat * scale + shift, 0.0) * mask


# ----------------------------------------------------------------------------
# TimeDistributed forward (inner module = Conv2d(C, OC, 3, stride=1, padding=1))
# ----------------------------------------------------------------------------
def time_distributed_forward(x, weight, bias, *, batch_first=True):
    if x.ndim <= 2:
        # TODO(synk): the rank<=2 branch just calls the inner module; a Conv2d
        # inner module would raise in PyTorch too, so it is not modeled.
        raise ValueError("rank<=2 input not supported for a Conv2d inner module")
    b, c, t, h, w = x.shape
    oc, _, kh, kw = weight.shape
    g = _make_geom(h, w, kh, kw)
    # Exact semantics of x.contiguous().view(B*T, C, H, W): a raw row-major
    # re-view that interleaves C and T (it is NOT a transpose).
    x4 = jnp.reshape(x, (b * t, c, h, w))
    y4 = _from_flat(_conv2d_flat(_to_flat(x4, g), weight, bias, g), g)
    if batch_first:
        return jnp.reshape(y4, (b, oc, t, h, w))
    # Mirrors PyTorch's y.view(-1, x.size(1), y.size(-1)) verbatim (it uses the
    # *input* channel count); kept for fidelity to the original module.
    return jnp.reshape(y4, (-1, c, y4.shape[-1]))


# ----------------------------------------------------------------------------
# conv_block forward: TD(conv)->BN3d->ReLU->TD(conv)->BN3d->ReLU, with the
# activation kept in the flat lane layout across the whole block.
# ----------------------------------------------------------------------------
def conv_block_forward(x, params):
    # TODO(synk): BatchNorm3d running-stat updates (training side effect) are
    # not modeled; only the training-mode batch-stat forward is implemented.
    b, c, t, h, w = x.shape
    oc1, w1_cin, kh, kw = params["w1"].shape
    oc2 = params["w2"].shape[0]
    assert params["w2"].shape[1] == oc1 and params["w2"].shape[2:] == (kh, kw)
    g = _make_geom(h, w, kh, kw)
    x4 = jnp.reshape(x, (b * t, c, h, w))                  # raw view, as in PyTorch
    y = _conv2d_flat(_to_flat(x4, g), params["w1"], params["b1"], g)
    y = _bn3d_relu_flat(y, params["gamma1"], params["beta1"], g, b, t)
    y = _conv2d_flat(y, params["w2"], params["b2"], g)
    y = _bn3d_relu_flat(y, params["gamma2"], params["beta2"], g, b, t)
    y4 = _from_flat(y, g)                                  # (B*T, OC, H, W)
    return jnp.reshape(y4, (b, oc2, t, h, w))              # raw view, as in PyTorch


# ----------------------------------------------------------------------------
# Pure-JAX references (correctness check only)
# ----------------------------------------------------------------------------
def _conv2d_ref(x, w, b):
    y = jax.lax.conv_general_dilated(
        x, w, window_strides=(1, 1), padding="SAME",
        dimension_numbers=("NCHW", "OIHW", "NCHW"),
        precision=jax.lax.Precision.HIGHEST)
    return y + b[None, :, None, None]


def _time_distributed_ref(x, w, b, *, batch_first=True):
    bb, c, t, h, wd = x.shape
    oc = w.shape[0]
    y = _conv2d_ref(jnp.reshape(x, (bb * t, c, h, wd)), w, b)
    if batch_first:
        return jnp.reshape(y, (bb, oc, t, h, wd))
    return jnp.reshape(y, (-1, c, y.shape[-1]))


def _batchnorm3d_train_ref(y, gamma, beta, eps=1e-5):
    mean = jnp.mean(y, axis=(0, 2, 3, 4), keepdims=True)
    var = jnp.mean(jnp.square(y - mean), axis=(0, 2, 3, 4), keepdims=True)
    y_hat = (y - mean) * jax.lax.rsqrt(var + eps)
    return y_hat * gamma.reshape(1, -1, 1, 1, 1) + beta.reshape(1, -1, 1, 1, 1)


def _conv_block_ref(x, params):
    y = _time_distributed_ref(x, params["w1"], params["b1"], batch_first=True)
    y = jnp.maximum(_batchnorm3d_train_ref(y, params["gamma1"], params["beta1"]), 0.0)
    y = _time_distributed_ref(y, params["w2"], params["b2"], batch_first=True)
    y = jnp.maximum(_batchnorm3d_train_ref(y, params["gamma2"], params["beta2"]), 0.0)
    return y


if __name__ == "__main__":
    B, C, T, H, W = 2, 4, 8, 16, 16
    OC, K = 8, 3

    key = jax.random.PRNGKey(0)
    kx, kw1, kb1, kw2, kb2 = jax.random.split(key, 5)
    x = jax.random.normal(kx, (B, C, T, H, W), dtype=jnp.float32)
    params = {
        "w1": 0.1 * jax.random.normal(kw1, (OC, C, K, K), dtype=jnp.float32),
        "b1": 0.1 * jax.random.normal(kb1, (OC,), dtype=jnp.float32),
        "gamma1": jnp.ones((OC,), jnp.float32),
        "beta1": jnp.zeros((OC,), jnp.float32),
        "w2": 0.1 * jax.random.normal(kw2, (OC, OC, K, K), dtype=jnp.float32),
        "b2": 0.1 * jax.random.normal(kb2, (OC,), dtype=jnp.float32),
        "gamma2": jnp.ones((OC,), jnp.float32),
        "beta2": jnp.zeros((OC,), jnp.float32),
    }

    # --- check 1: TimeDistributed(Conv2d) alone (the Pallas hot path) --------
    td = jax.jit(functools.partial(time_distributed_forward, batch_first=True))
    y_td = jax.block_until_ready(td(x, params["w1"], params["b1"]))
    y_td_ref = _time_distributed_ref(x, params["w1"], params["b1"],
                                     batch_first=True)
    assert y_td.shape == (B, OC, T, H, W), y_td.shape
    err_td = float(jnp.max(jnp.abs(y_td - y_td_ref)))
    # Tolerance accounts for MXU default-precision f32 matmul vs HIGHEST ref.
    assert err_td < 2e-2, err_td

    # --- check 2: full conv_block forward -------------------------------------
    blk = jax.jit(conv_block_forward)
    y_blk = jax.block_until_ready(blk(x, params))
    y_blk_ref = _conv_block_ref(x, params)
    assert y_blk.shape == (B, OC, T, H, W), y_blk.shape
    err_blk = float(jnp.max(jnp.abs(y_blk - y_blk_ref)))
    assert err_blk < 2e-2, err_blk

    print("KERNEL_OK")
</pallas_src>

<mosaic_0001>
module attributes {stable_mosaic.version = 11 : i64} {
  func.func @_conv_taps_kernel(%arg0: i32, %arg1: memref<2x8x384xf32, #tpu.memory_space<vmem>>, %arg2: memref<9x8x8xf32, #tpu.memory_space<vmem>>, %arg3: memref<8x1xf32, #tpu.memory_space<vmem>>, %arg4: memref<2x8x384xf32, #tpu.memory_space<vmem>>) attributes {dimension_semantics = [#tpu.dimension_semantics<parallel>], iteration_bounds = array<i64: 8>, scalar_prefetch = 0 : i64, scratch_operands = 0 : i64, tpu.core_type = #tpu.core_type<tc>, window_params = [{transform_indices = @transform_0, window_bounds = array<i64: 2, 8, 384>}, {pipeline_mode = #tpu.pipeline_mode<synchronous>, transform_indices = @transform_1, window_bounds = array<i64: 9, 8, 8>}, {pipeline_mode = #tpu.pipeline_mode<synchronous>, transform_indices = @transform_2, window_bounds = array<i64: 8, 1>}, {transform_indices = @transform_3, window_bounds = array<i64: 2, 8, 384>}]} {
    %c0 = arith.constant 0 : index
    %c0_0 = arith.constant 0 : index
    %c0_1 = arith.constant 0 : index
    %0 = vector.load %arg2[%c0, %c0_0, %c0_1] : memref<9x8x8xf32, #tpu.memory_space<vmem>>, vector<1x8x8xf32>
    %1 = vector.shape_cast %0 : vector<1x8x8xf32> to vector<8x8xf32>
    %c1 = arith.constant 1 : index
    %c0_2 = arith.constant 0 : index
    %c0_3 = arith.constant 0 : index
    %2 = vector.load %arg2[%c1, %c0_2, %c0_3] : memref<9x8x8xf32, #tpu.memory_space<vmem>>, vector<1x8x8xf32>
    %3 = vector.shape_cast %2 : vector<1x8x8xf32> to vector<8x8xf32>
    %c2 = arith.constant 2 : index
    %c0_4 = arith.constant 0 : index
    %c0_5 = arith.constant 0 : index
    %4 = vector.load %arg2[%c2, %c0_4, %c0_5] : memref<9x8x8xf32, #tpu.memory_space<vmem>>, vector<1x8x8xf32>
    %5 = vector.shape_cast %4 : vector<1x8x8xf32> to vector<8x8xf32>
    %c3 = arith.constant 3 : index
    %c0_6 = arith.constant 0 : index
    %c0_7 = arith.constant 0 : index
    %6 = vector.load %arg2[%c3, %c0_6, %c0_7] : memref<9x8x8xf32, #tpu.memory_space<vmem>>, vector<1x8x8xf32>
    %7 = vector.shape_cast %6 : vector<1x8x8xf32> to vector<8x8xf32>
    %c4 = arith.constant 4 : index
    %c0_8 = arith.constant 0 : index
    %c0_9 = arith.constant 0 : index
    %8 = vector.load %arg2[%c4, %c0_8, %c0_9] : memref<9x8x8xf32, #tpu.memory_space<vmem>>, vector<1x8x8xf32>
    %9 = vector.shape_cast %8 : vector<1x8x8xf32> to vector<8x8xf32>
    %c5 = arith.constant 5 : index
    %c0_10 = arith.constant 0 : index
    %c0_11 = arith.constant 0 : index
    %10 = vector.load %arg2[%c5, %c0_10, %c0_11] : memref<9x8x8xf32, #tpu.memory_space<vmem>>, vector<1x8x8xf32>
    %11 = vector.shape_cast %10 : vector<1x8x8xf32> to vector<8x8xf32>
    %c6 = arith.constant 6 : index
    %c0_12 = arith.constant 0 : index
    %c0_13 = arith.constant 0 : index
    %12 = vector.load %arg2[%c6, %c0_12, %c0_13] : memref<9x8x8xf32, #tpu.memory_space<vmem>>, vector<1x8x8xf32>
    %13 = vector.shape_cast %12 : vector<1x8x8xf32> to vector<8x8xf32>
    %c7 = arith.constant 7 : index
    %c0_14 = arith.constant 0 : index
    %c0_15 = arith.constant 0 : index
    %14 = vector.load %arg2[%c7, %c0_14, %c0_15] : memref<9x8x8xf32, #tpu.memory_space<vmem>>, vector<1x8x8xf32>
    %15 = vector.shape_cast %14 : vector<1x8x8xf32> to vector<8x8xf32>
    %c8 = arith.constant 8 : index
    %c0_16 = arith.constant 0 : index
    %c0_17 = arith.constant 0 : index
    %16 = vector.load %arg2[%c8, %c0_16, %c0_17] : memref<9x8x8xf32, #tpu.memory_space<vmem>>, vector<1x8x8xf32>
    %17 = vector.shape_cast %16 : vector<1x8x8xf32> to vector<8x8xf32>
    %c0_18 = arith.constant 0 : index
    %c0_19 = arith.constant 0 : index
    %18 = vector.load %arg3[%c0_18, %c0_19] : memref<8x1xf32, #tpu.memory_space<vmem>>, vector<8x1xf32>
    %c0_20 = arith.constant 0 : index
    %c0_21 = arith.constant 0 : index
    %c0_22 = arith.constant 0 : index
    %19 = vector.load %arg1[%c0_20, %c0_21, %c0_22] : memref<2x8x384xf32, #tpu.memory_space<vmem>>, vector<1x8x384xf32>
    %20 = vector.shape_cast %19 : vector<1x8x384xf32> to vector<8x384xf32>
    %cst = arith.constant 0.000000e+00 : f32
    %21 = vector.broadcast %cst : f32 to vector<8x384xf32>
    %c19_i32 = arith.constant 19 : i32
    %22 = tpu.dynamic_rotate %20 by %c19_i32 dim 1 : vector<8x384xf32>, i32 -> vector<8x384xf32>
    %cst_23 = arith.constant dense<0.000000e+00> : vector<8x384xf32>
    %23 = tpu.matmul %1, %22, %cst_23 {dimension_numbers = #tpu.dot_dimension_numbers<[1], [0], [0], [1], [0, 0, 1, 1], [], []>} : vector<8x8xf32>, vector<8x384xf32>, vector<8x384xf32> -> vector<8x384xf32>
    %24 = arith.addf %21, %23 : vector<8x384xf32>
    %c18_i32 = arith.constant 18 : i32
    %25 = tpu.dynamic_rotate %20 by %c18_i32 dim 1 : vector<8x384xf32>, i32 -> vector<8x384xf32>
    %cst_24 = arith.constant dense<0.000000e+00> : vector<8x384xf32>
    %26 = tpu.matmul %3, %25, %cst_24 {dimension_numbers = #tpu.dot_dimension_numbers<[1], [0], [0], [1], [0, 0, 1, 1], [], []>} : vector<8x8xf32>, vector<8x384xf32>, vector<8x384xf32> -> vector<8x384xf32>
    %27 = arith.addf %24, %26 : vector<8x384xf32>
    %c17_i32 = arith.constant 17 : i32
    %28 = tpu.dynamic_rotate %20 by %c17_i32 dim 1 : vector<8x384xf32>, i32 -> vector<8x384xf32>
    %cst_25 = arith.constant dense<0.000000e+00> : vector<8x384xf32>
    %29 = tpu.matmul %5, %28, %cst_25 {dimension_numbers = #tpu.dot_dimension_numbers<[1], [0], [0], [1], [0, 0, 1, 1], [], []>} : vector<8x8xf32>, vector<8x384xf32>, vector<8x384xf32> -> vector<8x384xf32>
    %30 = arith.addf %27, %29 : vector<8x384xf32>
    %c1_i32 = arith.constant 1 : i32
    %31 = tpu.dynamic_rotate %20 by %c1_i32 dim 1 : vector<8x384xf32>, i32 -> vector<8x384xf32>
    %cst_26 = arith.constant dense<0.000000e+00> : vector<8x384xf32>
    %32 = tpu.matmul %7, %31, %cst_26 {dimension_numbers = #tpu.dot_dimension_numbers<[1], [0], [0], [1], [0, 0, 1, 1], [], []>} : vector<8x8xf32>, vector<8x384xf32>, vector<8x384xf32> -> vector<8x384xf32>
    %33 = arith.addf %30, %32 : vector<8x384xf32>
    %cst_27 = arith.constant dense<0.000000e+00> : vector<8x384xf32>
    %34 = tpu.matmul %9, %20, %cst_27 {dimension_numbers = #tpu.dot_dimension_numbers<[1], [0], [0], [1], [0, 0, 1, 1], [], []>} : vector<8x8xf32>, vector<8x384xf32>, vector<8x384xf32> -> vector<8x384xf32>
    %35 = arith.addf %33, %34 : vector<8x384xf32>
    %c383_i32 = arith.constant 383 : i32
    %36 = tpu.dynamic_rotate %20 by %c383_i32 dim 1 : vector<8x384xf32>, i32 -> vector<8x384xf32>
    %cst_28 = arith.constant dense<0.000000e+00> : vector<8x384xf32>
    %37 = tpu.matmul %11, %36, %cst_28 {dimension_numbers = #tpu.dot_dimension_numbers<[1], [0], [0], [1], [0, 0, 1, 1], [], []>} : vector<8x8xf32>, vector<8x384xf32>, vector<8x384xf32> -> vector<8x384xf32>
    %38 = arith.addf %35, %37 : vector<8x384xf32>
    %c367_i32 = arith.constant 367 : i32
    %39 = tpu.dynamic_rotate %20 by %c367_i32 dim 1 : vector<8x384xf32>, i32 -> vector<8x384xf32>
    %cst_29 = arith.constant dense<0.000000e+00> : vector<8x384xf32>
    %40 = tpu.matmul %13, %39, %cst_29 {dimension_numbers = #tpu.dot_dimension_numbers<[1], [0], [0], [1], [0, 0, 1, 1], [], []>} : vector<8x8xf32>, vector<8x384xf32>, vector<8x384xf32> -> vector<8x384xf32>
    %41 = arith.addf %38, %40 : vector<8x384xf32>
    %c366_i32 = arith.constant 366 : i32
    %42 = tpu.dynamic_rotate %20 by %c366_i32 dim 1 : vector<8x384xf32>, i32 -> vector<8x384xf32>
    %cst_30 = arith.constant dense<0.000000e+00> : vector<8x384xf32>
    %43 = tpu.matmul %15, %42, %cst_30 {dimension_numbers = #tpu.dot_dimension_numbers<[1], [0], [0], [1], [0, 0, 1, 1], [], []>} : vector<8x8xf32>, vector<8x384xf32>, vector<8x384xf32> -> vector<8x384xf32>
    %44 = arith.addf %41, %43 : vector<8x384xf32>
    %c365_i32 = arith.constant 365 : i32
    %45 = tpu.dynamic_rotate %20 by %c365_i32 dim 1 : vector<8x384xf32>, i32 -> vector<8x384xf32>
    %cst_31 = arith.constant dense<0.000000e+00> : vector<8x384xf32>
    %46 = tpu.matmul %17, %45, %cst_31 {dimension_numbers = #tpu.dot_dimension_numbers<[1], [0], [0], [1], [0, 0, 1, 1], [], []>} : vector<8x8xf32>, vector<8x384xf32>, vector<8x384xf32> -> vector<8x384xf32>
    %47 = arith.addf %44, %46 : vector<8x384xf32>
    %48 = vector.broadcast %18 : vector<8x1xf32> to vector<8x384xf32>
    %49 = arith.addf %47, %48 : vector<8x384xf32>
    %c0_32 = arith.constant 0 : index
    %c0_33 = arith.constant 0 : index
    %c0_34 = arith.constant 0 : index
    %50 = vector.load %arg4[%c0_32, %c0_33, %c0_34] : memref<2x8x384xf32, #tpu.memory_space<vmem>>, vector<1x8x384xf32>
    %51 = vector.shape_cast %50 : vector<1x8x384xf32> to vector<8x384xf32>
    %52 = vector.shape_cast %49 : vector<8x384xf32> to vector<1x8x384xf32>
    tpu.vector_store %arg4[%c0_32, %c0_33, %c0_34], %52 {strides = array<i32>} : memref<2x8x384xf32, #tpu.memory_space<vmem>>, vector<1x8x384xf32>,
    %c1_35 = arith.constant 1 : index
    %c0_36 = arith.constant 0 : index
    %c0_37 = arith.constant 0 : index
    %53 = vector.load %arg1[%c1_35, %c0_36, %c0_37] : memref<2x8x384xf32, #tpu.memory_space<vmem>>, vector<1x8x384xf32>
    %54 = vector.shape_cast %53 : vector<1x8x384xf32> to vector<8x384xf32>
    %cst_38 = arith.constant 0.000000e+00 : f32
    %55 = vector.broadcast %cst_38 : f32 to vector<8x384xf32>
    %c19_i32_39 = arith.constant 19 : i32
    %56 = tpu.dynamic_rotate %54 by %c19_i32_39 dim 1 : vector<8x384xf32>, i32 -> vector<8x384xf32>
    %cst_40 = arith.constant dense<0.000000e+00> : vector<8x384xf32>
    %57 = tpu.matmul %1, %56, %cst_40 {dimension_numbers = #tpu.dot_dimension_numbers<[1], [0], [0], [1], [0, 0, 1, 1], [], []>} : vector<8x8xf32>, vector<8x384xf32>, vector<8x384xf32> -> vector<8x384xf32>
    %58 = arith.addf %55, %57 : vector<8x384xf32>
    %c18_i32_41 = arith.constant 18 : i32
    %59 = tpu.dynamic_rotate %54 by %c18_i32_41 dim 1 : vector<8x384xf32>, i32 -> vector<8x384xf32>
    %cst_42 = arith.constant dense<0.000000e+00> : vector<8x384xf32>
    %60 = tpu.matmul %3, %59, %cst_42 {dimension_numbers = #tpu.dot_dimension_numbers<[1], [0], [0], [1], [0, 0, 1, 1], [], []>} : vector<8x8xf32>, vector<8x384xf32>, vector<8x384xf32> -> vector<8x384xf32>
    %61 = arith.addf %58, %60 : vector<8x384xf32>
    %c17_i32_43 = arith.constant 17 : i32
    %62 = tpu.dynamic_rotate %54 by %c17_i32_43 dim 1 : vector<8x384xf32>, i32 -> vector<8x384xf32>
    %cst_44 = arith.constant dense<0.000000e+00> : vector<8x384xf32>
    %63 = tpu.matmul %5, %62, %cst_44 {dimension_numbers = #tpu.dot_dimension_numbers<[1], [0], [0], [1], [0, 0, 1, 1], [], []>} : vector<8x8xf32>, vector<8x384xf32>, vector<8x384xf32> -> vector<8x384xf32>
    %64 = arith.addf %61, %63 : vector<8x384xf32>
    %c1_i32_45 = arith.constant 1 : i32
    %65 = tpu.dynamic_rotate %54 by %c1_i32_45 dim 1 : vector<8x384xf32>, i32 -> vector<8x384xf32>
    %cst_46 = arith.constant dense<0.000000e+00> : vector<8x384xf32>
    %66 = tpu.matmul %7, %65, %cst_46 {dimension_numbers = #tpu.dot_dimension_numbers<[1], [0], [0], [1], [0, 0, 1, 1], [], []>} : vector<8x8xf32>, vector<8x384xf32>, vector<8x384xf32> -> vector<8x384xf32>
    %67 = arith.addf %64, %66 : vector<8x384xf32>
    %cst_47 = arith.constant dense<0.000000e+00> : vector<8x384xf32>
    %68 = tpu.matmul %9, %54, %cst_47 {dimension_numbers = #tpu.dot_dimension_numbers<[1], [0], [0], [1], [0, 0, 1, 1], [], []>} : vector<8x8xf32>, vector<8x384xf32>, vector<8x384xf32> -> vector<8x384xf32>
    %69 = arith.addf %67, %68 : vector<8x384xf32>
    %c383_i32_48 = arith.constant 383 : i32
    %70 = tpu.dynamic_rotate %54 by %c383_i32_48 dim 1 : vector<8x384xf32>, i32 -> vector<8x384xf32>
    %cst_49 = arith.constant dense<0.000000e+00> : vector<8x384xf32>
    %71 = tpu.matmul %11, %70, %cst_49 {dimension_numbers = #tpu.dot_dimension_numbers<[1], [0], [0], [1], [0, 0, 1, 1], [], []>} : vector<8x8xf32>, vector<8x384xf32>, vector<8x384xf32> -> vector<8x384xf32>
    %72 = arith.addf %69, %71 : vector<8x384xf32>
    %c367_i32_50 = arith.constant 367 : i32
    %73 = tpu.dynamic_rotate %54 by %c367_i32_50 dim 1 : vector<8x384xf32>, i32 -> vector<8x384xf32>
    %cst_51 = arith.constant dense<0.000000e+00> : vector<8x384xf32>
    %74 = tpu.matmul %13, %73, %cst_51 {dimension_numbers = #tpu.dot_dimension_numbers<[1], [0], [0], [1], [0, 0, 1, 1], [], []>} : vector<8x8xf32>, vector<8x384xf32>, vector<8x384xf32> -> vector<8x384xf32>
    %75 = arith.addf %72, %74 : vector<8x384xf32>
    %c366_i32_52 = arith.constant 366 : i32
    %76 = tpu.dynamic_rotate %54 by %c366_i32_52 dim 1 : vector<8x384xf32>, i32 -> vector<8x384xf32>
    %cst_53 = arith.constant dense<0.000000e+00> : vector<8x384xf32>
    %77 = tpu.matmul %15, %76, %cst_53 {dimension_numbers = #tpu.dot_dimension_numbers<[1], [0], [0], [1], [0, 0, 1, 1], [], []>} : vector<8x8xf32>, vector<8x384xf32>, vector<8x384xf32> -> vector<8x384xf32>
    %78 = arith.addf %75, %77 : vector<8x384xf32>
    %c365_i32_54 = arith.constant 365 : i32
    %79 = tpu.dynamic_rotate %54 by %c365_i32_54 dim 1 : vector<8x384xf32>, i32 -> vector<8x384xf32>
    %cst_55 = arith.constant dense<0.000000e+00> : vector<8x384xf32>
    %80 = tpu.matmul %17, %79, %cst_55 {dimension_numbers = #tpu.dot_dimension_numbers<[1], [0], [0], [1], [0, 0, 1, 1], [], []>} : vector<8x8xf32>, vector<8x384xf32>, vector<8x384xf32> -> vector<8x384xf32>
    %81 = arith.addf %78, %80 : vector<8x384xf32>
    %82 = vector.broadcast %18 : vector<8x1xf32> to vector<8x384xf32>
    %83 = arith.addf %81, %82 : vector<8x384xf32>
    %c1_56 = arith.constant 1 : index
    %c0_57 = arith.constant 0 : index
    %c0_58 = arith.constant 0 : index
    %84 = vector.load %arg4[%c1_56, %c0_57, %c0_58] : memref<2x8x384xf32, #tpu.memory_space<vmem>>, vector<1x8x384xf32>
    %85 = vector.shape_cast %84 : vector<1x8x384xf32> to vector<8x384xf32>
    %86 = vector.shape_cast %83 : vector<8x384xf32> to vector<1x8x384xf32>
    tpu.vector_store %arg4[%c1_56, %c0_57, %c0_58], %86 {strides = array<i32>} : memref<2x8x384xf32, #tpu.memory_space<vmem>>, vector<1x8x384xf32>,
    return
  }
  func.func @transform_0(%arg0: i32) -> (i32, i32, i32) {
    %c0_i32 = arith.constant 0 : i32
    %c0_i32_0 = arith.constant 0 : i32
    %c0_i32_1 = arith.constant 0 : i32
    return %arg0, %c0_i32, %c0_i32_0 : i32, i32, i32
  }
  func.func @transform_1(%arg0: i32) -> (i32, i32, i32) {
    %c0_i32 = arith.constant 0 : i32
    %c0_i32_0 = arith.constant 0 : i32
    %c0_i32_1 = arith.constant 0 : i32
    %c0_i32_2 = arith.constant 0 : i32
    return %c0_i32, %c0_i32_0, %c0_i32_1 : i32, i32, i32
  }
  func.func @transform_2(%arg0: i32) -> (i32, i32) {
    %c0_i32 = arith.constant 0 : i32
    %c0_i32_0 = arith.constant 0 : i32
    %c0_i32_1 = arith.constant 0 : i32
    return %c0_i32, %c0_i32_0 : i32, i32
  }
  func.func @transform_3(%arg0: i32) -> (i32, i32, i32) {
    %c0_i32 = arith.constant 0 : i32
    %c0_i32_0 = arith.constant 0 : i32
    %c0_i32_1 = arith.constant 0 : i32
    return %arg0, %c0_i32, %c0_i32_0 : i32, i32, i32
  }
}

</mosaic_0001>

<llo_original>
// kernel: time_distributed_forward.1
$region0: #{time_distributed_forward.1}
  #allocation0 [shape = 'u32[]', space=smem, size = 0x4, offset = 0x4, fixed_abs, tag = 'smem constant byte address 0x4 - core index']
  #allocation1 [shape = 'u32[144,128]{1,0:T(1,128)}', space=vmem, size = 0x12000, scoped, tag = 'internal scratch']
  %s0 = inlined_call_operand.vmem [shape: f32[16,8,384], index: 0, kind: input, shape index: {}]
  %s1 = inlined_call_operand.vmem [shape: f32[9,8,8], index: 1, kind: input, shape index: {}]
  %s2 = inlined_call_operand.vmem [shape: f32[8,1], index: 2, kind: input, shape index: {}]
  %s3 = inlined_call_operand.vmem [shape: f32[16,8,384], index: 3, kind: output, shape index: {}]
  %s4 = sld [smem:[#allocation0]]
  $region45: #{time_distributed_forward.1} parent=0
    _
  %s6 = ssub.s32 1, %s4
  %s7 = scalar_select 0, %s6, %s4
  loop: start=0, step=1, limit=10
  $region2: #{time_distributed_forward.1} parent=0 // loop_pre_header
    _
  $region3: #{time_distributed_forward.1} parent=0 // loop_header
    %s9 = sphi 0, %s13
    %p10 = scmp.ge.s32.totalorder %s9, 10
    %s19 = sphi 0, %s21
    %s22 = sphi 0, %s19
    %s23 = sphi 0, %s22
    %s39 = sphi 0, %s23
    %s43 = sphi 0, %s43
    %s45 = sphi 0, %s43
    %s46 = sphi 0, %s45
    %s60 = sphi 0, %s46
    %s64 = sphi 0, %s64
    %s66 = sphi 0, %s64
    %s67 = sphi 0, %s66
    %s81 = sphi 0, %s67
    %s87 = sphi 0, %s89
    %s90 = sphi 0, %s87
    %s91 = sphi 0, %s90
    %s107 = sphi 0, %s91
  $region4: #{time_distributed_forward.1} parent=0 // loop_header_branch
    %12 = sbr.rel (%p10) target = $region8
  $region5: #{time_distributed_forward.1} parent=0 // loop_body
    %s14 = ssub.s32 %s9, 1
    %s15 = ssub.s32 %s9, 2
    %s16 = sadd.s32 %s9, 1
    %s17 = ssub.s32 %s9, %s16
    %p18 = scmp.eq.s32.totalorder %s17, 0
    %s20 = sadd.s32 %s19, 1
    %s21 = scalar_select %p18, %s19, %s20
    %p24 = pneg %p18
    %p25 = scmp.eq.s32.totalorder %s9, 7
    %p26 = por %p24, %p25
    %p27 = scmp.ne.s32.totalorder %s19, %s22
    %p28 = scmp.eq.s32.totalorder %s9, 0
    %p29 = por %p27, %p28
    %p30 = scmp.ne.s32.totalorder %s19, %s22
    %p31 = scmp.eq.s32.totalorder %s14, 7
    %p32 = por %p30, %p31
    %p33 = scmp.ne.s32.totalorder %s22, %s23
    %p34 = scmp.eq.s32.totalorder %s14, 0
    %p35 = por %p33, %p34
    %p36 = scmp.ne.s32.totalorder %s22, %s23
    %p37 = scmp.eq.s32.totalorder %s15, 7
    %p38 = por %p36, %p37
    %p40 = scmp.ne.s32.totalorder %s23, %s39
    %p41 = scmp.eq.s32.totalorder %s15, 0
    %p42 = por %p40, %p41
    %s44 = sadd.s32 %s43, 1
    %p47 = scmp.eq.s32.totalorder %s9, 7
    %p48 = scmp.ne.s32.totalorder %s43, %s45
    %p49 = scmp.eq.s32.totalorder %s9, 0
    %p50 = por %p48, %p49
    %p51 = scmp.ne.s32.totalorder %s43, %s45
    %p52 = scmp.eq.s32.totalorder %s14, 7
    %p53 = por %p51, %p52
    %p54 = scmp.ne.s32.totalorder %s45, %s46
    %p55 = scmp.eq.s32.totalorder %s14, 0
    %p56 = por %p54, %p55
    %p57 = scmp.ne.s32.totalorder %s45, %s46
    %p58 = scmp.eq.s32.totalorder %s15, 7
    %p59 = por %p57, %p58
    %p61 = scmp.ne.s32.totalorder %s46, %s60
    %p62 = scmp.eq.s32.totalorder %s15, 0
    %p63 = por %p61, %p62
    %s65 = sadd.s32 %s64, 1
    %p68 = scmp.eq.s32.totalorder %s9, 7
    %p69 = scmp.ne.s32.totalorder %s64, %s66
    %p70 = scmp.eq.s32.totalorder %s9, 0
    %p71 = por %p69, %p70
    %p72 = scmp.ne.s32.totalorder %s64, %s66
    %p73 = scmp.eq.s32.totalorder %s14, 7
    %p74 = por %p72, %p73
    %p75 = scmp.ne.s32.totalorder %s66, %s67
    %p76 = scmp.eq.s32.totalorder %s14, 0
    %p77 = por %p75, %p76
    %p78 = scmp.ne.s32.totalorder %s66, %s67
    %p79 = scmp.eq.s32.totalorder %s15, 7
    %p80 = por %p78, %p79
    %p82 = scmp.ne.s32.totalorder %s67, %s81
    %p83 = scmp.eq.s32.totalorder %s15, 0
    %p84 = por %p82, %p83
    %s85 = ssub.s32 %s9, %s16
    %p86 = scmp.eq.s32.totalorder %s85, 0
    %s88 = sadd.s32 %s87, 1
    %s89 = scalar_select %p86, %s87, %s88
    %p92 = pneg %p86
    %p93 = scmp.eq.s32.totalorder %s9, 7
    %p94 = por %p92, %p93
    %p95 = scmp.ne.s32.totalorder %s87, %s90
    %p96 = scmp.eq.s32.totalorder %s9, 0
    %p97 = por %p95, %p96
    %p98 = scmp.ne.s32.totalorder %s87, %s90
    %p99 = scmp.eq.s32.totalorder %s14, 7
    %p100 = por %p98, %p99
    %p101 = scmp.ne.s32.totalorder %s90, %s91
    %p102 = scmp.eq.s32.totalorder %s14, 0
    %p103 = por %p101, %p102
    %p104 = scmp.ne.s32.totalorder %s90, %s91
    %p105 = scmp.eq.s32.totalorder %s15, 7
    %p106 = por %p104, %p105
    %p108 = scmp.ne.s32.totalorder %s91, %s107
    %p109 = scmp.eq.s32.totalorder %s15, 0
    %p110 = por %p108, %p109
    %p111 = scmp.le.s32.totalorder 1, %s9
    %p112 = scmp.lt.s32.totalorder %s9, 9
    %p113 = pnand %p111, %p112
    %p114 = pneg %p113
    // Predicated region
    $region9: #{time_distributed_forward.1} parent=5 // pred_check
      _
    $region10: #{time_distributed_forward.1} parent=5 // pred_check_branch
      %116 = sbr.rel (%p113) target = $region12
    $region11: #{time_distributed_forward.1} parent=5 // pred_region
      %s117 = ssub.s32 %s9, 1
      // Predicated region
      $region13: #{time_distributed_forward.1} parent=11 // pred_check
        %p118 = pneg %p56
      $region14: #{time_distributed_forward.1} parent=11 // pred_check_branch
        %120 = sbr.rel (%p118) target = $region16
      $region15: #{time_distributed_forward.1} parent=11 // pred_region
        _
      $region16: #{time_distributed_forward.1} parent=11 // pred_fallthru
        _
      // Predicated region
      $region17: #{time_distributed_forward.1} parent=11 // pred_check
        %p121 = pneg %p77
      $region18: #{time_distributed_forward.1} parent=11 // pred_check_branch
        %123 = sbr.rel (%p121) target = $region20
      $region19: #{time_distributed_forward.1} parent=11 // pred_region
        _
      $region20: #{time_distributed_forward.1} parent=11 // pred_fallthru
        _
    $region12: #{time_distributed_forward.1} parent=5 // pred_fallthru
      _
    %p124 = scmp.lt.s32.totalorder %s9, 8
    // Predicated region
    $region21: #{time_distributed_forward.1} parent=5 // pred_check
      %p125 = pneg %p124
    $region22: #{time_distributed_forward.1} parent=5 // pred_check_branch
      %127 = sbr.rel (%p125) target = $region24
    $region23: #{time_distributed_forward.1} parent=5 // pred_region
      // Predicated region
      $region25: #{time_distributed_forward.1} parent=23 // pred_check
        %p128 = pneg %p29
      $region26: #{time_distributed_forward.1} parent=23 // pred_check_branch
        %130 = sbr.rel (%p128) target = $region28
      $region27: #{time_distributed_forward.1} parent=23 // pred_region
        %s131 = smul.u32 2, %s9
        %p132 = scmp.lt.s32.totalorder %s131, 15
        %s133 = scalar_select %p132, %s131, 15
        %s134 = smul.addr %s133, 3
        %s135 = smul.addr %s134, 8
        %s136 = scalar_lea.vmem %s0, %s135
        %s137 = smul.u32 2, %s9
      $region28: #{time_distributed_forward.1} parent=23 // pred_fallthru
        _
    $region24: #{time_distributed_forward.1} parent=5 // pred_fallthru
      _
    %p138 = scmp.le.s32.totalorder 1, %s9
    %p139 = scmp.lt.s32.totalorder %s9, 9
    %p140 = pnand %p138, %p139
    %p141 = pneg %p140
    // Predicated region
    $region29: #{time_distributed_forward.1} parent=5 // pred_check
      _
    $region30: #{time_distributed_forward.1} parent=5 // pred_check_branch
      %143 = sbr.rel (%p140) target = $region32
    $region31: #{time_distributed_forward.1} parent=5 // pred_region
      %s144 = ssub.s32 %s9, 1
      %s145 = smul.u32 2, %s14
      %p146 = scmp.lt.s32.totalorder %s145, 15
      %s147 = scalar_select %p146, %s145, 15
      %s148 = smul.addr %s147, 3
      %s149 = smul.addr %s148, 8
      %s150 = scalar_lea.vmem %s0, %s149
      %p151 = pneg %p35
      %p152 = pneg %p32
      %p153 = pneg %p56
      %p154 = pneg %p53
      %p155 = pneg %p77
      %p156 = pneg %p74
      %p157 = pneg %p103
      %p158 = pneg %p100
      %s159 = smul.u32 2, %s14
      %p160 = scmp.lt.s32.totalorder %s159, 15
      %s161 = scalar_select %p160, %s159, 15
      %s162 = smul.addr %s161, 3
      %s163 = smul.addr %s162, 8
      %s164 = scalar_lea.vmem %s3, %s163
      %s165 = smul.u32 2, %s14
      %p166 = scmp.lt.s32.totalorder %s165, 15
      %s167 = scalar_select %p166, %s165, 15
      %s168 = smul.addr %s167, 3
      %s169 = smul.addr %s168, 8
      %s170 = scalar_lea.vmem %s0, %s169
      %s171 = smul.u32 2, %s14
      %s172 = smul.u32 2, %s14
      %p173 = scmp.lt.s32.totalorder %s172, 15
      %s174 = scalar_select %p173, %s172, 15
      %s175 = smul.addr %s174, 3
      %s176 = smul.addr %s175, 8
      %s177 = scalar_lea.vmem %s3, %s176
      %s178 = smul.u32 2, %s14
      %v179 = vld [vmem:[%s1] sm:$0xff]
      %s180 = scalar_lea.vmem %s1, 8
      %v181 = vld [vmem:[%s180] sm:$0xff]
      %s182 = scalar_lea.vmem %s1, 16
      %v183 = vld [vmem:[%s182] sm:$0xff]
      %s184 = scalar_lea.vmem %s1, 24
      %v185 = vld [vmem:[%s184] sm:$0xff]
      %s186 = scalar_lea.vmem %s1, 32
      %v187 = vld [vmem:[%s186] sm:$0xff]
      %s188 = scalar_lea.vmem %s1, 40
      %v189 = vld [vmem:[%s188] sm:$0xff]
      %s190 = scalar_lea.vmem %s1, 48
      %v191 = vld [vmem:[%s190] sm:$0xff]
      %s192 = scalar_lea.vmem %s1, 56
      %v193 = vld [vmem:[%s192] sm:$0xff]
      %s194 = scalar_lea.vmem %s1, 64
      %v195 = vld [vmem:[%s194] sm:$0xff]
      %v196 = vld [vmem:[%s2] sm:$0xff]
      %v197 = vld [vmem:[%s170] sm:$0xff]
      %v198 = vld [vmem:[%s170 + $0x8] sm:$0xff]
      %v199 = vld [vmem:[%s170 + $0x10] sm:$0xff]
      %200 = vrot.lane.b32.xlu0 %v197, 19
      %v201 = vpop.permute.xlu0 %200
      %202 = vrot.lane.b32.xlu0 %v198, 19
      %v203 = vpop.permute.xlu0 %202
      %204 = vrot.lane.b32.xlu0 %v199, 19
      %v205 = vpop.permute.xlu0 %204
      %v206 = vlaneseq
      %v207 = vand.u32 %v206, 127
      %vm208 = vcmp.lt.s32.totalorder %v207, 19
      %v209 = vsel %vm208, %v203, %v205
      %v210 = vsel %vm208, %v201, %v203
      %v211 = vsel %vm208, %v205, %v201
      %212 = vrot.lane.b32.xlu0 %v197, 18
      %v213 = vpop.permute.xlu0 %212
      %214 = vrot.lane.b32.xlu0 %v198, 18
      %v215 = vpop.permute.xlu0 %214
      %216 = vrot.lane.b32.xlu0 %v199, 18
      %v217 = vpop.permute.xlu0 %216
      %vm218 = vcmp.lt.s32.totalorder %v207, 18
      %v219 = vsel %vm218, %v215, %v217
      %v220 = vsel %vm218, %v213, %v215
      %v221 = vsel %vm218, %v217, %v213
      %vm222 = vcmask 64512
      %v224 = vsel %vm222, %v181, 0
      %226 = vmatprep.subr.mxu0 %v220
      %227 = vmatpush1.msra.mxu0 %v221
      %228 = vmatprep.subr.mxu0 0.0
      %229 = vmatpush1.msra.mxu0 0.0
      %230 = vmatprep.subr.mxu0 0.0
      %231 = vmatpush1.msra.mxu0 0.0
      %232 = vmatprep.subr.mxu0 0.0
      %233 = vmatpush1.msra.mxu0 0.0
      %234 = vmatprep.subr.mxu0 0.0
      %235 = vmatpush1.msra.mxu0 0.0
      %236 = vmatprep.subr.mxu0 0.0
      %237 = vmatpush1.msra.mxu0 0.0
      %238 = vmatprep.subr.mxu0 0.0
      %239 = vmatpush1.msra.mxu0 0.0
      %240 = vmatprep.subr.mxu0 0.0
      %241 = vmatpush1.msra.mxu0 0.0
      %242 = vmatprep.subr.mxu0 0.0
      %243 = vmatpush1.msra.mxu0 0.0
      %244 = vmatprep.subr.mxu0 0.0
      %245 = vmatpush1.msra.mxu0 0.0
      %246 = vmatprep.subr.mxu0 0.0
      %247 = vmatpush1.msra.mxu0 0.0
      %248 = vmatprep.subr.mxu0 0.0
      %249 = vmatpush1.msra.mxu0 0.0
      %250 = vmatprep.subr.mxu0 0.0
      %251 = vmatpush1.msra.mxu0 0.0
      %252 = vmatprep.subr.mxu0 0.0
      %253 = vmatpush1.msra.mxu0 0.0
      %254 = vmatprep.subr.mxu0 0.0
      %255 = vmatpush1.msra.mxu0 0.0
      %256 = vmatprep.subr.mxu0 0.0
      %257 = vmatpush1.msra.mxu0 0.0
      %258 = vmatprep.subr.mxu0 0.0
      %259 = vmatpush1.msra.mxu0 0.0
      %260 = vmatprep.subr.mxu0 0.0
      %261 = vmatpush1.msra.mxu0 0.0
      %262 = vmatprep.subr.mxu0 0.0
      %263 = vmatpush1.msra.mxu0 0.0
      %264 = vmatprep.subr.mxu0 0.0
      %265 = vmatpush1.msra.mxu0 0.0
      %266 = vmatprep.subr.mxu0 0.0
      %267 = vmatpush1.msra.mxu0 0.0
      %268 = vmatprep.subr.mxu0 0.0
      %269 = vmatpush1.msra.mxu0 0.0
      %270 = vmatprep.subr.mxu0 0.0
      %271 = vmatpush1.msra.mxu0 0.0
      %272 = vmatprep.subr.mxu0 0.0
      %273 = vmatpush1.msra.mxu0 0.0
      %274 = vmatprep.subr.mxu0 0.0
      %275 = vmatpush1.msra.mxu0 0.0
      %276 = vmatprep.subr.mxu0 0.0
      %277 = vmatpush1.msra.mxu0 0.0
      %278 = vmatprep.subr.mxu0 0.0
      %279 = vmatpush1.msra.mxu0 0.0
      %280 = vmatprep.subr.mxu0 0.0
      %281 = vmatpush1.msra.mxu0 0.0
      %282 = vmatprep.subr.mxu0 0.0
      %283 = vmatpush1.msra.mxu0 0.0
      %284 = vmatprep.subr.mxu0 0.0
      %285 = vmatpush1.msra.mxu0 0.0
      %286 = vmatprep.subr.mxu0 0.0
      %287 = vmatpush1.msra.mxu0 0.0
      %288 = vmatprep.subr.mxu0 0.0
      %289 = vmatpush1.msra.mxu0 0.0
      %290 = vmatprep.mubr.f32.mxu0 0.0
      %291 = vmatmul.mubr.f32.gmra.mrb[0].mxu0 %v224
      %v292 = vpop.f32.mrb[0].mxu0
      %v293 = vadd.f32 0.0, %v292
      %v294 = vpop.f32.mrb[0].mxu0
      %v295 = vadd.f32 0.0, %v294
      %296 = vdwg.mxu0
      %297 = vmatprep.subr.mxu0 0.0
      %298 = vmatpush1.msra.mxu0 %v219
      %299 = vmatprep.subr.mxu0 0.0
      %300 = vmatpush1.msra.mxu0 0.0
      %301 = vmatprep.subr.mxu0 0.0
      %302 = vmatpush1.msra.mxu0 0.0
      %303 = vmatprep.subr.mxu0 0.0
      %304 = vmatpush1.msra.mxu0 0.0
      %305 = vmatprep.subr.mxu0 0.0
      %306 = vmatpush1.msra.mxu0 0.0
      %307 = vmatprep.subr.mxu0 0.0
      %308 = vmatpush1.msra.mxu0 0.0
      %309 = vmatprep.subr.mxu0 0.0
      %310 = vmatpush1.msra.mxu0 0.0
      %311 = vmatprep.subr.mxu0 0.0
      %312 = vmatpush1.msra.mxu0 0.0
      %313 = vmatprep.subr.mxu0 0.0
      %314 = vmatpush1.msra.mxu0 0.0
      %315 = vmatprep.subr.mxu0 0.0
      %316 = vmatpush1.msra.mxu0 0.0
      %317 = vmatprep.subr.mxu0 0.0
      %318 = vmatpush1.msra.mxu0 0.0
      %319 = vmatprep.subr.mxu0 0.0
      %320 = vmatpush1.msra.mxu0 0.0
      %321 = vmatprep.subr.mxu0 0.0
      %322 = vmatpush1.msra.mxu0 0.0
      %323 = vmatprep.subr.mxu0 0.0
      %324 = vmatpush1.msra.mxu0 0.0
      %325 = vmatprep.subr.mxu0 0.0
      %326 = vmatpush1.msra.mxu0 0.0
      %327 = vmatprep.subr.mxu0 0.0
      %328 = vmatpush1.msra.mxu0 0.0
      %329 = vmatprep.subr.mxu0 0.0
      %330 = vmatpush1.msra.mxu0 0.0
      %331 = vmatprep.subr.mxu0 0.0
      %332 = vmatpush1.msra.mxu0 0.0
      %333 = vmatprep.subr.mxu0 0.0
      %334 = vmatpush1.msra.mxu0 0.0
      %335 = vmatprep.subr.mxu0 0.0
      %336 = vmatpush1.msra.mxu0 0.0
      %337 = vmatprep.subr.mxu0 0.0
      %338 = vmatpush1.msra.mxu0 0.0
      %339 = vmatprep.subr.mxu0 0.0
      %340 = vmatpush1.msra.mxu0 0.0
      %341 = vmatprep.subr.mxu0 0.0
      %342 = vmatpush1.msra.mxu0 0.0
      %343 = vmatprep.subr.mxu0 0.0
      %344 = vmatpush1.msra.mxu0 0.0
      %345 = vmatprep.subr.mxu0 0.0
      %346 = vmatpush1.msra.mxu0 0.0
      %347 = vmatprep.subr.mxu0 0.0
      %348 = vmatpush1.msra.mxu0 0.0
      %349 = vmatprep.subr.mxu0 0.0
      %350 = vmatpush1.msra.mxu0 0.0
      %351 = vmatprep.subr.mxu0 0.0
      %352 = vmatpush1.msra.mxu0 0.0
      %353 = vmatprep.subr.mxu0 0.0
      %354 = vmatpush1.msra.mxu0 0.0
      %355 = vmatprep.subr.mxu0 0.0
      %356 = vmatpush1.msra.mxu0 0.0
      %357 = vmatprep.subr.mxu0 0.0
      %358 = vmatpush1.msra.mxu0 0.0
      %359 = vmatprep.subr.mxu0 0.0
      %360 = vmatpush1.msra.mxu0 0.0
      %361 = vmatprep.mubr.f32.mxu0 0.0
      %362 = vmatmul.mubr.f32.gmra.mrb[0].mxu0 %v224
      %v363 = vpop.f32.mrb[0].mxu0
      %v364 = vadd.f32 0.0, %v363
      %v365 = vpop.f32.mrb[0].mxu0
      %366 = vdwg.mxu0
      %v368 = vsel %vm222, %v179, 0
      %370 = vmatprep.subr.mxu0 %v210
      %371 = vmatpush1.msra.mxu0 %v211
      %372 = vmatprep.subr.mxu0 0.0
      %373 = vmatpush1.msra.mxu0 0.0
      %374 = vmatprep.subr.mxu0 0.0
      %375 = vmatpush1.msra.mxu0 0.0
      %376 = vmatprep.subr.mxu0 0.0
      %377 = vmatpush1.msra.mxu0 0.0
      %378 = vmatprep.subr.mxu0 0.0
      %379 = vmatpush1.msra.mxu0 0.0
      %380 = vmatprep.subr.mxu0 0.0
      %381 = vmatpush1.msra.mxu0 0.0
      %382 = vmatprep.subr.mxu0 0.0
      %383 = vmatpush1.msra.mxu0 0.0
      %384 = vmatprep.subr.mxu0 0.0
      %385 = vmatpush1.msra.mxu0 0.0
      %386 = vmatprep.subr.mxu0 0.0
      %387 = vmatpush1.msra.mxu0 0.0
      %388 = vmatprep.subr.mxu0 0.0
      %389 = vmatpush1.msra.mxu0 0.0
      %390 = vmatprep.subr.mxu0 0.0
      %391 = vmatpush1.msra.mxu0 0.0
      %392 = vmatprep.subr.mxu0 0.0
      %393 = vmatpush1.msra.mxu0 0.0
      %394 = vmatprep.subr.mxu0 0.0
      %395 = vmatpush1.msra.mxu0 0.0
      %396 = vmatprep.subr.mxu0 0.0
      %397 = vmatpush1.msra.mxu0 0.0
      %398 = vmatprep.subr.mxu0 0.0
      %399 = vmatpush1.msra.mxu0 0.0
      %400 = vmatprep.subr.mxu0 0.0
      %401 = vmatpush1.msra.mxu0 0.0
      %402 = vmatprep.subr.mxu0 0.0
      %403 = vmatpush1.msra.mxu0 0.0
      %404 = vmatprep.subr.mxu0 0.0
      %405 = vmatpush1.msra.mxu0 0.0
      %406 = vmatprep.subr.mxu0 0.0
      %407 = vmatpush1.msra.mxu0 0.0
      %408 = vmatprep.subr.mxu0 0.0
      %409 = vmatpush1.msra.mxu0 0.0
      %410 = vmatprep.subr.mxu0 0.0
      %411 = vmatpush1.msra.mxu0 0.0
      %412 = vmatprep.subr.mxu0 0.0
      %413 = vmatpush1.msra.mxu0 0.0
      %414 = vmatprep.subr.mxu0 0.0
      %415 = vmatpush1.msra.mxu0 0.0
      %416 = vmatprep.subr.mxu0 0.0
      %417 = vmatpush1.msra.mxu0 0.0
      %418 = vmatprep.subr.mxu0 0.0
      %419 = vmatpush1.msra.mxu0 0.0
      %420 = vmatprep.subr.mxu0 0.0
      %421 = vmatpush1.msra.mxu0 0.0
      %422 = vmatprep.subr.mxu0 0.0
      %423 = vmatpush1.msra.mxu0 0.0
      %424 = vmatprep.subr.mxu0 0.0
      %425 = vmatpush1.msra.mxu0 0.0
      %426 = vmatprep.subr.mxu0 0.0
      %427 = vmatpush1.msra.mxu0 0.0
      %428 = vmatprep.subr.mxu0 0.0
      %429 = vmatpush1.msra.mxu0 0.0
      %430 = vmatprep.subr.mxu0 0.0
      %431 = vmatpush1.msra.mxu0 0.0
      %432 = vmatprep.subr.mxu0 0.0
      %433 = vmatpush1.msra.mxu0 0.0
      %434 = vmatprep.mubr.f32.mxu0 0.0
      %435 = vmatmul.mubr.f32.gmra.mrb[0].mxu0 %v368
      %v436 = vpop.f32.mrb[0].mxu0
      %v437 = vadd.f32 %v293, %v436
      %v438 = vpop.f32.mrb[0].mxu0
      %v439 = vadd.f32 %v295, %v438
      %440 = vdwg.mxu0
      %441 = vmatprep.subr.mxu0 0.0
      %442 = vmatpush1.msra.mxu0 %v209
      %443 = vmatprep.subr.mxu0 0.0
      %444 = vmatpush1.msra.mxu0 0.0
      %445 = vmatprep.subr.mxu0 0.0
      %446 = vmatpush1.msra.mxu0 0.0
      %447 = vmatprep.subr.mxu0 0.0
      %448 = vmatpush1.msra.mxu0 0.0
      %449 = vmatprep.subr.mxu0 0.0
      %450 = vmatpush1.msra.mxu0 0.0
      %451 = vmatprep.subr.mxu0 0.0
      %452 = vmatpush1.msra.mxu0 0.0
      %453 = vmatprep.subr.mxu0 0.0
      %454 = vmatpush1.msra.mxu0 0.0
      %455 = vmatprep.subr.mxu0 0.0
      %456 = vmatpush1.msra.mxu0 0.0
      %457 = vmatprep.subr.mxu0 0.0
      %458 = vmatpush1.msra.mxu0 0.0
      %459 = vmatprep.subr.mxu0 0.0
      %460 = vmatpush1.msra.mxu0 0.0
      %461 = vmatprep.subr.mxu0 0.0
      %462 = vmatpush1.msra.mxu0 0.0
      %463 = vmatprep.subr.mxu0 0.0
      %464 = vmatpush1.msra.mxu0 0.0
      %465 = vmatprep.subr.mxu0 0.0
      %466 = vmatpush1.msra.mxu0 0.0
      %467 = vmatprep.subr.mxu0 0.0
      %468 = vmatpush1.msra.mxu0 0.0
      %469 = vmatprep.subr.mxu0 0.0
      %470 = vmatpush1.msra.mxu0 0.0
      %471 = vmatprep.subr.mxu0 0.0
      %472 = vmatpush1.msra.mxu0 0.0
      %473 = vmatprep.subr.mxu0 0.0
      %474 = vmatpush1.msra.mxu0 0.0
      %475 = vmatprep.subr.mxu0 0.0
      %476 = vmatpush1.msra.mxu0 0.0
      %477 = vmatprep.subr.mxu0 0.0
      %478 = vmatpush1.msra.mxu0 0.0
      %479 = vmatprep.subr.mxu0 0.0
      %480 = vmatpush1.msra.mxu0 0.0
      %481 = vmatprep.subr.mxu0 0.0
      %482 = vmatpush1.msra.mxu0 0.0
      %483 = vmatprep.subr.mxu0 0.0
      %484 = vmatpush1.msra.mxu0 0.0
      %485 = vmatprep.subr.mxu0 0.0
      %486 = vmatpush1.msra.mxu0 0.0
      %487 = vmatprep.subr.mxu0 0.0
      %488 = vmatpush1.msra.mxu0 0.0
      %489 = vmatprep.subr.mxu0 0.0
      %490 = vmatpush1.msra.mxu0 0.0
      %491 = vmatprep.subr.mxu0 0.0
      %492 = vmatpush1.msra.mxu0 0.0
      %493 = vmatprep.subr.mxu0 0.0
      %494 = vmatpush1.msra.mxu0 0.0
      %495 = vmatprep.subr.mxu0 0.0
      %496 = vmatpush1.msra.mxu0 0.0
      %497 = vmatprep.subr.mxu0 0.0
      %498 = vmatpush1.msra.mxu0 0.0
      %499 = vmatprep.subr.mxu0 0.0
      %500 = vmatpush1.msra.mxu0 0.0
      %501 = vmatprep.subr.mxu0 0.0
      %502 = vmatpush1.msra.mxu0 0.0
      %503 = vmatprep.subr.mxu0 0.0
      %504 = vmatpush1.msra.mxu0 0.0
      %505 = vmatprep.mubr.f32.mxu0 0.0
      %506 = vmatmul.mubr.f32.gmra.mrb[0].mxu0 %v368
      %v507 = vpop.f32.mrb[0].mxu0
      %v508 = vadd.f32 %v364, %v507
      %v509 = vpop.f32.mrb[0].mxu0
      %510 = vdwg.mxu0
      %511 = vrot.lane.b32.xlu0 %v197, 17
      %v512 = vpop.permute.xlu0 %511
      %513 = vrot.lane.b32.xlu0 %v198, 17
      %v514 = vpop.permute.xlu0 %513
      %515 = vrot.lane.b32.xlu0 %v199, 17
      %v516 = vpop.permute.xlu0 %515
      %vm517 = vcmp.lt.s32.totalorder %v207, 17
      %v518 = vsel %vm517, %v514, %v516
      %v519 = vsel %vm517, %v512, %v514
      %v520 = vsel %vm517, %v516, %v512
      %v522 = vsel %vm222, %v183, 0
      %524 = vmatprep.subr.mxu0 %v519
      %525 = vmatpush1.msra.mxu0 %v520
      %526 = vmatprep.subr.mxu0 0.0
      %527 = vmatpush1.msra.mxu0 0.0
      %528 = vmatprep.subr.mxu0 0.0
      %529 = vmatpush1.msra.mxu0 0.0
      %530 = vmatprep.subr.mxu0 0.0
      %531 = vmatpush1.msra.mxu0 0.0
      %532 = vmatprep.subr.mxu0 0.0
      %533 = vmatpush1.msra.mxu0 0.0
      %534 = vmatprep.subr.mxu0 0.0
      %535 = vmatpush1.msra.mxu0 0.0
      %536 = vmatprep.subr.mxu0 0.0
      %537 = vmatpush1.msra.mxu0 0.0
      %538 = vmatprep.subr.mxu0 0.0
      %539 = vmatpush1.msra.mxu0 0.0
      %540 = vmatprep.subr.mxu0 0.0
      %541 = vmatpush1.msra.mxu0 0.0
      %542 = vmatprep.subr.mxu0 0.0
      %543 = vmatpush1.msra.mxu0 0.0
      %544 = vmatprep.subr.mxu0 0.0
      %545 = vmatpush1.msra.mxu0 0.0
      %546 = vmatprep.subr.mxu0 0.0
      %547 = vmatpush1.msra.mxu0 0.0
      %548 = vmatprep.subr.mxu0 0.0
      %549 = vmatpush1.msra.mxu0 0.0
      %550 = vmatprep.subr.mxu0 0.0
      %551 = vmatpush1.msra.mxu0 0.0
      %552 = vmatprep.subr.mxu0 0.0
      %553 = vmatpush1.msra.mxu0 0.0
      %554 = vmatprep.subr.mxu0 0.0
      %555 = vmatpush1.msra.mxu0 0.0
      %556 = vmatprep.subr.mxu0 0.0
      %557 = vmatpush1.msra.mxu0 0.0
      %558 = vmatprep.subr.mxu0 0.0
      %559 = vmatpush1.msra.mxu0 0.0
      %560 = vmatprep.subr.mxu0 0.0
      %561 = vmatpush1.msra.mxu0 0.0
      %562 = vmatprep.subr.mxu0 0.0
      %563 = vmatpush1.msra.mxu0 0.0
      %564 = vmatprep.subr.mxu0 0.0
      %565 = vmatpush1.msra.mxu0 0.0
      %566 = vmatprep.subr.mxu0 0.0
      %567 = vmatpush1.msra.mxu0 0.0
      %568 = vmatprep.subr.mxu0 0.0
      %569 = vmatpush1.msra.mxu0 0.0
      %570 = vmatprep.subr.mxu0 0.0
      %571 = vmatpush1.msra.mxu0 0.0
      %572 = vmatprep.subr.mxu0 0.0
      %573 = vmatpush1.msra.mxu0 0.0
      %574 = vmatprep.subr.mxu0 0.0
      %575 = vmatpush1.msra.mxu0 0.0
      %576 = vmatprep.subr.mxu0 0.0
      %577 = vmatpush1.msra.mxu0 0.0
      %578 = vmatprep.subr.mxu0 0.0
      %579 = vmatpush1.msra.mxu0 0.0
      %580 = vmatprep.subr.mxu0 0.0
      %581 = vmatpush1.msra.mxu0 0.0
      %582 = vmatprep.subr.mxu0 0.0
      %583 = vmatpush1.msra.mxu0 0.0
      %584 = vmatprep.subr.mxu0 0.0
      %585 = vmatpush1.msra.mxu0 0.0
      %586 = vmatprep.subr.mxu0 0.0
      %587 = vmatpush1.msra.mxu0 0.0
      %588 = vmatprep.mubr.f32.mxu0 0.0
      %589 = vmatmul.mubr.f32.gmra.mrb[0].mxu0 %v522
      %v590 = vpop.f32.mrb[0].mxu0
      %v591 = vadd.f32 0.0, %v590
      %v592 = vpop.f32.mrb[0].mxu0
      %v593 = vadd.f32 0.0, %v592
      %594 = vdwg.mxu0
      %595 = vmatprep.subr.mxu0 0.0
      %596 = vmatpush1.msra.mxu0 %v518
      %597 = vmatprep.subr.mxu0 0.0
      %598 = vmatpush1.msra.mxu0 0.0
      %599 = vmatprep.subr.mxu0 0.0
      %600 = vmatpush1.msra.mxu0 0.0
      %601 = vmatprep.subr.mxu0 0.0
      %602 = vmatpush1.msra.mxu0 0.0
      %603 = vmatprep.subr.mxu0 0.0
      %604 = vmatpush1.msra.mxu0 0.0
      %605 = vmatprep.subr.mxu0 0.0
      %606 = vmatpush1.msra.mxu0 0.0
      %607 = vmatprep.subr.mxu0 0.0
      %608 = vmatpush1.msra.mxu0 0.0
      %609 = vmatprep.subr.mxu0 0.0
      %610 = vmatpush1.msra.mxu0 0.0
      %611 = vmatprep.subr.mxu0 0.0
      %612 = vmatpush1.msra.mxu0 0.0
      %613 = vmatprep.subr.mxu0 0.0
      %614 = vmatpush1.msra.mxu0 0.0
      %615 = vmatprep.subr.mxu0 0.0
      %616 = vmatpush1.msra.mxu0 0.0
      %617 = vmatprep.subr.mxu0 0.0
      %618 = vmatpush1.msra.mxu0 0.0
      %619 = vmatprep.subr.mxu0 0.0
      %620 = vmatpush1.msra.mxu0 0.0
      %621 = vmatprep.subr.mxu0 0.0
      %622 = vmatpush1.msra.mxu0 0.0
      %623 = vmatprep.subr.mxu0 0.0
      %624 = vmatpush1.msra.mxu0 0.0
      %625 = vmatprep.subr.mxu0 0.0
      %626 = vmatpush1.msra.mxu0 0.0
      %627 = vmatprep.subr.mxu0 0.0
      %628 = vmatpush1.msra.mxu0 0.0
      %629 = vmatprep.subr.mxu0 0.0
      %630 = vmatpush1.msra.mxu0 0.0
      %631 = vmatprep.subr.mxu0 0.0
      %632 = vmatpush1.msra.mxu0 0.0
      %633 = vmatprep.subr.mxu0 0.0
      %634 = vmatpush1.msra.mxu0 0.0
      %635 = vmatprep.subr.mxu0 0.0
      %636 = vmatpush1.msra.mxu0 0.0
      %637 = vmatprep.subr.mxu0 0.0
      %638 = vmatpush1.msra.mxu0 0.0
      %639 = vmatprep.subr.mxu0 0.0
      %640 = vmatpush1.msra.mxu0 0.0
      %641 = vmatprep.subr.mxu0 0.0
      %642 = vmatpush1.msra.mxu0 0.0
      %643 = vmatprep.subr.mxu0 0.0
      %644 = vmatpush1.msra.mxu0 0.0
      %645 = vmatprep.subr.mxu0 0.0
      %646 = vmatpush1.msra.mxu0 0.0
      %647 = vmatprep.subr.mxu0 0.0
      %648 = vmatpush1.msra.mxu0 0.0
      %649 = vmatprep.subr.mxu0 0.0
      %650 = vmatpush1.msra.mxu0 0.0
      %651 = vmatprep.subr.mxu0 0.0
      %652 = vmatpush1.msra.mxu0 0.0
      %653 = vmatprep.subr.mxu0 0.0
      %654 = vmatpush1.msra.mxu0 0.0
      %655 = vmatprep.subr.mxu0 0.0
      %656 = vmatpush1.msra.mxu0 0.0
      %657 = vmatprep.subr.mxu0 0.0
      %658 = vmatpush1.msra.mxu0 0.0
      %659 = vmatprep.mubr.f32.mxu0 0.0
      %660 = vmatmul.mubr.f32.gmra.mrb[0].mxu0 %v522
      %v661 = vpop.f32.mrb[0].mxu0
      %v662 = vadd.f32 0.0, %v661
      %v663 = vpop.f32.mrb[0].mxu0
      %664 = vdwg.mxu0
      %v665 = vadd.f32 %v437, %v591
      %v666 = vadd.f32 %v439, %v593
      %v667 = vadd.f32 %v508, %v662
      %668 = vrot.lane.b32.xlu0 %v197, 1
      %v669 = vpop.permute.xlu0 %668
      %670 = vrot.lane.b32.xlu0 %v198, 1
      %v671 = vpop.permute.xlu0 %670
      %672 = vrot.lane.b32.xlu0 %v199, 1
      %v673 = vpop.permute.xlu0 %672
      %vm674 = vcmp.lt.s32.totalorder %v207, 1
      %v675 = vsel %vm674, %v671, %v673
      %v676 = vsel %vm674, %v669, %v671
      %v677 = vsel %vm674, %v673, %v669
      %v679 = vsel %vm222, %v185, 0
      %681 = vmatprep.subr.mxu0 %v676
      %682 = vmatpush1.msra.mxu0 %v677
      %683 = vmatprep.subr.mxu0 0.0
      %684 = vmatpush1.msra.mxu0 0.0
      %685 = vmatprep.subr.mxu0 0.0
      %686 = vmatpush1.msra.mxu0 0.0
      %687 = vmatprep.subr.mxu0 0.0
      %688 = vmatpush1.msra.mxu0 0.0
      %689 = vmatprep.subr.mxu0 0.0
      %690 = vmatpush1.msra.mxu0 0.0
      %691 = vmatprep.subr.mxu0 0.0
      %692 = vmatpush1.msra.mxu0 0.0
      %693 = vmatprep.subr.mxu0 0.0
      %694 = vmatpush1.msra.mxu0 0.0
      %695 = vmatprep.subr.mxu0 0.0
      %696 = vmatpush1.msra.mxu0 0.0
      %697 = vmatprep.subr.mxu0 0.0
      %698 = vmatpush1.msra.mxu0 0.0
      %699 = vmatprep.subr.mxu0 0.0
      %700 = vmatpush1.msra.mxu0 0.0
      %701 = vmatprep.subr.mxu0 0.0
      %702 = vmatpush1.msra.mxu0 0.0
      %703 = vmatprep.subr.mxu0 0.0
      %704 = vmatpush1.msra.mxu0 0.0
      %705 = vmatprep.subr.mxu0 0.0
      %706 = vmatpush1.msra.mxu0 0.0
      %707 = vmatprep.subr.mxu0 0.0
      %708 = vmatpush1.msra.mxu0 0.0
      %709 = vmatprep.subr.mxu0 0.0
      %710 = vmatpush1.msra.mxu0 0.0
      %711 = vmatprep.subr.mxu0 0.0
      %712 = vmatpush1.msra.mxu0 0.0
      %713 = vmatprep.subr.mxu0 0.0
      %714 = vmatpush1.msra.mxu0 0.0
      %715 = vmatprep.subr.mxu0 0.0
      %716 = vmatpush1.msra.mxu0 0.0
      %717 = vmatprep.subr.mxu0 0.0
      %718 = vmatpush1.msra.mxu0 0.0
      %719 = vmatprep.subr.mxu0 0.0
      %720 = vmatpush1.msra.mxu0 0.0
      %721 = vmatprep.subr.mxu0 0.0
      %722 = vmatpush1.msra.mxu0 0.0
      %723 = vmatprep.subr.mxu0 0.0
      %724 = vmatpush1.msra.mxu0 0.0
      %725 = vmatprep.subr.mxu0 0.0
      %726 = vmatpush1.msra.mxu0 0.0
      %727 = vmatprep.subr.mxu0 0.0
      %728 = vmatpush1.msra.mxu0 0.0
      %729 = vmatprep.subr.mxu0 0.0
      %730 = vmatpush1.msra.mxu0 0.0
      %731 = vmatprep.subr.mxu0 0.0
      %732 = vmatpush1.msra.mxu0 0.0
      %733 = vmatprep.subr.mxu0 0.0
      %734 = vmatpush1.msra.mxu0 0.0
      %735 = vmatprep.subr.mxu0 0.0
      %736 = vmatpush1.msra.mxu0 0.0
      %737 = vmatprep.subr.mxu0 0.0
      %738 = vmatpush1.msra.mxu0 0.0
      %739 = vmatprep.subr.mxu0 0.0
      %740 = vmatpush1.msra.mxu0 0.0
      %741 = vmatprep.subr.mxu0 0.0
      %742 = vmatpush1.msra.mxu0 0.0
      %743 = vmatprep.subr.mxu0 0.0
      %744 = vmatpush1.msra.mxu0 0.0
      %745 = vmatprep.mubr.f32.mxu0 0.0
      %746 = vmatmul.mubr.f32.gmra.mrb[0].mxu0 %v679
      %v747 = vpop.f32.mrb[0].mxu0
      %v748 = vadd.f32 0.0, %v747
      %v749 = vpop.f32.mrb[0].mxu0
      %v750 = vadd.f32 0.0, %v749
      %751 = vdwg.mxu0
      %752 = vmatprep.subr.mxu0 0.0
      %753 = vmatpush1.msra.mxu0 %v675
      %754 = vmatprep.subr.mxu0 0.0
      %755 = vmatpush1.msra.mxu0 0.0
      %756 = vmatprep.subr.mxu0 0.0
      %757 = vmatpush1.msra.mxu0 0.0
      %758 = vmatprep.subr.mxu0 0.0
      %759 = vmatpush1.msra.mxu0 0.0
      %760 = vmatprep.subr.mxu0 0.0
      %761 = vmatpush1.msra.mxu0 0.0
      %762 = vmatprep.subr.mxu0 0.0
      %763 = vmatpush1.msra.mxu0 0.0
      %764 = vmatprep.subr.mxu0 0.0
      %765 = vmatpush1.msra.mxu0 0.0
      %766 = vmatprep.subr.mxu0 0.0
      %767 = vmatpush1.msra.mxu0 0.0
      %768 = vmatprep.subr.mxu0 0.0
      %769 = vmatpush1.msra.mxu0 0.0
      %770 = vmatprep.subr.mxu0 0.0
      %771 = vmatpush1.msra.mxu0 0.0
      %772 = vmatprep.subr.mxu0 0.0
      %773 = vmatpush1.msra.mxu0 0.0
      %774 = vmatprep.subr.mxu0 0.0
      %775 = vmatpush1.msra.mxu0 0.0
      %776 = vmatprep.subr.mxu0 0.0
      %777 = vmatpush1.msra.mxu0 0.0
      %778 = vmatprep.subr.mxu0 0.0
      %779 = vmatpush1.msra.mxu0 0.0
      %780 = vmatprep.subr.mxu0 0.0
      %781 = vmatpush1.msra.mxu0 0.0
      %782 = vmatprep.subr.mxu0 0.0
      %783 = vmatpush1.msra.mxu0 0.0
      %784 = vmatprep.subr.mxu0 0.0
      %785 = vmatpush1.msra.mxu0 0.0
      %786 = vmatprep.subr.mxu0 0.0
      %787 = vmatpush1.msra.mxu0 0.0
      %788 = vmatprep.subr.mxu0 0.0
      %789 = vmatpush1.msra.mxu0 0.0
      %790 = vmatprep.subr.mxu0 0.0
      %791 = vmatpush1.msra.mxu0 0.0
      %792 = vmatprep.subr.mxu0 0.0
      %793 = vmatpush1.msra.mxu0 0.0
      %794 = vmatprep.subr.mxu0 0.0
      %795 = vmatpush1.msra.mxu0 0.0
      %796 = vmatprep.subr.mxu0 0.0
      %797 = vmatpush1.msra.mxu0 0.0
      %798 = vmatprep.subr.mxu0 0.0
      %799 = vmatpush1.msra.mxu0 0.0
      %800 = vmatprep.subr.mxu0 0.0
      %801 = vmatpush1.msra.mxu0 0.0
      %802 = vmatprep.subr.mxu0 0.0
      %803 = vmatpush1.msra.mxu0 0.0
      %804 = vmatprep.subr.mxu0 0.0
      %805 = vmatpush1.msra.mxu0 0.0
      %806 = vmatprep.subr.mxu0 0.0
      %807 = vmatpush1.msra.mxu0 0.0
      %808 = vmatprep.subr.mxu0 0.0
      %809 = vmatpush1.msra.mxu0 0.0
      %810 = vmatprep.subr.mxu0 0.0
      %811 = vmatpush1.msra.mxu0 0.0
      %812 = vmatprep.subr.mxu0 0.0
      %813 = vmatpush1.msra.mxu0 0.0
      %814 = vmatprep.subr.mxu0 0.0
      %815 = vmatpush1.msra.mxu0 0.0
      %816 = vmatprep.mubr.f32.mxu0 0.0
      %817 = vmatmul.mubr.f32.gmra.mrb[0].mxu0 %v679
      %v818 = vpop.f32.mrb[0].mxu0
      %v819 = vadd.f32 0.0, %v818
      %v820 = vpop.f32.mrb[0].mxu0
      %821 = vdwg.mxu0
      %v822 = vadd.f32 %v665, %v748
      %v823 = vadd.f32 %v666, %v750
      %v824 = vadd.f32 %v667, %v819
      %v826 = vsel %vm222, %v187, 0
      %828 = vmatprep.subr.mxu0 %v198
      %829 = vmatpush1.msra.mxu0 %v197
      %830 = vmatprep.subr.mxu0 0.0
      %831 = vmatpush1.msra.mxu0 0.0
      %832 = vmatprep.subr.mxu0 0.0
      %833 = vmatpush1.msra.mxu0 0.0
      %834 = vmatprep.subr.mxu0 0.0
      %835 = vmatpush1.msra.mxu0 0.0
      %836 = vmatprep.subr.mxu0 0.0
      %837 = vmatpush1.msra.mxu0 0.0
      %838 = vmatprep.subr.mxu0 0.0
      %839 = vmatpush1.msra.mxu0 0.0
      %840 = vmatprep.subr.mxu0 0.0
      %841 = vmatpush1.msra.mxu0 0.0
      %842 = vmatprep.subr.mxu0 0.0
      %843 = vmatpush1.msra.mxu0 0.0
      %844 = vmatprep.subr.mxu0 0.0
      %845 = vmatpush1.msra.mxu0 0.0
      %846 = vmatprep.subr.mxu0 0.0
      %847 = vmatpush1.msra.mxu0 0.0
      %848 = vmatprep.subr.mxu0 0.0
      %849 = vmatpush1.msra.mxu0 0.0
      %850 = vmatprep.subr.mxu0 0.0
      %851 = vmatpush1.msra.mxu0 0.0
      %852 = vmatprep.subr.mxu0 0.0
      %853 = vmatpush1.msra.mxu0 0.0
      %854 = vmatprep.subr.mxu0 0.0
      %855 = vmatpush1.msra.mxu0 0.0
      %856 = vmatprep.subr.mxu0 0.0
      %857 = vmatpush1.msra.mxu0 0.0
      %858 = vmatprep.subr.mxu0 0.0
      %859 = vmatpush1.msra.mxu0 0.0
      %860 = vmatprep.subr.mxu0 0.0
      %861 = vmatpush1.msra.mxu0 0.0
      %862 = vmatprep.subr.mxu0 0.0
      %863 = vmatpush1.msra.mxu0 0.0
      %864 = vmatprep.subr.mxu0 0.0
      %865 = vmatpush1.msra.mxu0 0.0
      %866 = vmatprep.subr.mxu0 0.0
      %867 = vmatpush1.msra.mxu0 0.0
      %868 = vmatprep.subr.mxu0 0.0
      %869 = vmatpush1.msra.mxu0 0.0
      %870 = vmatprep.subr.mxu0 0.0
      %871 = vmatpush1.msra.mxu0 0.0
      %872 = vmatprep.subr.mxu0 0.0
      %873 = vmatpush1.msra.mxu0 0.0
      %874 = vmatprep.subr.mxu0 0.0
      %875 = vmatpush1.msra.mxu0 0.0
      %876 = vmatprep.subr.mxu0 0.0
      %877 = vmatpush1.msra.mxu0 0.0
      %878 = vmatprep.subr.mxu0 0.0
      %879 = vmatpush1.msra.mxu0 0.0
      %880 = vmatprep.subr.mxu0 0.0
      %881 = vmatpush1.msra.mxu0 0.0
      %882 = vmatprep.subr.mxu0 0.0
      %883 = vmatpush1.msra.mxu0 0.0
      %884 = vmatprep.subr.mxu0 0.0
      %885 = vmatpush1.msra.mxu0 0.0
      %886 = vmatprep.subr.mxu0 0.0
      %887 = vmatpush1.msra.mxu0 0.0
      %888 = vmatprep.subr.mxu0 0.0
      %889 = vmatpush1.msra.mxu0 0.0
      %890 = vmatprep.subr.mxu0 0.0
      %891 = vmatpush1.msra.mxu0 0.0
      %892 = vmatprep.mubr.f32.mxu0 0.0
      %893 = vmatmul.mubr.f32.gmra.mrb[0].mxu0 %v826
      %v894 = vpop.f32.mrb[0].mxu0
      %v895 = vadd.f32 0.0, %v894
      %v896 = vpop.f32.mrb[0].mxu0
      %v897 = vadd.f32 0.0, %v896
      %898 = vdwg.mxu0
      %899 = vmatprep.subr.mxu0 0.0
      %900 = vmatpush1.msra.mxu0 %v199
      %901 = vmatprep.subr.mxu0 0.0
      %902 = vmatpush1.msra.mxu0 0.0
      %903 = vmatprep.subr.mxu0 0.0
      %904 = vmatpush1.msra.mxu0 0.0
      %905 = vmatprep.subr.mxu0 0.0
      %906 = vmatpush1.msra.mxu0 0.0
      %907 = vmatprep.subr.mxu0 0.0
      %908 = vmatpush1.msra.mxu0 0.0
      %909 = vmatprep.subr.mxu0 0.0
      %910 = vmatpush1.msra.mxu0 0.0
      %911 = vmatprep.subr.mxu0 0.0
      %912 = vmatpush1.msra.mxu0 0.0
      %913 = vmatprep.subr.mxu0 0.0
      %914 = vmatpush1.msra.mxu0 0.0
      %915 = vmatprep.subr.mxu0 0.0
      %916 = vmatpush1.msra.mxu0 0.0
      %917 = vmatprep.subr.mxu0 0.0
      %918 = vmatpush1.msra.mxu0 0.0
      %919 = vmatprep.subr.mxu0 0.0
      %920 = vmatpush1.msra.mxu0 0.0
      %921 = vmatprep.subr.mxu0 0.0
      %922 = vmatpush1.msra.mxu0 0.0
      %923 = vmatprep.subr.mxu0 0.0
      %924 = vmatpush1.msra.mxu0 0.0
      %925 = vmatprep.subr.mxu0 0.0
      %926 = vmatpush1.msra.mxu0 0.0
      %927 = vmatprep.subr.mxu0 0.0
      %928 = vmatpush1.msra.mxu0 0.0
      %929 = vmatprep.subr.mxu0 0.0
      %930 = vmatpush1.msra.mxu0 0.0
      %931 = vmatprep.subr.mxu0 0.0
      %932 = vmatpush1.msra.mxu0 0.0
      %933 = vmatprep.subr.mxu0 0.0
      %934 = vmatpush1.msra.mxu0 0.0
      %935 = vmatprep.subr.mxu0 0.0
      %936 = vmatpush1.msra.mxu0 0.0
      %937 = vmatprep.subr.mxu0 0.0
      %938 = vmatpush1.msra.mxu0 0.0
      %939 = vmatprep.subr.mxu0 0.0
      %940 = vmatpush1.msra.mxu0 0.0
      %941 = vmatprep.subr.mxu0 0.0
      %942 = vmatpush1.msra.mxu0 0.0
      %943 = vmatprep.subr.mxu0 0.0
      %944 = vmatpush1.msra.mxu0 0.0
      %945 = vmatprep.subr.mxu0 0.0
      %946 = vmatpush1.msra.mxu0 0.0
      %947 = vmatprep.subr.mxu0 0.0
      %948 = vmatpush1.msra.mxu0 0.0
      %949 = vmatprep.subr.mxu0 0.0
      %950 = vmatpush1.msra.mxu0 0.0
      %951 = vmatprep.subr.mxu0 0.0
      %952 = vmatpush1.msra.mxu0 0.0
      %953 = vmatprep.subr.mxu0 0.0
      %954 = vmatpush1.msra.mxu0 0.0
      %955 = vmatprep.subr.mxu0 0.0
      %956 = vmatpush1.msra.mxu0 0.0
      %957 = vmatprep.subr.mxu0 0.0
      %958 = vmatpush1.msra.mxu0 0.0
      %959 = vmatprep.subr.mxu0 0.0
      %960 = vmatpush1.msra.mxu0 0.0
      %961 = vmatprep.subr.mxu0 0.0
      %962 = vmatpush1.msra.mxu0 0.0
      %963 = vmatprep.mubr.f32.mxu0 0.0
      %964 = vmatmul.mubr.f32.gmra.mrb[0].mxu0 %v826
      %v965 = vpop.f32.mrb[0].mxu0
      %v966 = vadd.f32 0.0, %v965
      %v967 = vpop.f32.mrb[0].mxu0
      %968 = vdwg.mxu0
      %v969 = vadd.f32 %v822, %v895
      %v970 = vadd.f32 %v823, %v897
      %v971 = vadd.f32 %v824, %v966
      %972 = vrot.lane.b32.xlu0 %v197, 127
      %v973 = vpop.permute.xlu0 %972
      %974 = vrot.lane.b32.xlu0 %v198, 127
      %v975 = vpop.permute.xlu0 %974
      %976 = vrot.lane.b32.xlu0 %v199, 127
      %v977 = vpop.permute.xlu0 %976
      %vm978 = vcmp.lt.s32.totalorder %v207, 127
      %v979 = vsel %vm978, %v975, %v977
      %v980 = vsel %vm978, %v973, %v975
      %v981 = vsel %vm978, %v977, %v973
      %v983 = vsel %vm222, %v189, 0
      %985 = vmatprep.subr.mxu0 %v979
      %986 = vmatpush1.msra.mxu0 %v980
      %987 = vmatprep.subr.mxu0 0.0
      %988 = vmatpush1.msra.mxu0 0.0
      %989 = vmatprep.subr.mxu0 0.0
      %990 = vmatpush1.msra.mxu0 0.0
      %991 = vmatprep.subr.mxu0 0.0
      %992 = vmatpush1.msra.mxu0 0.0
      %993 = vmatprep.subr.mxu0 0.0
      %994 = vmatpush1.msra.mxu0 0.0
      %995 = vmatprep.subr.mxu0 0.0
      %996 = vmatpush1.msra.mxu0 0.0
      %997 = vmatprep.subr.mxu0 0.0
      %998 = vmatpush1.msra.mxu0 0.0
      %999 = vmatprep.subr.mxu0 0.0
      %1000 = vmatpush1.msra.mxu0 0.0
      %1001 = vmatprep.subr.mxu0 0.0
      %1002 = vmatpush1.msra.mxu0 0.0
      %1003 = vmatprep.subr.mxu0 0.0
      %1004 = vmatpush1.msra.mxu0 0.0
      %1005 = vmatprep.subr.mxu0 0.0
      %1006 = vmatpush1.msra.mxu0 0.0
      %1007 = vmatprep.subr.mxu0 0.0
      %1008 = vmatpush1.msra.mxu0 0.0
      %1009 = vmatprep.subr.mxu0 0.0
      %1010 = vmatpush1.msra.mxu0 0.0
      %1011 = vmatprep.subr.mxu0 0.0
      %1012 = vmatpush1.msra.mxu0 0.0
      %1013 = vmatprep.subr.mxu0 0.0
      %1014 = vmatpush1.msra.mxu0 0.0
      %1015 = vmatprep.subr.mxu0 0.0
      %1016 = vmatpush1.msra.mxu0 0.0
      %1017 = vmatprep.subr.mxu0 0.0
      %1018 = vmatpush1.msra.mxu0 0.0
      %1019 = vmatprep.subr.mxu0 0.0
      %1020 = vmatpush1.msra.mxu0 0.0
      %1021 = vmatprep.subr.mxu0 0.0
      %1022 = vmatpush1.msra.mxu0 0.0
      %1023 = vmatprep.subr.mxu0 0.0
      %1024 = vmatpush1.msra.mxu0 0.0
      %1025 = vmatprep.subr.mxu0 0.0
      %1026 = vmatpush1.msra.mxu0 0.0
      %1027 = vmatprep.subr.mxu0 0.0
      %1028 = vmatpush1.msra.mxu0 0.0
      %1029 = vmatprep.subr.mxu0 0.0
      %1030 = vmatpush1.msra.mxu0 0.0
      %1031 = vmatprep.subr.mxu0 0.0
      %1032 = vmatpush1.msra.mxu0 0.0
      %1033 = vmatprep.subr.mxu0 0.0
      %1034 = vmatpush1.msra.mxu0 0.0
      %1035 = vmatprep.subr.mxu0 0.0
      %1036 = vmatpush1.msra.mxu0 0.0
      %1037 = vmatprep.subr.mxu0 0.0
      %1038 = vmatpush1.msra.mxu0 0.0
      %1039 = vmatprep.subr.mxu0 0.0
      %1040 = vmatpush1.msra.mxu0 0.0
      %1041 = vmatprep.subr.mxu0 0.0
      %1042 = vmatpush1.msra.mxu0 0.0
      %1043 = vmatprep.subr.mxu0 0.0
      %1044 = vmatpush1.msra.mxu0 0.0
      %1045 = vmatprep.subr.mxu0 0.0
      %1046 = vmatpush1.msra.mxu0 0.0
      %1047 = vmatprep.subr.mxu0 0.0
      %1048 = vmatpush1.msra.mxu0 0.0
      %1049 = vmatprep.mubr.f32.mxu0 0.0
      %1050 = vmatmul.mubr.f32.gmra.mrb[0].mxu0 %v983
      %v1051 = vpop.f32.mrb[0].mxu0
      %v1052 = vadd.f32 0.0, %v1051
      %v1053 = vpop.f32.mrb[0].mxu0
      %v1054 = vadd.f32 0.0, %v1053
      %1055 = vdwg.mxu0
      %1056 = vmatprep.subr.mxu0 0.0
      %1057 = vmatpush1.msra.mxu0 %v981
      %1058 = vmatprep.subr.mxu0 0.0
      %1059 = vmatpush1.msra.mxu0 0.0
      %1060 = vmatprep.subr.mxu0 0.0
      %1061 = vmatpush1.msra.mxu0 0.0
      %1062 = vmatprep.subr.mxu0 0.0
      %1063 = vmatpush1.msra.mxu0 0.0
      %1064 = vmatprep.subr.mxu0 0.0
      %1065 = vmatpush1.msra.mxu0 0.0
      %1066 = vmatprep.subr.mxu0 0.0
      %1067 = vmatpush1.msra.mxu0 0.0
      %1068 = vmatprep.subr.mxu0 0.0
      %1069 = vmatpush1.msra.mxu0 0.0
      %1070 = vmatprep.subr.mxu0 0.0
      %1071 = vmatpush1.msra.mxu0 0.0
      %1072 = vmatprep.subr.mxu0 0.0
      %1073 = vmatpush1.msra.mxu0 0.0
      %1074 = vmatprep.subr.mxu0 0.0
      %1075 = vmatpush1.msra.mxu0 0.0
      %1076 = vmatprep.subr.mxu0 0.0
      %1077 = vmatpush1.msra.mxu0 0.0
      %1078 = vmatprep.subr.mxu0 0.0
      %1079 = vmatpush1.msra.mxu0 0.0
      %1080 = vmatprep.subr.mxu0 0.0
      %1081 = vmatpush1.msra.mxu0 0.0
      %1082 = vmatprep.subr.mxu0 0.0
      %1083 = vmatpush1.msra.mxu0 0.0
      %1084 = vmatprep.subr.mxu0 0.0
      %1085 = vmatpush1.msra.mxu0 0.0
      %1086 = vmatprep.subr.mxu0 0.0
      %1087 = vmatpush1.msra.mxu0 0.0
      %1088 = vmatprep.subr.mxu0 0.0
      %1089 = vmatpush1.msra.mxu0 0.0
      %1090 = vmatprep.subr.mxu0 0.0
      %1091 = vmatpush1.msra.mxu0 0.0
      %1092 = vmatprep.subr.mxu0 0.0
      %1093 = vmatpush1.msra.mxu0 0.0
      %1094 = vmatprep.subr.mxu0 0.0
      %1095 = vmatpush1.msra.mxu0 0.0
      %1096 = vmatprep.subr.mxu0 0.0
      %1097 = vmatpush1.msra.mxu0 0.0
      %1098 = vmatprep.subr.mxu0 0.0
      %1099 = vmatpush1.msra.mxu0 0.0
      %1100 = vmatprep.subr.mxu0 0.0
      %1101 = vmatpush1.msra.mxu0 0.0
      %1102 = vmatprep.subr.mxu0 0.0
      %1103 = vmatpush1.msra.mxu0 0.0
      %1104 = vmatprep.subr.mxu0 0.0
      %1105 = vmatpush1.msra.mxu0 0.0
      %1106 = vmatprep.subr.mxu0 0.0
      %1107 = vmatpush1.msra.mxu0 0.0
      %1108 = vmatprep.subr.mxu0 0.0
      %1109 = vmatpush1.msra.mxu0 0.0
      %1110 = vmatprep.subr.mxu0 0.0
      %1111 = vmatpush1.msra.mxu0 0.0
      %1112 = vmatprep.subr.mxu0 0.0
      %1113 = vmatpush1.msra.mxu0 0.0
      %1114 = vmatprep.subr.mxu0 0.0
      %1115 = vmatpush1.msra.mxu0 0.0
      %1116 = vmatprep.subr.mxu0 0.0
      %1117 = vmatpush1.msra.mxu0 0.0
      %1118 = vmatprep.subr.mxu0 0.0
      %1119 = vmatpush1.msra.mxu0 0.0
      %1120 = vmatprep.mubr.f32.mxu0 0.0
      %1121 = vmatmul.mubr.f32.gmra.mrb[0].mxu0 %v983
      %v1122 = vpop.f32.mrb[0].mxu0
      %v1123 = vadd.f32 0.0, %v1122
      %v1124 = vpop.f32.mrb[0].mxu0
      %1125 = vdwg.mxu0
      %v1126 = vadd.f32 %v969, %v1052
      %v1127 = vadd.f32 %v970, %v1054
      %v1128 = vadd.f32 %v971, %v1123
      %1129 = vrot.lane.b32.xlu0 %v197, 111
      %v1130 = vpop.permute.xlu0 %1129
      %1131 = vrot.lane.b32.xlu0 %v198, 111
      %v1132 = vpop.permute.xlu0 %1131
      %1133 = vrot.lane.b32.xlu0 %v199, 111
      %v1134 = vpop.permute.xlu0 %1133
      %vm1135 = vcmp.lt.s32.totalorder %v207, 111
      %v1136 = vsel %vm1135, %v1132, %v1134
      %v1137 = vsel %vm1135, %v1130, %v1132
      %v1138 = vsel %vm1135, %v1134, %v1130
      %v1140 = vsel %vm222, %v191, 0
      %1142 = vmatprep.subr.mxu0 %v1136
      %1143 = vmatpush1.msra.mxu0 %v1137
      %1144 = vmatprep.subr.mxu0 0.0
      %1145 = vmatpush1.msra.mxu0 0.0
      %1146 = vmatprep.subr.mxu0 0.0
      %1147 = vmatpush1.msra.mxu0 0.0
      %1148 = vmatprep.subr.mxu0 0.0
      %1149 = vmatpush1.msra.mxu0 0.0
      %1150 = vmatprep.subr.mxu0 0.0
      %1151 = vmatpush1.msra.mxu0 0.0
      %1152 = vmatprep.subr.mxu0 0.0
      %1153 = vmatpush1.msra.mxu0 0.0
      %1154 = vmatprep.subr.mxu0 0.0
      %1155 = vmatpush1.msra.mxu0 0.0
      %1156 = vmatprep.subr.mxu0 0.0
      %1157 = vmatpush1.msra.mxu0 0.0
      %1158 = vmatprep.subr.mxu0 0.0
      %1159 = vmatpush1.msra.mxu0 0.0
      %1160 = vmatprep.subr.mxu0 0.0
      %1161 = vmatpush1.msra.mxu0 0.0
      %1162 = vmatprep.subr.mxu0 0.0
      %1163 = vmatpush1.msra.mxu0 0.0
      %1164 = vmatprep.subr.mxu0 0.0
      %1165 = vmatpush1.msra.mxu0 0.0
      %1166 = vmatprep.subr.mxu0 0.0
      %1167 = vmatpush1.msra.mxu0 0.0
      %1168 = vmatprep.subr.mxu0 0.0
      %1169 = vmatpush1.msra.mxu0 0.0
      %1170 = vmatprep.subr.mxu0 0.0
      %1171 = vmatpush1.msra.mxu0 0.0
      %1172 = vmatprep.subr.mxu0 0.0
      %1173 = vmatpush1.msra.mxu0 0.0
      %1174 = vmatprep.subr.mxu0 0.0
      %1175 = vmatpush1.msra.mxu0 0.0
      %1176 = vmatprep.subr.mxu0 0.0
      %1177 = vmatpush1.msra.mxu0 0.0
      %1178 = vmatprep.subr.mxu0 0.0
      %1179 = vmatpush1.msra.mxu0 0.0
      %1180 = vmatprep.subr.mxu0 0.0
      %1181 = vmatpush1.msra.mxu0 0.0
      %1182 = vmatprep.subr.mxu0 0.0
      %1183 = vmatpush1.msra.mxu0 0.0
      %1184 = vmatprep.subr.mxu0 0.0
      %1185 = vmatpush1.msra.mxu0 0.0
      %1186 = vmatprep.subr.mxu0 0.0
      %1187 = vmatpush1.msra.mxu0 0.0
      %1188 = vmatprep.subr.mxu0 0.0
      %1189 = vmatpush1.msra.mxu0 0.0
      %1190 = vmatprep.subr.mxu0 0.0
      %1191 = vmatpush1.msra.mxu0 0.0
      %1192 = vmatprep.subr.mxu0 0.0
      %1193 = vmatpush1.msra.mxu0 0.0
      %1194 = vmatprep.subr.mxu0 0.0
      %1195 = vmatpush1.msra.mxu0 0.0
      %1196 = vmatprep.subr.mxu0 0.0
      %1197 = vmatpush1.msra.mxu0 0.0
      %1198 = vmatprep.subr.mxu0 0.0
      %1199 = vmatpush1.msra.mxu0 0.0
      %1200 = vmatprep.subr.mxu0 0.0
      %1201 = vmatpush1.msra.mxu0 0.0
      %1202 = vmatprep.subr.mxu0 0.0
      %1203 = vmatpush1.msra.mxu0 0.0
      %1204 = vmatprep.subr.mxu0 0.0
      %1205 = vmatpush1.msra.mxu0 0.0
      %1206 = vmatprep.mubr.f32.mxu0 0.0
      %1207 = vmatmul.mubr.f32.gmra.mrb[0].mxu0 %v1140
      %v1208 = vpop.f32.mrb[0].mxu0
      %v1209 = vadd.f32 0.0, %v1208
      %v1210 = vpop.f32.mrb[0].mxu0
      %v1211 = vadd.f32 0.0, %v1210
      %1212 = vdwg.mxu0
      %1213 = vmatprep.subr.mxu0 0.0
      %1214 = vmatpush1.msra.mxu0 %v1138
      %1215 = vmatprep.subr.mxu0 0.0
      %1216 = vmatpush1.msra.mxu0 0.0
      %1217 = vmatprep.subr.mxu0 0.0
      %1218 = vmatpush1.msra.mxu0 0.0
      %1219 = vmatprep.subr.mxu0 0.0
      %1220 = vmatpush1.msra.mxu0 0.0
      %1221 = vmatprep.subr.mxu0 0.0
      %1222 = vmatpush1.msra.mxu0 0.0
      %1223 = vmatprep.subr.mxu0 0.0
      %1224 = vmatpush1.msra.mxu0 0.0
      %1225 = vmatprep.subr.mxu0 0.0
      %1226 = vmatpush1.msra.mxu0 0.0
      %1227 = vmatprep.subr.mxu0 0.0
      %1228 = vmatpush1.msra.mxu0 0.0
      %1229 = vmatprep.subr.mxu0 0.0
      %1230 = vmatpush1.msra.mxu0 0.0
      %1231 = vmatprep.subr.mxu0 0.0
      %1232 = vmatpush1.msra.mxu0 0.0
      %1233 = vmatprep.subr.mxu0 0.0
      %1234 = vmatpush1.msra.mxu0 0.0
      %1235 = vmatprep.subr.mxu0 0.0
      %1236 = vmatpush1.msra.mxu0 0.0
      %1237 = vmatprep.subr.mxu0 0.0
      %1238 = vmatpush1.msra.mxu0 0.0
      %1239 = vmatprep.subr.mxu0 0.0
      %1240 = vmatpush1.msra.mxu0 0.0
      %1241 = vmatprep.subr.mxu0 0.0
      %1242 = vmatpush1.msra.mxu0 0.0
      %1243 = vmatprep.subr.mxu0 0.0
      %1244 = vmatpush1.msra.mxu0 0.0
      %1245 = vmatprep.subr.mxu0 0.0
      %1246 = vmatpush1.msra.mxu0 0.0
      %1247 = vmatprep.subr.mxu0 0.0
      %1248 = vmatpush1.msra.mxu0 0.0
      %1249 = vmatprep.subr.mxu0 0.0
      %1250 = vmatpush1.msra.mxu0 0.0
      %1251 = vmatprep.subr.mxu0 0.0
      %1252 = vmatpush1.msra.mxu0 0.0
      %1253 = vmatprep.subr.mxu0 0.0
      %1254 = vmatpush1.msra.mxu0 0.0
      %1255 = vmatprep.subr.mxu0 0.0
      %1256 = vmatpush1.msra.mxu0 0.0
      %1257 = vmatprep.subr.mxu0 0.0
      %1258 = vmatpush1.msra.mxu0 0.0
      %1259 = vmatprep.subr.mxu0 0.0
      %1260 = vmatpush1.msra.mxu0 0.0
      %1261 = vmatprep.subr.mxu0 0.0
      %1262 = vmatpush1.msra.mxu0 0.0
      %1263 = vmatprep.subr.mxu0 0.0
      %1264 = vmatpush1.msra.mxu0 0.0
      %1265 = vmatprep.subr.mxu0 0.0
      %1266 = vmatpush1.msra.mxu0 0.0
      %1267 = vmatprep.subr.mxu0 0.0
      %1268 = vmatpush1.msra.mxu0 0.0
      %1269 = vmatprep.subr.mxu0 0.0
      %1270 = vmatpush1.msra.mxu0 0.0
      %1271 = vmatprep.subr.mxu0 0.0
      %1272 = vmatpush1.msra.mxu0 0.0
      %1273 = vmatprep.subr.mxu0 0.0
      %1274 = vmatpush1.msra.mxu0 0.0
      %1275 = vmatprep.subr.mxu0 0.0
      %1276 = vmatpush1.msra.mxu0 0.0
      %1277 = vmatprep.mubr.f32.mxu0 0.0
      %1278 = vmatmul.mubr.f32.gmra.mrb[0].mxu0 %v1140
      %v1279 = vpop.f32.mrb[0].mxu0
      %v1280 = vadd.f32 0.0, %v1279
      %v1281 = vpop.f32.mrb[0].mxu0
      %1282 = vdwg.mxu0
      %v1283 = vadd.f32 %v1126, %v1209
      %v1284 = vadd.f32 %v1127, %v1211
      %v1285 = vadd.f32 %v1128, %v1280
      %1286 = vrot.lane.b32.xlu0 %v197, 110
      %v1287 = vpop.permute.xlu0 %1286
      %1288 = vrot.lane.b32.xlu0 %v198, 110
      %v1289 = vpop.permute.xlu0 %1288
      %1290 = vrot.lane.b32.xlu0 %v199, 110
      %v1291 = vpop.permute.xlu0 %1290
      %vm1292 = vcmp.lt.s32.totalorder %v207, 110
      %v1293 = vsel %vm1292, %v1289, %v1291
      %v1294 = vsel %vm1292, %v1287, %v1289
      %v1295 = vsel %vm1292, %v1291, %v1287
      %v1297 = vsel %vm222, %v193, 0
      %1299 = vmatprep.subr.mxu0 %v1293
      %1300 = vmatpush1.msra.mxu0 %v1294
      %1301 = vmatprep.subr.mxu0 0.0
      %1302 = vmatpush1.msra.mxu0 0.0
      %1303 = vmatprep.subr.mxu0 0.0
      %1304 = vmatpush1.msra.mxu0 0.0
      %1305 = vmatprep.subr.mxu0 0.0
      %1306 = vmatpush1.msra.mxu0 0.0
      %1307 = vmatprep.subr.mxu0 0.0
      %1308 = vmatpush1.msra.mxu0 0.0
      %1309 = vmatprep.subr.mxu0 0.0
      %1310 = vmatpush1.msra.mxu0 0.0
      %1311 = vmatprep.subr.mxu0 0.0
      %1312 = vmatpush1.msra.mxu0 0.0
      %1313 = vmatprep.subr.mxu0 0.0
      %1314 = vmatpush1.msra.mxu0 0.0
      %1315 = vmatprep.subr.mxu0 0.0
      %1316 = vmatpush1.msra.mxu0 0.0
      %1317 = vmatprep.subr.mxu0 0.0
      %1318 = vmatpush1.msra.mxu0 0.0
      %1319 = vmatprep.subr.mxu0 0.0
      %1320 = vmatpush1.msra.mxu0 0.0
      %1321 = vmatprep.subr.mxu0 0.0
      %1322 = vmatpush1.msra.mxu0 0.0
      %1323 = vmatprep.subr.mxu0 0.0
      %1324 = vmatpush1.msra.mxu0 0.0
      %1325 = vmatprep.subr.mxu0 0.0
      %1326 = vmatpush1.msra.mxu0 0.0
      %1327 = vmatprep.subr.mxu0 0.0
      %1328 = vmatpush1.msra.mxu0 0.0
      %1329 = vmatprep.subr.mxu0 0.0
      %1330 = vmatpush1.msra.mxu0 0.0
      %1331 = vmatprep.subr.mxu0 0.0
      %1332 = vmatpush1.msra.mxu0 0.0
      %1333 = vmatprep.subr.mxu0 0.0
      %1334 = vmatpush1.msra.mxu0 0.0
      %1335 = vmatprep.subr.mxu0 0.0
      %1336 = vmatpush1.msra.mxu0 0.0
      %1337 = vmatprep.subr.mxu0 0.0
      %1338 = vmatpush1.msra.mxu0 0.0
      %1339 = vmatprep.subr.mxu0 0.0
      %1340 = vmatpush1.msra.mxu0 0.0
      %1341 = vmatprep.subr.mxu0 0.0
      %1342 = vmatpush1.msra.mxu0 0.0
      %1343 = vmatprep.subr.mxu0 0.0
      %1344 = vmatpush1.msra.mxu0 0.0
      %1345 = vmatprep.subr.mxu0 0.0
      %1346 = vmatpush1.msra.mxu0 0.0
      %1347 = vmatprep.subr.mxu0 0.0
      %1348 = vmatpush1.msra.mxu0 0.0
      %1349 = vmatprep.subr.mxu0 0.0
      %1350 = vmatpush1.msra.mxu0 0.0
      %1351 = vmatprep.subr.mxu0 0.0
      %1352 = vmatpush1.msra.mxu0 0.0
      %1353 = vmatprep.subr.mxu0 0.0
      %1354 = vmatpush1.msra.mxu0 0.0
      %1355 = vmatprep.subr.mxu0 0.0
      %1356 = vmatpush1.msra.mxu0 0.0
      %1357 = vmatprep.subr.mxu0 0.0
      %1358 = vmatpush1.msra.mxu0 0.0
      %1359 = vmatprep.subr.mxu0 0.0
      %1360 = vmatpush1.msra.mxu0 0.0
      %1361 = vmatprep.subr.mxu0 0.0
      %1362 = vmatpush1.msra.mxu0 0.0
      %1363 = vmatprep.mubr.f32.mxu0 0.0
      %1364 = vmatmul.mubr.f32.gmra.mrb[0].mxu0 %v1297
      %v1365 = vpop.f32.mrb[0].mxu0
      %v1366 = vadd.f32 0.0, %v1365
      %v1367 = vpop.f32.mrb[0].mxu0
      %v1368 = vadd.f32 0.0, %v1367
      %1369 = vdwg.mxu0
      %1370 = vmatprep.subr.mxu0 0.0
      %1371 = vmatpush1.msra.mxu0 %v1295
      %1372 = vmatprep.subr.mxu0 0.0
      %1373 = vmatpush1.msra.mxu0 0.0
      %1374 = vmatprep.subr.mxu0 0.0
      %1375 = vmatpush1.msra.mxu0 0.0
      %1376 = vmatprep.subr.mxu0 0.0
      %1377 = vmatpush1.msra.mxu0 0.0
      %1378 = vmatprep.subr.mxu0 0.0
      %1379 = vmatpush1.msra.mxu0 0.0
      %1380 = vmatprep.subr.mxu0 0.0
      %1381 = vmatpush1.msra.mxu0 0.0
      %1382 = vmatprep.subr.mxu0 0.0
      %1383 = vmatpush1.msra.mxu0 0.0
      %1384 = vmatprep.subr.mxu0 0.0
      %1385 = vmatpush1.msra.mxu0 0.0
      %1386 = vmatprep.subr.mxu0 0.0
      %1387 = vmatpush1.msra.mxu0 0.0
      %1388 = vmatprep.subr.mxu0 0.0
      %1389 = vmatpush1.msra.mxu0 0.0
      %1390 = vmatprep.subr.mxu0 0.0
      %1391 = vmatpush1.msra.mxu0 0.0
      %1392 = vmatprep.subr.mxu0 0.0
      %1393 = vmatpush1.msra.mxu0 0.0
      %1394 = vmatprep.subr.mxu0 0.0
      %1395 = vmatpush1.msra.mxu0 0.0
      %1396 = vmatprep.subr.mxu0 0.0
      %1397 = vmatpush1.msra.mxu0 0.0
      %1398 = vmatprep.subr.mxu0 0.0
      %1399 = vmatpush1.msra.mxu0 0.0
      %1400 = vmatprep.subr.mxu0 0.0
      %1401 = vmatpush1.msra.mxu0 0.0
      %1402 = vmatprep.subr.mxu0 0.0
      %1403 = vmatpush1.msra.mxu0 0.0
      %1404 = vmatprep.subr.mxu0 0.0
      %1405 = vmatpush1.msra.mxu0 0.0
      %1406 = vmatprep.subr.mxu0 0.0
      %1407 = vmatpush1.msra.mxu0 0.0
      %1408 = vmatprep.subr.mxu0 0.0
      %1409 = vmatpush1.msra.mxu0 0.0
      %1410 = vmatprep.subr.mxu0 0.0
      %1411 = vmatpush1.msra.mxu0 0.0
      %1412 = vmatprep.subr.mxu0 0.0
      %1413 = vmatpush1.msra.mxu0 0.0
      %1414 = vmatprep.subr.mxu0 0.0
      %1415 = vmatpush1.msra.mxu0 0.0
      %1416 = vmatprep.subr.mxu0 0.0
      %1417 = vmatpush1.msra.mxu0 0.0
      %1418 = vmatprep.subr.mxu0 0.0
      %1419 = vmatpush1.msra.mxu0 0.0
      %1420 = vmatprep.subr.mxu0 0.0
      %1421 = vmatpush1.msra.mxu0 0.0
      %1422 = vmatprep.subr.mxu0 0.0
      %1423 = vmatpush1.msra.mxu0 0.0
      %1424 = vmatprep.subr.mxu0 0.0
      %1425 = vmatpush1.msra.mxu0 0.0
      %1426 = vmatprep.subr.mxu0 0.0
      %1427 = vmatpush1.msra.mxu0 0.0
      %1428 = vmatprep.subr.mxu0 0.0
      %1429 = vmatpush1.msra.mxu0 0.0
      %1430 = vmatprep.subr.mxu0 0.0
      %1431 = vmatpush1.msra.mxu0 0.0
      %1432 = vmatprep.subr.mxu0 0.0
      %1433 = vmatpush1.msra.mxu0 0.0
      %1434 = vmatprep.mubr.f32.mxu0 0.0
      %1435 = vmatmul.mubr.f32.gmra.mrb[0].mxu0 %v1297
      %v1436 = vpop.f32.mrb[0].mxu0
      %v1437 = vadd.f32 0.0, %v1436
      %v1438 = vpop.f32.mrb[0].mxu0
      %1439 = vdwg.mxu0
      %v1440 = vadd.f32 %v1283, %v1366
      %v1441 = vadd.f32 %v1284, %v1368
      %v1442 = vadd.f32 %v1285, %v1437
      %1443 = vrot.lane.b32.xlu0 %v197, 109
      %v1444 = vpop.permute.xlu0 %1443
      %1445 = vrot.lane.b32.xlu0 %v198, 109
      %v1446 = vpop.permute.xlu0 %1445
      %1447 = vrot.lane.b32.xlu0 %v199, 109
      %v1448 = vpop.permute.xlu0 %1447
      %vm1449 = vcmp.lt.s32.totalorder %v207, 109
      %v1450 = vsel %vm1449, %v1446, %v1448
      %v1451 = vsel %vm1449, %v1444, %v1446
      %v1452 = vsel %vm1449, %v1448, %v1444
      %v1454 = vsel %vm222, %v195, 0
      %1456 = vmatprep.subr.mxu0 %v1450
      %1457 = vmatpush1.msra.mxu0 %v1451
      %1458 = vmatprep.subr.mxu0 0.0
      %1459 = vmatpush1.msra.mxu0 0.0
      %1460 = vmatprep.subr.mxu0 0.0
      %1461 = vmatpush1.msra.mxu0 0.0
      %1462 = vmatprep.subr.mxu0 0.0
      %1463 = vmatpush1.msra.mxu0 0.0
      %1464 = vmatprep.subr.mxu0 0.0
      %1465 = vmatpush1.msra.mxu0 0.0
      %1466 = vmatprep.subr.mxu0 0.0
      %1467 = vmatpush1.msra.mxu0 0.0
      %1468 = vmatprep.subr.mxu0 0.0
      %1469 = vmatpush1.msra.mxu0 0.0
      %1470 = vmatprep.subr.mxu0 0.0
      %1471 = vmatpush1.msra.mxu0 0.0
      %1472 = vmatprep.subr.mxu0 0.0
      %1473 = vmatpush1.msra.mxu0 0.0
      %1474 = vmatprep.subr.mxu0 0.0
      %1475 = vmatpush1.msra.mxu0 0.0
      %1476 = vmatprep.subr.mxu0 0.0
      %1477 = vmatpush1.msra.mxu0 0.0
      %1478 = vmatprep.subr.mxu0 0.0
      %1479 = vmatpush1.msra.mxu0 0.0
      %1480 = vmatprep.subr.mxu0 0.0
      %1481 = vmatpush1.msra.mxu0 0.0
      %1482 = vmatprep.subr.mxu0 0.0
      %1483 = vmatpush1.msra.mxu0 0.0
      %1484 = vmatprep.subr.mxu0 0.0
      %1485 = vmatpush1.msra.mxu0 0.0
      %1486 = vmatprep.subr.mxu0 0.0
      %1487 = vmatpush1.msra.mxu0 0.0
      %1488 = vmatprep.subr.mxu0 0.0
      %1489 = vmatpush1.msra.mxu0 0.0
      %1490 = vmatprep.subr.mxu0 0.0
      %1491 = vmatpush1.msra.mxu0 0.0
      %1492 = vmatprep.subr.mxu0 0.0
      %1493 = vmatpush1.msra.mxu0 0.0
      %1494 = vmatprep.subr.mxu0 0.0
      %1495 = vmatpush1.msra.mxu0 0.0
      %1496 = vmatprep.subr.mxu0 0.0
      %1497 = vmatpush1.msra.mxu0 0.0
      %1498 = vmatprep.subr.mxu0 0.0
      %1499 = vmatpush1.msra.mxu0 0.0
      %1500 = vmatprep.subr.mxu0 0.0
      %1501 = vmatpush1.msra.mxu0 0.0
      %1502 = vmatprep.subr.mxu0 0.0
      %1503 = vmatpush1.msra.mxu0 0.0
      %1504 = vmatprep.subr.mxu0 0.0
      %1505 = vmatpush1.msra.mxu0 0.0
      %1506 = vmatprep.subr.mxu0 0.0
      %1507 = vmatpush1.msra.mxu0 0.0
      %1508 = vmatprep.subr.mxu0 0.0
      %1509 = vmatpush1.msra.mxu0 0.0
      %1510 = vmatprep.subr.mxu0 0.0
      %1511 = vmatpush1.msra.mxu0 0.0
      %1512 = vmatprep.subr.mxu0 0.0
      %1513 = vmatpush1.msra.mxu0 0.0
      %1514 = vmatprep.subr.mxu0 0.0
      %1515 = vmatpush1.msra.mxu0 0.0
      %1516 = vmatprep.subr.mxu0 0.0
      %1517 = vmatpush1.msra.mxu0 0.0
      %1518 = vmatprep.subr.mxu0 0.0
      %1519 = vmatpush1.msra.mxu0 0.0
      %1520 = vmatprep.mubr.f32.mxu0 0.0
      %1521 = vmatmul.mubr.f32.gmra.mrb[0].mxu0 %v1454
      %v1522 = vpop.f32.mrb[0].mxu0
      %v1523 = vadd.f32 0.0, %v1522
      %v1524 = vpop.f32.mrb[0].mxu0
      %v1525 = vadd.f32 0.0, %v1524
      %1526 = vdwg.mxu0
      %1527 = vmatprep.subr.mxu0 0.0
      %1528 = vmatpush1.msra.mxu0 %v1452
      %1529 = vmatprep.subr.mxu0 0.0
      %1530 = vmatpush1.msra.mxu0 0.0
      %1531 = vmatprep.subr.mxu0 0.0
      %1532 = vmatpush1.msra.mxu0 0.0
      %1533 = vmatprep.subr.mxu0 0.0
      %1534 = vmatpush1.msra.mxu0 0.0
      %1535 = vmatprep.subr.mxu0 0.0
      %1536 = vmatpush1.msra.mxu0 0.0
      %1537 = vmatprep.subr.mxu0 0.0
      %1538 = vmatpush1.msra.mxu0 0.0
      %1539 = vmatprep.subr.mxu0 0.0
      %1540 = vmatpush1.msra.mxu0 0.0
      %1541 = vmatprep.subr.mxu0 0.0
      %1542 = vmatpush1.msra.mxu0 0.0
      %1543 = vmatprep.subr.mxu0 0.0
      %1544 = vmatpush1.msra.mxu0 0.0
      %1545 = vmatprep.subr.mxu0 0.0
      %1546 = vmatpush1.msra.mxu0 0.0
      %1547 = vmatprep.subr.mxu0 0.0
      %1548 = vmatpush1.msra.mxu0 0.0
      %1549 = vmatprep.subr.mxu0 0.0
      %1550 = vmatpush1.msra.mxu0 0.0
      %1551 = vmatprep.subr.mxu0 0.0
      %1552 = vmatpush1.msra.mxu0 0.0
      %1553 = vmatprep.subr.mxu0 0.0
      %1554 = vmatpush1.msra.mxu0 0.0
      %1555 = vmatprep.subr.mxu0 0.0
      %1556 = vmatpush1.msra.mxu0 0.0
      %1557 = vmatprep.subr.mxu0 0.0
      %1558 = vmatpush1.msra.mxu0 0.0
      %1559 = vmatprep.subr.mxu0 0.0
      %1560 = vmatpush1.msra.mxu0 0.0
      %1561 = vmatprep.subr.mxu0 0.0
      %1562 = vmatpush1.msra.mxu0 0.0
      %1563 = vmatprep.subr.mxu0 0.0
      %1564 = vmatpush1.msra.mxu0 0.0
      %1565 = vmatprep.subr.mxu0 0.0
      %1566 = vmatpush1.msra.mxu0 0.0
      %1567 = vmatprep.subr.mxu0 0.0
      %1568 = vmatpush1.msra.mxu0 0.0
      %1569 = vmatprep.subr.mxu0 0.0
      %1570 = vmatpush1.msra.mxu0 0.0
      %1571 = vmatprep.subr.mxu0 0.0
      %1572 = vmatpush1.msra.mxu0 0.0
      %1573 = vmatprep.subr.mxu0 0.0
      %1574 = vmatpush1.msra.mxu0 0.0
      %1575 = vmatprep.subr.mxu0 0.0
      %1576 = vmatpush1.msra.mxu0 0.0
      %1577 = vmatprep.subr.mxu0 0.0
      %1578 = vmatpush1.msra.mxu0 0.0
      %1579 = vmatprep.subr.mxu0 0.0
      %1580 = vmatpush1.msra.mxu0 0.0
      %1581 = vmatprep.subr.mxu0 0.0
      %1582 = vmatpush1.msra.mxu0 0.0
      %1583 = vmatprep.subr.mxu0 0.0
      %1584 = vmatpush1.msra.mxu0 0.0
      %1585 = vmatprep.subr.mxu0 0.0
      %1586 = vmatpush1.msra.mxu0 0.0
      %1587 = vmatprep.subr.mxu0 0.0
      %1588 = vmatpush1.msra.mxu0 0.0
      %1589 = vmatprep.subr.mxu0 0.0
      %1590 = vmatpush1.msra.mxu0 0.0
      %1591 = vmatprep.mubr.f32.mxu0 0.0
      %1592 = vmatmul.mubr.f32.gmra.mrb[0].mxu0 %v1454
      %v1593 = vpop.f32.mrb[0].mxu0
      %v1594 = vadd.f32 0.0, %v1593
      %v1595 = vpop.f32.mrb[0].mxu0
      %1596 = vdwg.mxu0
      %v1597 = vadd.f32 %v1440, %v1523
      %v1598 = vadd.f32 %v1441, %v1525
      %v1599 = vadd.f32 %v1442, %v1594
      %1601 = vset.pattern.permute.xlu0 0
      %1602 = vperm.xlu0 %1601, %v196
      %v1603 = vpop.permute.xlu0 %1602
      %v1605 = vadd.f32 %v1597, %v1603
      %v1606 = vadd.f32 %v1598, %v1603
      %v1607 = vadd.f32 %v1599, %v1603
      %1608 = vst [vmem:[%s177] sm:$0xff] %v1605
      %1609 = vst [vmem:[%s177 + $0x8] sm:$0xff] %v1606
      %1610 = vst [vmem:[%s177 + $0x10] sm:$0xff] %v1607
      %s1611 = scalar_lea.vmem %s170, 24
      %v1612 = vld [vmem:[%s1611] sm:$0xff]
      %v1613 = vld [vmem:[%s1611 + $0x8] sm:$0xff]
      %v1614 = vld [vmem:[%s1611 + $0x10] sm:$0xff]
      %1615 = vrot.lane.b32.xlu0 %v1612, 19
      %v1616 = vpop.permute.xlu0 %1615
      %1617 = vrot.lane.b32.xlu0 %v1613, 19
      %v1618 = vpop.permute.xlu0 %1617
      %1619 = vrot.lane.b32.xlu0 %v1614, 19
      %v1620 = vpop.permute.xlu0 %1619
      %v1621 = vsel %vm208, %v1618, %v1620
      %v1622 = vsel %vm208, %v1616, %v1618
      %v1623 = vsel %vm208, %v1620, %v1616
      %1624 = vrot.lane.b32.xlu0 %v1612, 18
      %v1625 = vpop.permute.xlu0 %1624
      %1626 = vrot.lane.b32.xlu0 %v1613, 18
      %v1627 = vpop.permute.xlu0 %1626
      %1628 = vrot.lane.b32.xlu0 %v1614, 18
      %v1629 = vpop.permute.xlu0 %1628
      %v1630 = vsel %vm218, %v1627, %v1629
      %v1631 = vsel %vm218, %v1625, %v1627
      %v1632 = vsel %vm218, %v1629, %v1625
      %1633 = vmatprep.subr.mxu0 %v1631
      %1634 = vmatpush1.msra.mxu0 %v1632
      %1635 = vmatprep.subr.mxu0 0.0
      %1636 = vmatpush1.msra.mxu0 0.0
      %1637 = vmatprep.subr.mxu0 0.0
      %1638 = vmatpush1.msra.mxu0 0.0
      %1639 = vmatprep.subr.mxu0 0.0
      %1640 = vmatpush1.msra.mxu0 0.0
      %1641 = vmatprep.subr.mxu0 0.0
      %1642 = vmatpush1.msra.mxu0 0.0
      %1643 = vmatprep.subr.mxu0 0.0
      %1644 = vmatpush1.msra.mxu0 0.0
      %1645 = vmatprep.subr.mxu0 0.0
      %1646 = vmatpush1.msra.mxu0 0.0
      %1647 = vmatprep.subr.mxu0 0.0
      %1648 = vmatpush1.msra.mxu0 0.0
      %1649 = vmatprep.subr.mxu0 0.0
      %1650 = vmatpush1.msra.mxu0 0.0
      %1651 = vmatprep.subr.mxu0 0.0
      %1652 = vmatpush1.msra.mxu0 0.0
      %1653 = vmatprep.subr.mxu0 0.0
      %1654 = vmatpush1.msra.mxu0 0.0
      %1655 = vmatprep.subr.mxu0 0.0
      %1656 = vmatpush1.msra.mxu0 0.0
      %1657 = vmatprep.subr.mxu0 0.0
      %1658 = vmatpush1.msra.mxu0 0.0
      %1659 = vmatprep.subr.mxu0 0.0
      %1660 = vmatpush1.msra.mxu0 0.0
      %1661 = vmatprep.subr.mxu0 0.0
      %1662 = vmatpush1.msra.mxu0 0.0
      %1663 = vmatprep.subr.mxu0 0.0
      %1664 = vmatpush1.msra.mxu0 0.0
      %1665 = vmatprep.subr.mxu0 0.0
      %1666 = vmatpush1.msra.mxu0 0.0
      %1667 = vmatprep.subr.mxu0 0.0
      %1668 = vmatpush1.msra.mxu0 0.0
      %1669 = vmatprep.subr.mxu0 0.0
      %1670 = vmatpush1.msra.mxu0 0.0
      %1671 = vmatprep.subr.mxu0 0.0
      %1672 = vmatpush1.msra.mxu0 0.0
      %1673 = vmatprep.subr.mxu0 0.0
      %1674 = vmatpush1.msra.mxu0 0.0
      %1675 = vmatprep.subr.mxu0 0.0
      %1676 = vmatpush1.msra.mxu0 0.0
      %1677 = vmatprep.subr.mxu0 0.0
      %1678 = vmatpush1.msra.mxu0 0.0
      %1679 = vmatprep.subr.mxu0 0.0
      %1680 = vmatpush1.msra.mxu0 0.0
      %1681 = vmatprep.subr.mxu0 0.0
      %1682 = vmatpush1.msra.mxu0 0.0
      %1683 = vmatprep.subr.mxu0 0.0
      %1684 = vmatpush1.msra.mxu0 0.0
      %1685 = vmatprep.subr.mxu0 0.0
      %1686 = vmatpush1.msra.mxu0 0.0
      %1687 = vmatprep.subr.mxu0 0.0
      %1688 = vmatpush1.msra.mxu0 0.0
      %1689 = vmatprep.subr.mxu0 0.0
      %1690 = vmatpush1.msra.mxu0 0.0
      %1691 = vmatprep.subr.mxu0 0.0
      %1692 = vmatpush1.msra.mxu0 0.0
      %1693 = vmatprep.subr.mxu0 0.0
      %1694 = vmatpush1.msra.mxu0 0.0
      %1695 = vmatprep.subr.mxu0 0.0
      %1696 = vmatpush1.msra.mxu0 0.0
      %1697 = vmatprep.mubr.f32.mxu0 0.0
      %1698 = vmatmul.mubr.f32.gmra.mrb[0].mxu0 %v224
      %v1699 = vpop.f32.mrb[0].mxu0
      %v1700 = vadd.f32 0.0, %v1699
      %v1701 = vpop.f32.mrb[0].mxu0
      %v1702 = vadd.f32 0.0, %v1701
      %1703 = vdwg.mxu0
      %1704 = vmatprep.subr.mxu0 0.0
      %1705 = vmatpush1.msra.mxu0 %v1630
      %1706 = vmatprep.subr.mxu0 0.0
      %1707 = vmatpush1.msra.mxu0 0.0
      %1708 = vmatprep.subr.mxu0 0.0
      %1709 = vmatpush1.msra.mxu0 0.0
      %1710 = vmatprep.subr.mxu0 0.0
      %1711 = vmatpush1.msra.mxu0 0.0
      %1712 = vmatprep.subr.mxu0 0.0
      %1713 = vmatpush1.msra.mxu0 0.0
      %1714 = vmatprep.subr.mxu0 0.0
      %1715 = vmatpush1.msra.mxu0 0.0
      %1716 = vmatprep.subr.mxu0 0.0
      %1717 = vmatpush1.msra.mxu0 0.0
      %1718 = vmatprep.subr.mxu0 0.0
      %1719 = vmatpush1.msra.mxu0 0.0
      %1720 = vmatprep.subr.mxu0 0.0
      %1721 = vmatpush1.msra.mxu0 0.0
      %1722 = vmatprep.subr.mxu0 0.0
      %1723 = vmatpush1.msra.mxu0 0.0
      %1724 = vmatprep.subr.mxu0 0.0
      %1725 = vmatpush1.msra.mxu0 0.0
      %1726 = vmatprep.subr.mxu0 0.0
      %1727 = vmatpush1.msra.mxu0 0.0
      %1728 = vmatprep.subr.mxu0 0.0
      %1729 = vmatpush1.msra.mxu0 0.0
      %1730 = vmatprep.subr.mxu0 0.0
      %1731 = vmatpush1.msra.mxu0 0.0
      %1732 = vmatprep.subr.mxu0 0.0
      %1733 = vmatpush1.msra.mxu0 0.0
      %1734 = vmatprep.subr.mxu0 0.0
      %1735 = vmatpush1.msra.mxu0 0.0
      %1736 = vmatprep.subr.mxu0 0.0
      %1737 = vmatpush1.msra.mxu0 0.0
      %1738 = vmatprep.subr.mxu0 0.0
      %1739 = vmatpush1.msra.mxu0 0.0
      %1740 = vmatprep.subr.mxu0 0.0
      %1741 = vmatpush1.msra.mxu0 0.0
      %1742 = vmatprep.subr.mxu0 0.0
      %1743 = vmatpush1.msra.mxu0 0.0
      %1744 = vmatprep.subr.mxu0 0.0
      %1745 = vmatpush1.msra.mxu0 0.0
      %1746 = vmatprep.subr.mxu0 0.0
      %1747 = vmatpush1.msra.mxu0 0.0
      %1748 = vmatprep.subr.mxu0 0.0
      %1749 = vmatpush1.msra.mxu0 0.0
      %1750 = vmatprep.subr.mxu0 0.0
      %1751 = vmatpush1.msra.mxu0 0.0
      %1752 = vmatprep.subr.mxu0 0.0
      %1753 = vmatpush1.msra.mxu0 0.0
      %1754 = vmatprep.subr.mxu0 0.0
      %1755 = vmatpush1.msra.mxu0 0.0
      %1756 = vmatprep.subr.mxu0 0.0
      %1757 = vmatpush1.msra.mxu0 0.0
      %1758 = vmatprep.subr.mxu0 0.0
      %1759 = vmatpush1.msra.mxu0 0.0
      %1760 = vmatprep.subr.mxu0 0.0
      %1761 = vmatpush1.msra.mxu0 0.0
      %1762 = vmatprep.subr.mxu0 0.0
      %1763 = vmatpush1.msra.mxu0 0.0
      %1764 = vmatprep.subr.mxu0 0.0
      %1765 = vmatpush1.msra.mxu0 0.0
      %1766 = vmatprep.subr.mxu0 0.0
      %1767 = vmatpush1.msra.mxu0 0.0
      %1768 = vmatprep.mubr.f32.mxu0 0.0
      %1769 = vmatmul.mubr.f32.gmra.mrb[0].mxu0 %v224
      %v1770 = vpop.f32.mrb[0].mxu0
      %v1771 = vadd.f32 0.0, %v1770
      %v1772 = vpop.f32.mrb[0].mxu0
      %1773 = vdwg.mxu0
      %1774 = vmatprep.subr.mxu0 %v1622
      %1775 = vmatpush1.msra.mxu0 %v1623
      %1776 = vmatprep.subr.mxu0 0.0
      %1777 = vmatpush1.msra.mxu0 0.0
      %1778 = vmatprep.subr.mxu0 0.0
      %1779 = vmatpush1.msra.mxu0 0.0
      %1780 = vmatprep.subr.mxu0 0.0
      %1781 = vmatpush1.msra.mxu0 0.0
      %1782 = vmatprep.subr.mxu0 0.0
      %1783 = vmatpush1.msra.mxu0 0.0
      %1784 = vmatprep.subr.mxu0 0.0
      %1785 = vmatpush1.msra.mxu0 0.0
      %1786 = vmatprep.subr.mxu0 0.0
      %1787 = vmatpush1.msra.mxu0 0.0
      %1788 = vmatprep.subr.mxu0 0.0
      %1789 = vmatpush1.msra.mxu0 0.0
      %1790 = vmatprep.subr.mxu0 0.0
      %1791 = vmatpush1.msra.mxu0 0.0
      %1792 = vmatprep.subr.mxu0 0.0
      %1793 = vmatpush1.msra.mxu0 0.0
      %1794 = vmatprep.subr.mxu0 0.0
      %1795 = vmatpush1.msra.mxu0 0.0
      %1796 = vmatprep.subr.mxu0 0.0
      %1797 = vmatpush1.msra.mxu0 0.0
      %1798 = vmatprep.subr.mxu0 0.0
      %1799 = vmatpush1.msra.mxu0 0.0
      %1800 = vmatprep.subr.mxu0 0.0
      %1801 = vmatpush1.msra.mxu0 0.0
      %1802 = vmatprep.subr.mxu0 0.0
      %1803 = vmatpush1.msra.mxu0 0.0
      %1804 = vmatprep.subr.mxu0 0.0
      %1805 = vmatpush1.msra.mxu0 0.0
      %1806 = vmatprep.subr.mxu0 0.0
      %1807 = vmatpush1.msra.mxu0 0.0
      %1808 = vmatprep.subr.mxu0 0.0
      %1809 = vmatpush1.msra.mxu0 0.0
      %1810 = vmatprep.subr.mxu0 0.0
      %1811 = vmatpush1.msra.mxu0 0.0
      %1812 = vmatprep.subr.mxu0 0.0
      %1813 = vmatpush1.msra.mxu0 0.0
      %1814 = vmatprep.subr.mxu0 0.0
      %1815 = vmatpush1.msra.mxu0 0.0
      %1816 = vmatprep.subr.mxu0 0.0
      %1817 = vmatpush1.msra.mxu0 0.0
      %1818 = vmatprep.subr.mxu0 0.0
      %1819 = vmatpush1.msra.mxu0 0.0
      %1820 = vmatprep.subr.mxu0 0.0
      %1821 = vmatpush1.msra.mxu0 0.0
      %1822 = vmatprep.subr.mxu0 0.0
      %1823 = vmatpush1.msra.mxu0 0.0
      %1824 = vmatprep.subr.mxu0 0.0
      %1825 = vmatpush1.msra.mxu0 0.0
      %1826 = vmatprep.subr.mxu0 0.0
      %1827 = vmatpush1.msra.mxu0 0.0
      %1828 = vmatprep.subr.mxu0 0.0
      %1829 = vmatpush1.msra.mxu0 0.0
      %1830 = vmatprep.subr.mxu0 0.0
      %1831 = vmatpush1.msra.mxu0 0.0
      %1832 = vmatprep.subr.mxu0 0.0
      %1833 = vmatpush1.msra.mxu0 0.0
      %1834 = vmatprep.subr.mxu0 0.0
      %1835 = vmatpush1.msra.mxu0 0.0
      %1836 = vmatprep.subr.mxu0 0.0
      %1837 = vmatpush1.msra.mxu0 0.0
      %1838 = vmatprep.mubr.f32.mxu0 0.0
      %1839 = vmatmul.mubr.f32.gmra.mrb[0].mxu0 %v368
      %v1840 = vpop.f32.mrb[0].mxu0
      %v1841 = vadd.f32 %v1700, %v1840
      %v1842 = vpop.f32.mrb[0].mxu0
      %v1843 = vadd.f32 %v1702, %v1842
      %1844 = vdwg.mxu0
      %1845 = vmatprep.subr.mxu0 0.0
      %1846 = vmatpush1.msra.mxu0 %v1621
      %1847 = vmatprep.subr.mxu0 0.0
      %1848 = vmatpush1.msra.mxu0 0.0
      %1849 = vmatprep.subr.mxu0 0.0
      %1850 = vmatpush1.msra.mxu0 0.0
      %1851 = vmatprep.subr.mxu0 0.0
      %1852 = vmatpush1.msra.mxu0 0.0
      %1853 = vmatprep.subr.mxu0 0.0
      %1854 = vmatpush1.msra.mxu0 0.0
      %1855 = vmatprep.subr.mxu0 0.0
      %1856 = vmatpush1.msra.mxu0 0.0
      %1857 = vmatprep.subr.mxu0 0.0
      %1858 = vmatpush1.msra.mxu0 0.0
      %1859 = vmatprep.subr.mxu0 0.0
      %1860 = vmatpush1.msra.mxu0 0.0
      %1861 = vmatprep.subr.mxu0 0.0
      %1862 = vmatpush1.msra.mxu0 0.0
      %1863 = vmatprep.subr.mxu0 0.0
      %1864 = vmatpush1.msra.mxu0 0.0
      %1865 = vmatprep.subr.mxu0 0.0
      %1866 = vmatpush1.msra.mxu0 0.0
      %1867 = vmatprep.subr.mxu0 0.0
      %1868 = vmatpush1.msra.mxu0 0.0
      %1869 = vmatprep.subr.mxu0 0.0
      %1870 = vmatpush1.msra.mxu0 0.0
      %1871 = vmatprep.subr.mxu0 0.0
      %1872 = vmatpush1.msra.mxu0 0.0
      %1873 = vmatprep.subr.mxu0 0.0
      %1874 = vmatpush1.msra.mxu0 0.0
      %1875 = vmatprep.subr.mxu0 0.0
      %1876 = vmatpush1.msra.mxu0 0.0
      %1877 = vmatprep.subr.mxu0 0.0
      %1878 = vmatpush1.msra.mxu0 0.0
      %1879 = vmatprep.subr.mxu0 0.0
      %1880 = vmatpush1.msra.mxu0 0.0
      %1881 = vmatprep.subr.mxu0 0.0
      %1882 = vmatpush1.msra.mxu0 0.0
      %1883 = vmatprep.subr.mxu0 0.0
      %1884 = vmatpush1.msra.mxu0 0.0
      %1885 = vmatprep.subr.mxu0 0.0
      %1886 = vmatpush1.msra.mxu0 0.0
      %1887 = vmatprep.subr.mxu0 0.0
      %1888 = vmatpush1.msra.mxu0 0.0
      %1889 = vmatprep.subr.mxu0 0.0
      %1890 = vmatpush1.msra.mxu0 0.0
      %1891 = vmatprep.subr.mxu0 0.0
      %1892 = vmatpush1.msra.mxu0 0.0
      %1893 = vmatprep.subr.mxu0 0.0
      %1894 = vmatpush1.msra.mxu0 0.0
      %1895 = vmatprep.subr.mxu0 0.0
      %1896 = vmatpush1.msra.mxu0 0.0
      %1897 = vmatprep.subr.mxu0 0.0
      %1898 = vmatpush1.msra.mxu0 0.0
      %1899 = vmatprep.subr.mxu0 0.0
      %1900 = vmatpush1.msra.mxu0 0.0
      %1901 = vmatprep.subr.mxu0 0.0
      %1902 = vmatpush1.msra.mxu0 0.0
      %1903 = vmatprep.subr.mxu0 0.0
      %1904 = vmatpush1.msra.mxu0 0.0
      %1905 = vmatprep.subr.mxu0 0.0
      %1906 = vmatpush1.msra.mxu0 0.0
      %1907 = vmatprep.subr.mxu0 0.0
      %1908 = vmatpush1.msra.mxu0 0.0
      %1909 = vmatprep.mubr.f32.mxu0 0.0
      %1910 = vmatmul.mubr.f32.gmra.mrb[0].mxu0 %v368
      %v1911 = vpop.f32.mrb[0].mxu0
      %v1912 = vadd.f32 %v1771, %v1911
      %v1913 = vpop.f32.mrb[0].mxu0
      %1914 = vdwg.mxu0
      %1915 = vrot.lane.b32.xlu0 %v1612, 17
      %v1916 = vpop.permute.xlu0 %1915
      %1917 = vrot.lane.b32.xlu0 %v1613, 17
      %v1918 = vpop.permute.xlu0 %1917
      %1919 = vrot.lane.b32.xlu0 %v1614, 17
      %v1920 = vpop.permute.xlu0 %1919
      %v1921 = vsel %vm517, %v1918, %v1920
      %v1922 = vsel %vm517, %v1916, %v1918
      %v1923 = vsel %vm517, %v1920, %v1916
      %1924 = vmatprep.subr.mxu0 %v1922
      %1925 = vmatpush1.msra.mxu0 %v1923
      %1926 = vmatprep.subr.mxu0 0.0
      %1927 = vmatpush1.msra.mxu0 0.0
      %1928 = vmatprep.subr.mxu0 0.0
      %1929 = vmatpush1.msra.mxu0 0.0
      %1930 = vmatprep.subr.mxu0 0.0
      %1931 = vmatpush1.msra.mxu0 0.0
      %1932 = vmatprep.subr.mxu0 0.0
      %1933 = vmatpush1.msra.mxu0 0.0
      %1934 = vmatprep.subr.mxu0 0.0
      %1935 = vmatpush1.msra.mxu0 0.0
      %1936 = vmatprep.subr.mxu0 0.0
      %1937 = vmatpush1.msra.mxu0 0.0
      %1938 = vmatprep.subr.mxu0 0.0
      %1939 = vmatpush1.msra.mxu0 0.0
      %1940 = vmatprep.subr.mxu0 0.0
      %1941 = vmatpush1.msra.mxu0 0.0
      %1942 = vmatprep.subr.mxu0 0.0
      %1943 = vmatpush1.msra.mxu0 0.0
      %1944 = vmatprep.subr.mxu0 0.0
      %1945 = vmatpush1.msra.mxu0 0.0
      %1946 = vmatprep.subr.mxu0 0.0
      %1947 = vmatpush1.msra.mxu0 0.0
      %1948 = vmatprep.subr.mxu0 0.0
      %1949 = vmatpush1.msra.mxu0 0.0
      %1950 = vmatprep.subr.mxu0 0.0
      %1951 = vmatpush1.msra.mxu0 0.0
      %1952 = vmatprep.subr.mxu0 0.0
      %1953 = vmatpush1.msra.mxu0 0.0
      %1954 = vmatprep.subr.mxu0 0.0
      %1955 = vmatpush1.msra.mxu0 0.0
      %1956 = vmatprep.subr.mxu0 0.0
      %1957 = vmatpush1.msra.mxu0 0.0
      %1958 = vmatprep.subr.mxu0 0.0
      %1959 = vmatpush1.msra.mxu0 0.0
      %1960 = vmatprep.subr.mxu0 0.0
      %1961 = vmatpush1.msra.mxu0 0.0
      %1962 = vmatprep.subr.mxu0 0.0
      %1963 = vmatpush1.msra.mxu0 0.0
      %1964 = vmatprep.subr.mxu0 0.0
      %1965 = vmatpush1.msra.mxu0 0.0
      %1966 = vmatprep.subr.mxu0 0.0
      %1967 = vmatpush1.msra.mxu0 0.0
      %1968 = vmatprep.subr.mxu0 0.0
      %1969 = vmatpush1.msra.mxu0 0.0
      %1970 = vmatprep.subr.mxu0 0.0
      %1971 = vmatpush1.msra.mxu0 0.0
      %1972 = vmatprep.subr.mxu0 0.0
      %1973 = vmatpush1.msra.mxu0 0.0
      %1974 = vmatprep.subr.mxu0 0.0
      %1975 = vmatpush1.msra.mxu0 0.0
      %1976 = vmatprep.subr.mxu0 0.0
      %1977 = vmatpush1.msra.mxu0 0.0
      %1978 = vmatprep.subr.mxu0 0.0
      %1979 = vmatpush1.msra.mxu0 0.0
      %1980 = vmatprep.subr.mxu0 0.0
      %1981 = vmatpush1.msra.mxu0 0.0
      %1982 = vmatprep.subr.mxu0 0.0
      %1983 = vmatpush1.msra.mxu0 0.0
      %1984 = vmatprep.subr.mxu0 0.0
      %1985 = vmatpush1.msra.mxu0 0.0
      %1986 = vmatprep.subr.mxu0 0.0
      %1987 = vmatpush1.msra.mxu0 0.0
      %1988 = vmatprep.mubr.f32.mxu0 0.0
      %1989 = vmatmul.mubr.f32.gmra.mrb[0].mxu0 %v522
      %v1990 = vpop.f32.mrb[0].mxu0
      %v1991 = vadd.f32 0.0, %v1990
      %v1992 = vpop.f32.mrb[0].mxu0
      %v1993 = vadd.f32 0.0, %v1992
      %1994 = vdwg.mxu0
      %1995 = vmatprep.subr.mxu0 0.0
      %1996 = vmatpush1.msra.mxu0 %v1921
      %1997 = vmatprep.subr.mxu0 0.0
      %1998 = vmatpush1.msra.mxu0 0.0
      %1999 = vmatprep.subr.mxu0 0.0
      %2000 = vmatpush1.msra.mxu0 0.0
      %2001 = vmatprep.subr.mxu0 0.0
      %2002 = vmatpush1.msra.mxu0 0.0
      %2003 = vmatprep.subr.mxu0 0.0
      %2004 = vmatpush1.msra.mxu0 0.0
      %2005 = vmatprep.subr.mxu0 0.0
      %2006 = vmatpush1.msra.mxu0 0.0
      %2007 = vmatprep.subr.mxu0 0.0
      %2008 = vmatpush1.msra.mxu0 0.0
      %2009 = vmatprep.subr.mxu0 0.0
      %2010 = vmatpush1.msra.mxu0 0.0
      %2011 = vmatprep.subr.mxu0 0.0
      %2012 = vmatpush1.msra.mxu0 0.0
      %2013 = vmatprep.subr.mxu0 0.0
      %2014 = vmatpush1.msra.mxu0 0.0
      %2015 = vmatprep.subr.mxu0 0.0
      %2016 = vmatpush1.msra.mxu0 0.0
      %2017 = vmatprep.subr.mxu0 0.0
      %2018 = vmatpush1.msra.mxu0 0.0
      %2019 = vmatprep.subr.mxu0 0.0
      %2020 = vmatpush1.msra.mxu0 0.0
      %2021 = vmatprep.subr.mxu0 0.0
      %2022 = vmatpush1.msra.mxu0 0.0
      %2023 = vmatprep.subr.mxu0 0.0
      %2024 = vmatpush1.msra.mxu0 0.0
      %2025 = vmatprep.subr.mxu0 0.0
      %2026 = vmatpush1.msra.mxu0 0.0
      %2027 = vmatprep.subr.mxu0 0.0
      %2028 = vmatpush1.msra.mxu0 0.0
      %2029 = vmatprep.subr.mxu0 0.0
      %2030 = vmatpush1.msra.mxu0 0.0
      %2031 = vmatprep.subr.mxu0 0.0
      %2032 = vmatpush1.msra.mxu0 0.0
      %2033 = vmatprep.subr.mxu0 0.0
      %2034 = vmatpush1.msra.mxu0 0.0
      %2035 = vmatprep.subr.mxu0 0.0
      %2036 = vmatpush1.msra.mxu0 0.0
      %2037 = vmatprep.subr.mxu0 0.0
      %2038 = vmatpush1.msra.mxu0 0.0
      %2039 = vmatprep.subr.mxu0 0.0
      %2040 = vmatpush1.msra.mxu0 0.0
      %2041 = vmatprep.subr.mxu0 0.0
      %2042 = vmatpush1.msra.mxu0 0.0
      %2043 = vmatprep.subr.mxu0 0.0
      %2044 = vmatpush1.msra.mxu0 0.0
      %2045 = vmatprep.subr.mxu0 0.0
      %2046 = vmatpush1.msra.mxu0 0.0
      %2047 = vmatprep.subr.mxu0 0.0
      %2048 = vmatpush1.msra.mxu0 0.0
      %2049 = vmatprep.subr.mxu0 0.0
      %2050 = vmatpush1.msra.mxu0 0.0
      %2051 = vmatprep.subr.mxu0 0.0
      %2052 = vmatpush1.msra.mxu0 0.0
      %2053 = vmatprep.subr.mxu0 0.0
      %2054 = vmatpush1.msra.mxu0 0.0
      %2055 = vmatprep.subr.mxu0 0.0
      %2056 = vmatpush1.msra.mxu0 0.0
      %2057 = vmatprep.subr.mxu0 0.0
      %2058 = vmatpush1.msra.mxu0 0.0
      %2059 = vmatprep.mubr.f32.mxu0 0.0
      %2060 = vmatmul.mubr.f32.gmra.mrb[0].mxu0 %v522
      %v2061 = vpop.f32.mrb[0].mxu0
      %v2062 = vadd.f32 0.0, %v2061
      %v2063 = vpop.f32.mrb[0].mxu0
      %2064 = vdwg.mxu0
      %v2065 = vadd.f32 %v1841, %v1991
      %v2066 = vadd.f32 %v1843, %v1993
      %v2067 = vadd.f32 %v1912, %v2062
      %2068 = vrot.lane.b32.xlu0 %v1612, 1
      %v2069 = vpop.permute.xlu0 %2068
      %2070 = vrot.lane.b32.xlu0 %v1613, 1
      %v2071 = vpop.permute.xlu0 %2070
      %2072 = vrot.lane.b32.xlu0 %v1614, 1
      %v2073 = vpop.permute.xlu0 %2072
      %v2074 = vsel %vm674, %v2071, %v2073
      %v2075 = vsel %vm674, %v2069, %v2071
      %v2076 = vsel %vm674, %v2073, %v2069
      %2077 = vmatprep.subr.mxu0 %v2075
      %2078 = vmatpush1.msra.mxu0 %v2076
      %2079 = vmatprep.subr.mxu0 0.0
      %2080 = vmatpush1.msra.mxu0 0.0
      %2081 = vmatprep.subr.mxu0 0.0
      %2082 = vmatpush1.msra.mxu0 0.0
      %2083 = vmatprep.subr.mxu0 0.0
      %2084 = vmatpush1.msra.mxu0 0.0
      %2085 = vmatprep.subr.mxu0 0.0
      %2086 = vmatpush1.msra.mxu0 0.0
      %2087 = vmatprep.subr.mxu0 0.0
      %2088 = vmatpush1.msra.mxu0 0.0
      %2089 = vmatprep.subr.mxu0 0.0
      %2090 = vmatpush1.msra.mxu0 0.0
      %2091 = vmatprep.subr.mxu0 0.0
      %2092 = vmatpush1.msra.mxu0 0.0
      %2093 = vmatprep.subr.mxu0 0.0
      %2094 = vmatpush1.msra.mxu0 0.0
      %2095 = vmatprep.subr.mxu0 0.0
      %2096 = vmatpush1.msra.mxu0 0.0
      %2097 = vmatprep.subr.mxu0 0.0
      %2098 = vmatpush1.msra.mxu0 0.0
      %2099 = vmatprep.subr.mxu0 0.0
      %2100 = vmatpush1.msra.mxu0 0.0
      %2101 = vmatprep.subr.mxu0 0.0
      %2102 = vmatpush1.msra.mxu0 0.0
      %2103 = vmatprep.subr.mxu0 0.0
      %2104 = vmatpush1.msra.mxu0 0.0
      %2105 = vmatprep.subr.mxu0 0.0
      %2106 = vmatpush1.msra.mxu0 0.0
      %2107 = vmatprep.subr.mxu0 0.0
      %2108 = vmatpush1.msra.mxu0 0.0
      %2109 = vmatprep.subr.mxu0 0.0
      %2110 = vmatpush1.msra.mxu0 0.0
      %2111 = vmatprep.subr.mxu0 0.0
      %2112 = vmatpush1.msra.mxu0 0.0
      %2113 = vmatprep.subr.mxu0 0.0
      %2114 = vmatpush1.msra.mxu0 0.0
      %2115 = vmatprep.subr.mxu0 0.0
      %2116 = vmatpush1.msra.mxu0 0.0
      %2117 = vmatprep.subr.mxu0 0.0
      %2118 = vmatpush1.msra.mxu0 0.0
      %2119 = vmatprep.subr.mxu0 0.0
      %2120 = vmatpush1.msra.mxu0 0.0
      %2121 = vmatprep.subr.mxu0 0.0
      %2122 = vmatpush1.msra.mxu0 0.0
      %2123 = vmatprep.subr.mxu0 0.0
      %2124 = vmatpush1.msra.mxu0 0.0
      %2125 = vmatprep.subr.mxu0 0.0
      %2126 = vmatpush1.msra.mxu0 0.0
      %2127 = vmatprep.subr.mxu0 0.0
      %2128 = vmatpush1.msra.mxu0 0.0
      %2129 = vmatprep.subr.mxu0 0.0
      %2130 = vmatpush1.msra.mxu0 0.0
      %2131 = vmatprep.subr.mxu0 0.0
      %2132 = vmatpush1.msra.mxu0 0.0
      %2133 = vmatprep.subr.mxu0 0.0
      %2134 = vmatpush1.msra.mxu0 0.0
      %2135 = vmatprep.subr.mxu0 0.0
      %2136 = vmatpush1.msra.mxu0 0.0
      %2137 = vmatprep.subr.mxu0 0.0
      %2138 = vmatpush1.msra.mxu0 0.0
      %2139 = vmatprep.subr.mxu0 0.0
      %2140 = vmatpush1.msra.mxu0 0.0
      %2141 = vmatprep.mubr.f32.mxu0 0.0
      %2142 = vmatmul.mubr.f32.gmra.mrb[0].mxu0 %v679
      %v2143 = vpop.f32.mrb[0].mxu0
      %v2144 = vadd.f32 0.0, %v2143
      %v2145 = vpop.f32.mrb[0].mxu0
      %v2146 = vadd.f32 0.0, %v2145
      %2147 = vdwg.mxu0
      %2148 = vmatprep.subr.mxu0 0.0
      %2149 = vmatpush1.msra.mxu0 %v2074
      %2150 = vmatprep.subr.mxu0 0.0
      %2151 = vmatpush1.msra.mxu0 0.0
      %2152 = vmatprep.subr.mxu0 0.0
      %2153 = vmatpush1.msra.mxu0 0.0
      %2154 = vmatprep.subr.mxu0 0.0
      %2155 = vmatpush1.msra.mxu0 0.0
      %2156 = vmatprep.subr.mxu0 0.0
      %2157 = vmatpush1.msra.mxu0 0.0
      %2158 = vmatprep.subr.mxu0 0.0
      %2159 = vmatpush1.msra.mxu0 0.0
      %2160 = vmatprep.subr.mxu0 0.0
      %2161 = vmatpush1.msra.mxu0 0.0
      %2162 = vmatprep.subr.mxu0 0.0
      %2163 = vmatpush1.msra.mxu0 0.0
      %2164 = vmatprep.subr.mxu0 0.0
      %2165 = vmatpush1.msra.mxu0 0.0
      %2166 = vmatprep.subr.mxu0 0.0
      %2167 = vmatpush1.msra.mxu0 0.0
      %2168 = vmatprep.subr.mxu0 0.0
      %2169 = vmatpush1.msra.mxu0 0.0
      %2170 = vmatprep.subr.mxu0 0.0
      %2171 = vmatpush1.msra.mxu0 0.0
      %2172 = vmatprep.subr.mxu0 0.0
      %2173 = vmatpush1.msra.mxu0 0.0
      %2174 = vmatprep.subr.mxu0 0.0
      %2175 = vmatpush1.msra.mxu0 0.0
      %2176 = vmatprep.subr.mxu0 0.0
      %2177 = vmatpush1.msra.mxu0 0.0
      %2178 = vmatprep.subr.mxu0 0.0
      %2179 = vmatpush1.msra.mxu0 0.0
      %2180 = vmatprep.subr.mxu0 0.0
      %2181 = vmatpush1.msra.mxu0 0.0
      %2182 = vmatprep.subr.mxu0 0.0
      %2183 = vmatpush1.msra.mxu0 0.0
      %2184 = vmatprep.subr.mxu0 0.0
      %2185 = vmatpush1.msra.mxu0 0.0
      %2186 = vmatprep.subr.mxu0 0.0
      %2187 = vmatpush1.msra.mxu0 0.0
      %2188 = vmatprep.subr.mxu0 0.0
      %2189 = vmatpush1.msra.mxu0 0.0
      %2190 = vmatprep.subr.mxu0 0.0
      %2191 = vmatpush1.msra.mxu0 0.0
      %2192 = vmatprep.subr.mxu0 0.0
      %2193 = vmatpush1.msra.mxu0 0.0
      %2194 = vmatprep.subr.mxu0 0.0
      %2195 = vmatpush1.msra.mxu0 0.0
      %2196 = vmatprep.subr.mxu0 0.0
      %2197 = vmatpush1.msra.mxu0 0.0
      %2198 = vmatprep.subr.mxu0 0.0
      %2199 = vmatpush1.msra.mxu0 0.0
      %2200 = vmatprep.subr.mxu0 0.0
      %2201 = vmatpush1.msra.mxu0 0.0
      %2202 = vmatprep.subr.mxu0 0.0
      %2203 = vmatpush1.msra.mxu0 0.0
      %2204 = vmatprep.subr.mxu0 0.0
      %2205 = vmatpush1.msra.mxu0 0.0
      %2206 = vmatprep.subr.mxu0 0.0
      %2207 = vmatpush1.msra.mxu0 0.0
      %2208 = vmatprep.subr.mxu0 0.0
      %2209 = vmatpush1.msra.mxu0 0.0
      %2210 = vmatprep.subr.mxu0 0.0
      %2211 = vmatpush1.msra.mxu0 0.0
      %2212 = vmatprep.mubr.f32.mxu0 0.0
      %2213 = vmatmul.mubr.f32.gmra.mrb[0].mxu0 %v679
      %v2214 = vpop.f32.mrb[0].mxu0
      %v2215 = vadd.f32 0.0, %v2214
      %v2216 = vpop.f32.mrb[0].mxu0
      %2217 = vdwg.mxu0
      %v2218 = vadd.f32 %v2065, %v2144
      %v2219 = vadd.f32 %v2066, %v2146
      %v2220 = vadd.f32 %v2067, %v2215
      %2221 = vmatprep.subr.mxu0 %v1613
      %2222 = vmatpush1.msra.mxu0 %v1612
      %2223 = vmatprep.subr.mxu0 0.0
      %2224 = vmatpush1.msra.mxu0 0.0
      %2225 = vmatprep.subr.mxu0 0.0
      %2226 = vmatpush1.msra.mxu0 0.0
      %2227 = vmatprep.subr.mxu0 0.0
      %2228 = vmatpush1.msra.mxu0 0.0
      %2229 = vmatprep.subr.mxu0 0.0
      %2230 = vmatpush1.msra.mxu0 0.0
      %2231 = vmatprep.subr.mxu0 0.0
      %2232 = vmatpush1.msra.mxu0 0.0
      %2233 = vmatprep.subr.mxu0 0.0
      %2234 = vmatpush1.msra.mxu0 0.0
      %2235 = vmatprep.subr.mxu0 0.0
      %2236 = vmatpush1.msra.mxu0 0.0
      %2237 = vmatprep.subr.mxu0 0.0
      %2238 = vmatpush1.msra.mxu0 0.0
      %2239 = vmatprep.subr.mxu0 0.0
      %2240 = vmatpush1.msra.mxu0 0.0
      %2241 = vmatprep.subr.mxu0 0.0
      %2242 = vmatpush1.msra.mxu0 0.0
      %2243 = vmatprep.subr.mxu0 0.0
      %2244 = vmatpush1.msra.mxu0 0.0
      %2245 = vmatprep.subr.mxu0 0.0
      %2246 = vmatpush1.msra.mxu0 0.0
      %2247 = vmatprep.subr.mxu0 0.0
      %2248 = vmatpush1.msra.mxu0 0.0
      %2249 = vmatprep.subr.mxu0 0.0
      %2250 = vmatpush1.msra.mxu0 0.0
      %2251 = vmatprep.subr.mxu0 0.0
      %2252 = vmatpush1.msra.mxu0 0.0
      %2253 = vmatprep.subr.mxu0 0.0
      %2254 = vmatpush1.msra.mxu0 0.0
      %2255 = vmatprep.subr.mxu0 0.0
      %2256 = vmatpush1.msra.mxu0 0.0
      %2257 = vmatprep.subr.mxu0 0.0
      %2258 = vmatpush1.msra.mxu0 0.0
      %2259 = vmatprep.subr.mxu0 0.0
      %2260 = vmatpush1.msra.mxu0 0.0
      %2261 = vmatprep.subr.mxu0 0.0
      %2262 = vmatpush1.msra.mxu0 0.0
      %2263 = vmatprep.subr.mxu0 0.0
      %2264 = vmatpush1.msra.mxu0 0.0
      %2265 = vmatprep.subr.mxu0 0.0
      %2266 = vmatpush1.msra.mxu0 0.0
      %2267 = vmatprep.subr.mxu0 0.0
      %2268 = vmatpush1.msra.mxu0 0.0
      %2269 = vmatprep.subr.mxu0 0.0
      %2270 = vmatpush1.msra.mxu0 0.0
      %2271 = vmatprep.subr.mxu0 0.0
      %2272 = vmatpush1.msra.mxu0 0.0
      %2273 = vmatprep.subr.mxu0 0.0
      %2274 = vmatpush1.msra.mxu0 0.0
      %2275 = vmatprep.subr.mxu0 0.0
      %2276 = vmatpush1.msra.mxu0 0.0
      %2277 = vmatprep.subr.mxu0 0.0
      %2278 = vmatpush1.msra.mxu0 0.0
      %2279 = vmatprep.subr.mxu0 0.0
      %2280 = vmatpush1.msra.mxu0 0.0
      %2281 = vmatprep.subr.mxu0 0.0
      %2282 = vmatpush1.msra.mxu0 0.0
      %2283 = vmatprep.subr.mxu0 0.0
      %2284 = vmatpush1.msra.mxu0 0.0
      %2285 = vmatprep.mubr.f32.mxu0 0.0
      %2286 = vmatmul.mubr.f32.gmra.mrb[0].mxu0 %v826
      %v2287 = vpop.f32.mrb[0].mxu0
      %v2288 = vadd.f32 0.0, %v2287
      %v2289 = vpop.f32.mrb[0].mxu0
      %v2290 = vadd.f32 0.0, %v2289
      %2291 = vdwg.mxu0
      %2292 = vmatprep.subr.mxu0 0.0
      %2293 = vmatpush1.msra.mxu0 %v1614
      %2294 = vmatprep.subr.mxu0 0.0
      %2295 = vmatpush1.msra.mxu0 0.0
      %2296 = vmatprep.subr.mxu0 0.0
      %2297 = vmatpush1.msra.mxu0 0.0
      %2298 = vmatprep.subr.mxu0 0.0
      %2299 = vmatpush1.msra.mxu0 0.0
      %2300 = vmatprep.subr.mxu0 0.0
      %2301 = vmatpush1.msra.mxu0 0.0
      %2302 = vmatprep.subr.mxu0 0.0
      %2303 = vmatpush1.msra.mxu0 0.0
      %2304 = vmatprep.subr.mxu0 0.0
      %2305 = vmatpush1.msra.mxu0 0.0
      %2306 = vmatprep.subr.mxu0 0.0
      %2307 = vmatpush1.msra.mxu0 0.0
      %2308 = vmatprep.subr.mxu0 0.0
      %2309 = vmatpush1.msra.mxu0 0.0
      %2310 = vmatprep.subr.mxu0 0.0
      %2311 = vmatpush1.msra.mxu0 0.0
      %2312 = vmatprep.subr.mxu0 0.0
      %2313 = vmatpush1.msra.mxu0 0.0
      %2314 = vmatprep.subr.mxu0 0.0
      %2315 = vmatpush1.msra.mxu0 0.0
      %2316 = vmatprep.subr.mxu0 0.0
      %2317 = vmatpush1.msra.mxu0 0.0
      %2318 = vmatprep.subr.mxu0 0.0
      %2319 = vmatpush1.msra.mxu0 0.0
      %2320 = vmatprep.subr.mxu0 0.0
      %2321 = vmatpush1.msra.mxu0 0.0
      %2322 = vmatprep.subr.mxu0 0.0
      %2323 = vmatpush1.msra.mxu0 0.0
      %2324 = vmatprep.subr.mxu0 0.0
      %2325 = vmatpush1.msra.mxu0 0.0
      %2326 = vmatprep.subr.mxu0 0.0
      %2327 = vmatpush1.msra.mxu0 0.0
      %2328 = vmatprep.subr.mxu0 0.0
      %2329 = vmatpush1.msra.mxu0 0.0
      %2330 = vmatprep.subr.mxu0 0.0
      %2331 = vmatpush1.msra.mxu0 0.0
      %2332 = vmatprep.subr.mxu0 0.0
      %2333 = vmatpush1.msra.mxu0 0.0
      %2334 = vmatprep.subr.mxu0 0.0
      %2335 = vmatpush1.msra.mxu0 0.0
      %2336 = vmatprep.subr.mxu0 0.0
      %2337 = vmatpush1.msra.mxu0 0.0
      %2338 = vmatprep.subr.mxu0 0.0
      %2339 = vmatpush1.msra.mxu0 0.0
      %2340 = vmatprep.subr.mxu0 0.0
      %2341 = vmatpush1.msra.mxu0 0.0
      %2342 = vmatprep.subr.mxu0 0.0
      %2343 = vmatpush1.msra.mxu0 0.0
      %2344 = vmatprep.subr.mxu0 0.0
      %2345 = vmatpush1.msra.mxu0 0.0
      %2346 = vmatprep.subr.mxu0 0.0
      %2347 = vmatpush1.msra.mxu0 0.0
      %2348 = vmatprep.subr.mxu0 0.0
      %2349 = vmatpush1.msra.mxu0 0.0
      %2350 = vmatprep.subr.mxu0 0.0
      %2351 = vmatpush1.msra.mxu0 0.0
      %2352 = vmatprep.subr.mxu0 0.0
      %2353 = vmatpush1.msra.mxu0 0.0
      %2354 = vmatprep.subr.mxu0 0.0
      %2355 = vmatpush1.msra.mxu0 0.0
      %2356 = vmatprep.mubr.f32.mxu0 0.0
      %2357 = vmatmul.mubr.f32.gmra.mrb[0].mxu0 %v826
      %v2358 = vpop.f32.mrb[0].mxu0
      %v2359 = vadd.f32 0.0, %v2358
      %v2360 = vpop.f32.mrb[0].mxu0
      %2361 = vdwg.mxu0
      %v2362 = vadd.f32 %v2218, %v2288
      %v2363 = vadd.f32 %v2219, %v2290
      %v2364 = vadd.f32 %v2220, %v2359
      %2365 = vrot.lane.b32.xlu0 %v1612, 127
      %v2366 = vpop.permute.xlu0 %2365
      %2367 = vrot.lane.b32.xlu0 %v1613, 127
      %v2368 = vpop.permute.xlu0 %2367
      %2369 = vrot.lane.b32.xlu0 %v1614, 127
      %v2370 = vpop.permute.xlu0 %2369
      %v2371 = vsel %vm978, %v2368, %v2370
      %v2372 = vsel %vm978, %v2366, %v2368
      %v2373 = vsel %vm978, %v2370, %v2366
      %2374 = vmatprep.subr.mxu0 %v2371
      %2375 = vmatpush1.msra.mxu0 %v2372
      %2376 = vmatprep.subr.mxu0 0.0
      %2377 = vmatpush1.msra.mxu0 0.0
      %2378 = vmatprep.subr.mxu0 0.0
      %2379 = vmatpush1.msra.mxu0 0.0
      %2380 = vmatprep.subr.mxu0 0.0
      %2381 = vmatpush1.msra.mxu0 0.0
      %2382 = vmatprep.subr.mxu0 0.0
      %2383 = vmatpush1.msra.mxu0 0.0
      %2384 = vmatprep.subr.mxu0 0.0
      %2385 = vmatpush1.msra.mxu0 0.0
      %2386 = vmatprep.subr.mxu0 0.0
      %2387 = vmatpush1.msra.mxu0 0.0
      %2388 = vmatprep.subr.mxu0 0.0
      %2389 = vmatpush1.msra.mxu0 0.0
      %2390 = vmatprep.subr.mxu0 0.0
      %2391 = vmatpush1.msra.mxu0 0.0
      %2392 = vmatprep.subr.mxu0 0.0
      %2393 = vmatpush1.msra.mxu0 0.0
      %2394 = vmatprep.subr.mxu0 0.0
      %2395 = vmatpush1.msra.mxu0 0.0
      %2396 = vmatprep.subr.mxu0 0.0
      %2397 = vmatpush1.msra.mxu0 0.0
      %2398 = vmatprep.subr.mxu0 0.0
      %2399 = vmatpush1.msra.mxu0 0.0
      %2400 = vmatprep.subr.mxu0 0.0
      %2401 = vmatpush1.msra.mxu0 0.0
      %2402 = vmatprep.subr.mxu0 0.0
      %2403 = vmatpush1.msra.mxu0 0.0
      %2404 = vmatprep.subr.mxu0 0.0
      %2405 = vmatpush1.msra.mxu0 0.0
      %2406 = vmatprep.subr.mxu0 0.0
      %2407 = vmatpush1.msra.mxu0 0.0
      %2408 = vmatprep.subr.mxu0 0.0
      %2409 = vmatpush1.msra.mxu0 0.0
      %2410 = vmatprep.subr.mxu0 0.0
      %2411 = vmatpush1.msra.mxu0 0.0
      %2412 = vmatprep.subr.mxu0 0.0
      %2413 = vmatpush1.msra.mxu0 0.0
      %2414 = vmatprep.subr.mxu0 0.0
      %2415 = vmatpush1.msra.mxu0 0.0
      %2416 = vmatprep.subr.mxu0 0.0
      %2417 = vmatpush1.msra.mxu0 0.0
      %2418 = vmatprep.subr.mxu0 0.0
      %2419 = vmatpush1.msra.mxu0 0.0
      %2420 = vmatprep.subr.mxu0 0.0
      %2421 = vmatpush1.msra.mxu0 0.0
      %2422 = vmatprep.subr.mxu0 0.0
      %2423 = vmatpush1.msra.mxu0 0.0
      %2424 = vmatprep.subr.mxu0 0.0
      %2425 = vmatpush1.msra.mxu0 0.0
      %2426 = vmatprep.subr.mxu0 0.0
      %2427 = vmatpush1.msra.mxu0 0.0
      %2428 = vmatprep.subr.mxu0 0.0
      %2429 = vmatpush1.msra.mxu0 0.0
      %2430 = vmatprep.subr.mxu0 0.0
      %2431 = vmatpush1.msra.mxu0 0.0
      %2432 = vmatprep.subr.mxu0 0.0
      %2433 = vmatpush1.msra.mxu0 0.0
      %2434 = vmatprep.subr.mxu0 0.0
      %2435 = vmatpush1.msra.mxu0 0.0
      %2436 = vmatprep.subr.mxu0 0.0
      %2437 = vmatpush1.msra.mxu0 0.0
      %2438 = vmatprep.mubr.f32.mxu0 0.0
      %2439 = vmatmul.mubr.f32.gmra.mrb[0].mxu0 %v983
      %v2440 = vpop.f32.mrb[0].mxu0
      %v2441 = vadd.f32 0.0, %v2440
      %v2442 = vpop.f32.mrb[0].mxu0
      %v2443 = vadd.f32 0.0, %v2442
      %2444 = vdwg.mxu0
      %2445 = vmatprep.subr.mxu0 0.0
      %2446 = vmatpush1.msra.mxu0 %v2373
      %2447 = vmatprep.subr.mxu0 0.0
      %2448 = vmatpush1.msra.mxu0 0.0
      %2449 = vmatprep.subr.mxu0 0.0
      %2450 = vmatpush1.msra.mxu0 0.0
      %2451 = vmatprep.subr.mxu0 0.0
      %2452 = vmatpush1.msra.mxu0 0.0
      %2453 = vmatprep.subr.mxu0 0.0
      %2454 = vmatpush1.msra.mxu0 0.0
      %2455 = vmatprep.subr.mxu0 0.0
      %2456 = vmatpush1.msra.mxu0 0.0
      %2457 = vmatprep.subr.mxu0 0.0
      %2458 = vmatpush1.msra.mxu0 0.0
      %2459 = vmatprep.subr.mxu0 0.0
      %2460 = vmatpush1.msra.mxu0 0.0
      %2461 = vmatprep.subr.mxu0 0.0
      %2462 = vmatpush1.msra.mxu0 0.0
      %2463 = vmatprep.subr.mxu0 0.0
      %2464 = vmatpush1.msra.mxu0 0.0
      %2465 = vmatprep.subr.mxu0 0.0
      %2466 = vmatpush1.msra.mxu0 0.0
      %2467 = vmatprep.subr.mxu0 0.0
      %2468 = vmatpush1.msra.mxu0 0.0
      %2469 = vmatprep.subr.mxu0 0.0
      %2470 = vmatpush1.msra.mxu0 0.0
      %2471 = vmatprep.subr.mxu0 0.0
      %2472 = vmatpush1.msra.mxu0 0.0
      %2473 = vmatprep.subr.mxu0 0.0
      %2474 = vmatpush1.msra.mxu0 0.0
      %2475 = vmatprep.subr.mxu0 0.0
      %2476 = vmatpush1.msra.mxu0 0.0
      %2477 = vmatprep.subr.mxu0 0.0
      %2478 = vmatpush1.msra.mxu0 0.0
      %2479 = vmatprep.subr.mxu0 0.0
      %2480 = vmatpush1.msra.mxu0 0.0
      %2481 = vmatprep.subr.mxu0 0.0
      %2482 = vmatpush1.msra.mxu0 0.0
      %2483 = vmatprep.subr.mxu0 0.0
      %2484 = vmatpush1.msra.mxu0 0.0
      %2485 = vmatprep.subr.mxu0 0.0
      %2486 = vmatpush1.msra.mxu0 0.0
      %2487 = vmatprep.subr.mxu0 0.0
      %2488 = vmatpush1.msra.mxu0 0.0
      %2489 = vmatprep.subr.mxu0 0.0
      %2490 = vmatpush1.msra.mxu0 0.0
      %2491 = vmatprep.subr.mxu0 0.0
      %2492 = vmatpush1.msra.mxu0 0.0
      %2493 = vmatprep.subr.mxu0 0.0
      %2494 = vmatpush1.msra.mxu0 0.0
      %2495 = vmatprep.subr.mxu0 0.0
      %2496 = vmatpush1.msra.mxu0 0.0
      %2497 = vmatprep.subr.mxu0 0.0
      %2498 = vmatpush1.msra.mxu0 0.0
      %2499 = vmatprep.subr.mxu0 0.0
      %2500 = vmatpush1.msra.mxu0 0.0
      %2501 = vmatprep.subr.mxu0 0.0
      %2502 = vmatpush1.msra.mxu0 0.0
      %2503 = vmatprep.subr.mxu0 0.0
      %2504 = vmatpush1.msra.mxu0 0.0
      %2505 = vmatprep.subr.mxu0 0.0
      %2506 = vmatpush1.msra.mxu0 0.0
      %2507 = vmatprep.subr.mxu0 0.0
      %2508 = vmatpush1.msra.mxu0 0.0
      %2509 = vmatprep.mubr.f32.mxu0 0.0
      %2510 = vmatmul.mubr.f32.gmra.mrb[0].mxu0 %v983
      %v2511 = vpop.f32.mrb[0].mxu0
      %v2512 = vadd.f32 0.0, %v2511
      %v2513 = vpop.f32.mrb[0].mxu0
      %2514 = vdwg.mxu0
      %v2515 = vadd.f32 %v2362, %v2441
      %v2516 = vadd.f32 %v2363, %v2443
      %v2517 = vadd.f32 %v2364, %v2512
      %2518 = vrot.lane.b32.xlu0 %v1612, 111
      %v2519 = vpop.permute.xlu0 %2518
      %2520 = vrot.lane.b32.xlu0 %v1613, 111
      %v2521 = vpop.permute.xlu0 %2520
      %2522 = vrot.lane.b32.xlu0 %v1614, 111
      %v2523 = vpop.permute.xlu0 %2522
      %v2524 = vsel %vm1135, %v2521, %v2523
      %v2525 = vsel %vm1135, %v2519, %v2521
      %v2526 = vsel %vm1135, %v2523, %v2519
      %2527 = vmatprep.subr.mxu0 %v2524
      %2528 = vmatpush1.msra.mxu0 %v2525
      %2529 = vmatprep.subr.mxu0 0.0
      %2530 = vmatpush1.msra.mxu0 0.0
      %2531 = vmatprep.subr.mxu0 0.0
      %2532 = vmatpush1.msra.mxu0 0.0
      %2533 = vmatprep.subr.mxu0 0.0
      %2534 = vmatpush1.msra.mxu0 0.0
      %2535 = vmatprep.subr.mxu0 0.0
      %2536 = vmatpush1.msra.mxu0 0.0
      %2537 = vmatprep.subr.mxu0 0.0
      %2538 = vmatpush1.msra.mxu0 0.0
      %2539 = vmatprep.subr.mxu0 0.0
      %2540 = vmatpush1.msra.mxu0 0.0
      %2541 = vmatprep.subr.mxu0 0.0
      %2542 = vmatpush1.msra.mxu0 0.0
      %2543 = vmatprep.subr.mxu0 0.0
      %2544 = vmatpush1.msra.mxu0 0.0
      %2545 = vmatprep.subr.mxu0 0.0
      %2546 = vmatpush1.msra.mxu0 0.0
      %2547 = vmatprep.subr.mxu0 0.0
      %2548 = vmatpush1.msra.mxu0 0.0
      %2549 = vmatprep.subr.mxu0 0.0
      %2550 = vmatpush1.msra.mxu0 0.0
      %2551 = vmatprep.subr.mxu0 0.0
      %2552 = vmatpush1.msra.mxu0 0.0
      %2553 = vmatprep.subr.mxu0 0.0
      %2554 = vmatpush1.msra.mxu0 0.0
      %2555 = vmatprep.subr.mxu0 0.0
      %2556 = vmatpush1.msra.mxu0 0.0
      %2557 = vmatprep.subr.mxu0 0.0
      %2558 = vmatpush1.msra.mxu0 0.0
      %2559 = vmatprep.subr.mxu0 0.0
      %2560 = vmatpush1.msra.mxu0 0.0
      %2561 = vmatprep.subr.mxu0 0.0
      %2562 = vmatpush1.msra.mxu0 0.0
      %2563 = vmatprep.subr.mxu0 0.0
      %2564 = vmatpush1.msra.mxu0 0.0
      %2565 = vmatprep.subr.mxu0 0.0
      %2566 = vmatpush1.msra.mxu0 0.0
      %2567 = vmatprep.subr.mxu0 0.0
      %2568 = vmatpush1.msra.mxu0 0.0
      %2569 = vmatprep.subr.mxu0 0.0
      %2570 = vmatpush1.msra.mxu0 0.0
      %2571 = vmatprep.subr.mxu0 0.0
      %2572 = vmatpush1.msra.mxu0 0.0
      %2573 = vmatprep.subr.mxu0 0.0
      %2574 = vmatpush1.msra.mxu0 0.0
      %2575 = vmatprep.subr.mxu0 0.0
      %2576 = vmatpush1.msra.mxu0 0.0
      %2577 = vmatprep.subr.mxu0 0.0
      %2578 = vmatpush1.msra.mxu0 0.0
      %2579 = vmatprep.subr.mxu0 0.0
      %2580 = vmatpush1.msra.mxu0 0.0
      %2581 = vmatprep.subr.mxu0 0.0
      %2582 = vmatpush1.msra.mxu0 0.0
      %2583 = vmatprep.subr.mxu0 0.0
      %2584 = vmatpush1.msra.mxu0 0.0
      %2585 = vmatprep.subr.mxu0 0.0
      %2586 = vmatpush1.msra.mxu0 0.0
      %2587 = vmatprep.subr.mxu0 0.0
      %2588 = vmatpush1.msra.mxu0 0.0
      %2589 = vmatprep.subr.mxu0 0.0
      %2590 = vmatpush1.msra.mxu0 0.0
      %2591 = vmatprep.mubr.f32.mxu0 0.0
      %2592 = vmatmul.mubr.f32.gmra.mrb[0].mxu0 %v1140
      %v2593 = vpop.f32.mrb[0].mxu0
      %v2594 = vadd.f32 0.0, %v2593
      %v2595 = vpop.f32.mrb[0].mxu0
      %v2596 = vadd.f32 0.0, %v2595
      %2597 = vdwg.mxu0
      %2598 = vmatprep.subr.mxu0 0.0
      %2599 = vmatpush1.msra.mxu0 %v2526
      %2600 = vmatprep.subr.mxu0 0.0
      %2601 = vmatpush1.msra.mxu0 0.0
      %2602 = vmatprep.subr.mxu0 0.0
      %2603 = vmatpush1.msra.mxu0 0.0
      %2604 = vmatprep.subr.mxu0 0.0
      %2605 = vmatpush1.msra.mxu0 0.0
      %2606 = vmatprep.subr.mxu0 0.0
      %2607 = vmatpush1.msra.mxu0 0.0
      %2608 = vmatprep.subr.mxu0 0.0
      %2609 = vmatpush1.msra.mxu0 0.0
      %2610 = vmatprep.subr.mxu0 0.0
      %2611 = vmatpush1.msra.mxu0 0.0
      %2612 = vmatprep.subr.mxu0 0.0
      %2613 = vmatpush1.msra.mxu0 0.0
      %2614 = vmatprep.subr.mxu0 0.0
      %2615 = vmatpush1.msra.mxu0 0.0
      %2616 = vmatprep.subr.mxu0 0.0
      %2617 = vmatpush1.msra.mxu0 0.0
      %2618 = vmatprep.subr.mxu0 0.0
      %2619 = vmatpush1.msra.mxu0 0.0
      %2620 = vmatprep.subr.mxu0 0.0
      %2621 = vmatpush1.msra.mxu0 0.0
      %2622 = vmatprep.subr.mxu0 0.0
      %2623 = vmatpush1.msra.mxu0 0.0
      %2624 = vmatprep.subr.mxu0 0.0
      %2625 = vmatpush1.msra.mxu0 0.0
      %2626 = vmatprep.subr.mxu0 0.0
      %2627 = vmatpush1.msra.mxu0 0.0
      %2628 = vmatprep.subr.mxu0 0.0
      %2629 = vmatpush1.msra.mxu0 0.0
      %2630 = vmatprep.subr.mxu0 0.0
      %2631 = vmatpush1.msra.mxu0 0.0
      %2632 = vmatprep.subr.mxu0 0.0
      %2633 = vmatpush1.msra.mxu0 0.0
      %2634 = vmatprep.subr.mxu0 0.0
      %2635 = vmatpush1.msra.mxu0 0.0
      %2636 = vmatprep.subr.mxu0 0.0
      %2637 = vmatpush1.msra.mxu0 0.0
      %2638 = vmatprep.subr.mxu0 0.0
      %2639 = vmatpush1.msra.mxu0 0.0
      %2640 = vmatprep.subr.mxu0 0.0
      %2641 = vmatpush1.msra.mxu0 0.0
      %2642 = vmatprep.subr.mxu0 0.0
      %2643 = vmatpush1.msra.mxu0 0.0
      %2644 = vmatprep.subr.mxu0 0.0
      %2645 = vmatpush1.msra.mxu0 0.0
      %2646 = vmatprep.subr.mxu0 0.0
      %2647 = vmatpush1.msra.mxu0 0.0
      %2648 = vmatprep.subr.mxu0 0.0
      %2649 = vmatpush1.msra.mxu0 0.0
      %2650 = vmatprep.subr.mxu0 0.0
      %2651 = vmatpush1.msra.mxu0 0.0
      %2652 = vmatprep.subr.mxu0 0.0
      %2653 = vmatpush1.msra.mxu0 0.0
      %2654 = vmatprep.subr.mxu0 0.0
      %2655 = vmatpush1.msra.mxu0 0.0
      %2656 = vmatprep.subr.mxu0 0.0
      %2657 = vmatpush1.msra.mxu0 0.0
      %2658 = vmatprep.subr.mxu0 0.0
      %2659 = vmatpush1.msra.mxu0 0.0
      %2660 = vmatprep.subr.mxu0 0.0
      %2661 = vmatpush1.msra.mxu0 0.0
      %2662 = vmatprep.mubr.f32.mxu0 0.0
      %2663 = vmatmul.mubr.f32.gmra.mrb[0].mxu0 %v1140
      %v2664 = vpop.f32.mrb[0].mxu0
      %v2665 = vadd.f32 0.0, %v2664
      %v2666 = vpop.f32.mrb[0].mxu0
      %2667 = vdwg.mxu0
      %v2668 = vadd.f32 %v2515, %v2594
      %v2669 = vadd.f32 %v2516, %v2596
      %v2670 = vadd.f32 %v2517, %v2665
      %2671 = vrot.lane.b32.xlu0 %v1612, 110
      %v2672 = vpop.permute.xlu0 %2671
      %2673 = vrot.lane.b32.xlu0 %v1613, 110
      %v2674 = vpop.permute.xlu0 %2673
      %2675 = vrot.lane.b32.xlu0 %v1614, 110
      %v2676 = vpop.permute.xlu0 %2675
      %v2677 = vsel %vm1292, %v2674, %v2676
      %v2678 = vsel %vm1292, %v2672, %v2674
      %v2679 = vsel %vm1292, %v2676, %v2672
      %2680 = vmatprep.subr.mxu0 %v2677
      %2681 = vmatpush1.msra.mxu0 %v2678
      %2682 = vmatprep.subr.mxu0 0.0
      %2683 = vmatpush1.msra.mxu0 0.0
      %2684 = vmatprep.subr.mxu0 0.0
      %2685 = vmatpush1.msra.mxu0 0.0
      %2686 = vmatprep.subr.mxu0 0.0
      %2687 = vmatpush1.msra.mxu0 0.0
      %2688 = vmatprep.subr.mxu0 0.0
      %2689 = vmatpush1.msra.mxu0 0.0
      %2690 = vmatprep.subr.mxu0 0.0
      %2691 = vmatpush1.msra.mxu0 0.0
      %2692 = vmatprep.subr.mxu0 0.0
      %2693 = vmatpush1.msra.mxu0 0.0
      %2694 = vmatprep.subr.mxu0 0.0
      %2695 = vmatpush1.msra.mxu0 0.0
      %2696 = vmatprep.subr.mxu0 0.0
      %2697 = vmatpush1.msra.mxu0 0.0
      %2698 = vmatprep.subr.mxu0 0.0
      %2699 = vmatpush1.msra.mxu0 0.0
      %2700 = vmatprep.subr.mxu0 0.0
      %2701 = vmatpush1.msra.mxu0 0.0
      %2702 = vmatprep.subr.mxu0 0.0
      %2703 = vmatpush1.msra.mxu0 0.0
      %2704 = vmatprep.subr.mxu0 0.0
      %2705 = vmatpush1.msra.mxu0 0.0
      %2706 = vmatprep.subr.mxu0 0.0
      %2707 = vmatpush1.msra.mxu0 0.0
      %2708 = vmatprep.subr.mxu0 0.0
      %2709 = vmatpush1.msra.mxu0 0.0
      %2710 = vmatprep.subr.mxu0 0.0
      %2711 = vmatpush1.msra.mxu0 0.0
      %2712 = vmatprep.subr.mxu0 0.0
      %2713 = vmatpush1.msra.mxu0 0.0
      %2714 = vmatprep.subr.mxu0 0.0
      %2715 = vmatpush1.msra.mxu0 0.0
      %2716 = vmatprep.subr.mxu0 0.0
      %2717 = vmatpush1.msra.mxu0 0.0
      %2718 = vmatprep.subr.mxu0 0.0
      %2719 = vmatpush1.msra.mxu0 0.0
      %2720 = vmatprep.subr.mxu0 0.0
      %2721 = vmatpush1.msra.mxu0 0.0
      %2722 = vmatprep.subr.mxu0 0.0
      %2723 = vmatpush1.msra.mxu0 0.0
      %2724 = vmatprep.subr.mxu0 0.0
      %2725 = vmatpush1.msra.mxu0 0.0
      %2726 = vmatprep.subr.mxu0 0.0
      %2727 = vmatpush1.msra.mxu0 0.0
      %2728 = vmatprep.subr.mxu0 0.0
      %2729 = vmatpush1.msra.mxu0 0.0
      %2730 = vmatprep.subr.mxu0 0.0
      %2731 = vmatpush1.msra.mxu0 0.0
      %2732 = vmatprep.subr.mxu0 0.0
      %2733 = vmatpush1.msra.mxu0 0.0
      %2734 = vmatprep.subr.mxu0 0.0
      %2735 = vmatpush1.msra.mxu0 0.0
      %2736 = vmatprep.subr.mxu0 0.0
      %2737 = vmatpush1.msra.mxu0 0.0
      %2738 = vmatprep.subr.mxu0 0.0
      %2739 = vmatpush1.msra.mxu0 0.0
      %2740 = vmatprep.subr.mxu0 0.0
      %2741 = vmatpush1.msra.mxu0 0.0
      %2742 = vmatprep.subr.mxu0 0.0
      %2743 = vmatpush1.msra.mxu0 0.0
      %2744 = vmatprep.mubr.f32.mxu0 0.0
      %2745 = vmatmul.mubr.f32.gmra.mrb[0].mxu0 %v1297
      %v2746 = vpop.f32.mrb[0].mxu0
      %v2747 = vadd.f32 0.0, %v2746
      %v2748 = vpop.f32.mrb[0].mxu0
      %v2749 = vadd.f32 0.0, %v2748
      %2750 = vdwg.mxu0
      %2751 = vmatprep.subr.mxu0 0.0
      %2752 = vmatpush1.msra.mxu0 %v2679
      %2753 = vmatprep.subr.mxu0 0.0
      %2754 = vmatpush1.msra.mxu0 0.0
      %2755 = vmatprep.subr.mxu0 0.0
      %2756 = vmatpush1.msra.mxu0 0.0
      %2757 = vmatprep.subr.mxu0 0.0
      %2758 = vmatpush1.msra.mxu0 0.0
      %2759 = vmatprep.subr.mxu0 0.0
      %2760 = vmatpush1.msra.mxu0 0.0
      %2761 = vmatprep.subr.mxu0 0.0
      %2762 = vmatpush1.msra.mxu0 0.0
      %2763 = vmatprep.subr.mxu0 0.0
      %2764 = vmatpush1.msra.mxu0 0.0
      %2765 = vmatprep.subr.mxu0 0.0
      %2766 = vmatpush1.msra.mxu0 0.0
      %2767 = vmatprep.subr.mxu0 0.0
      %2768 = vmatpush1.msra.mxu0 0.0
      %2769 = vmatprep.subr.mxu0 0.0
      %2770 = vmatpush1.msra.mxu0 0.0
      %2771 = vmatprep.subr.mxu0 0.0
      %2772 = vmatpush1.msra.mxu0 0.0
      %2773 = vmatprep.subr.mxu0 0.0
      %2774 = vmatpush1.msra.mxu0 0.0
      %2775 = vmatprep.subr.mxu0 0.0
      %2776 = vmatpush1.msra.mxu0 0.0
      %2777 = vmatprep.subr.mxu0 0.0
      %2778 = vmatpush1.msra.mxu0 0.0
      %2779 = vmatprep.subr.mxu0 0.0
      %2780 = vmatpush1.msra.mxu0 0.0
      %2781 = vmatprep.subr.mxu0 0.0
      %2782 = vmatpush1.msra.mxu0 0.0
      %2783 = vmatprep.subr.mxu0 0.0
      %2784 = vmatpush1.msra.mxu0 0.0
      %2785 = vmatprep.subr.mxu0 0.0
      %2786 = vmatpush1.msra.mxu0 0.0
      %2787 = vmatprep.subr.mxu0 0.0
      %2788 = vmatpush1.msra.mxu0 0.0
      %2789 = vmatprep.subr.mxu0 0.0
      %2790 = vmatpush1.msra.mxu0 0.0
      %2791 = vmatprep.subr.mxu0 0.0
      %2792 = vmatpush1.msra.mxu0 0.0
      %2793 = vmatprep.subr.mxu0 0.0
      %2794 = vmatpush1.msra.mxu0 0.0
      %2795 = vmatprep.subr.mxu0 0.0
      %2796 = vmatpush1.msra.mxu0 0.0
      %2797 = vmatprep.subr.mxu0 0.0
      %2798 = vmatpush1.msra.mxu0 0.0
      %2799 = vmatprep.subr.mxu0 0.0
      %2800 = vmatpush1.msra.mxu0 0.0
      %2801 = vmatprep.subr.mxu0 0.0
      %2802 = vmatpush1.msra.mxu0 0.0
      %2803 = vmatprep.subr.mxu0 0.0
      %2804 = vmatpush1.msra.mxu0 0.0
      %2805 = vmatprep.subr.mxu0 0.0
      %2806 = vmatpush1.msra.mxu0 0.0
      %2807 = vmatprep.subr.mxu0 0.0
      %2808 = vmatpush1.msra.mxu0 0.0
      %2809 = vmatprep.subr.mxu0 0.0
      %2810 = vmatpush1.msra.mxu0 0.0
      %2811 = vmatprep.subr.mxu0 0.0
      %2812 = vmatpush1.msra.mxu0 0.0
      %2813 = vmatprep.subr.mxu0 0.0
      %2814 = vmatpush1.msra.mxu0 0.0
      %2815 = vmatprep.mubr.f32.mxu0 0.0
      %2816 = vmatmul.mubr.f32.gmra.mrb[0].mxu0 %v1297
      %v2817 = vpop.f32.mrb[0].mxu0
      %v2818 = vadd.f32 0.0, %v2817
      %v2819 = vpop.f32.mrb[0].mxu0
      %2820 = vdwg.mxu0
      %v2821 = vadd.f32 %v2668, %v2747
      %v2822 = vadd.f32 %v2669, %v2749
      %v2823 = vadd.f32 %v2670, %v2818
      %2824 = vrot.lane.b32.xlu0 %v1612, 109
      %v2825 = vpop.permute.xlu0 %2824
      %2826 = vrot.lane.b32.xlu0 %v1613, 109
      %v2827 = vpop.permute.xlu0 %2826
      %2828 = vrot.lane.b32.xlu0 %v1614, 109
      %v2829 = vpop.permute.xlu0 %2828
      %v2830 = vsel %vm1449, %v2827, %v2829
      %v2831 = vsel %vm1449, %v2825, %v2827
      %v2832 = vsel %vm1449, %v2829, %v2825
      %2833 = vmatprep.subr.mxu0 %v2830
      %2834 = vmatpush1.msra.mxu0 %v2831
      %2835 = vmatprep.subr.mxu0 0.0
      %2836 = vmatpush1.msra.mxu0 0.0
      %2837 = vmatprep.subr.mxu0 0.0
      %2838 = vmatpush1.msra.mxu0 0.0
      %2839 = vmatprep.subr.mxu0 0.0
      %2840 = vmatpush1.msra.mxu0 0.0
      %2841 = vmatprep.subr.mxu0 0.0
      %2842 = vmatpush1.msra.mxu0 0.0
      %2843 = vmatprep.subr.mxu0 0.0
      %2844 = vmatpush1.msra.mxu0 0.0
      %2845 = vmatprep.subr.mxu0 0.0
      %2846 = vmatpush1.msra.mxu0 0.0
      %2847 = vmatprep.subr.mxu0 0.0
      %2848 = vmatpush1.msra.mxu0 0.0
      %2849 = vmatprep.subr.mxu0 0.0
      %2850 = vmatpush1.msra.mxu0 0.0
      %2851 = vmatprep.subr.mxu0 0.0
      %2852 = vmatpush1.msra.mxu0 0.0
      %2853 = vmatprep.subr.mxu0 0.0
      %2854 = vmatpush1.msra.mxu0 0.0
      %2855 = vmatprep.subr.mxu0 0.0
      %2856 = vmatpush1.msra.mxu0 0.0
      %2857 = vmatprep.subr.mxu0 0.0
      %2858 = vmatpush1.msra.mxu0 0.0
      %2859 = vmatprep.subr.mxu0 0.0
      %2860 = vmatpush1.msra.mxu0 0.0
      %2861 = vmatprep.subr.mxu0 0.0
      %2862 = vmatpush1.msra.mxu0 0.0
      %2863 = vmatprep.subr.mxu0 0.0
      %2864 = vmatpush1.msra.mxu0 0.0
      %2865 = vmatprep.subr.mxu0 0.0
      %2866 = vmatpush1.msra.mxu0 0.0
      %2867 = vmatprep.subr.mxu0 0.0
      %2868 = vmatpush1.msra.mxu0 0.0
      %2869 = vmatprep.subr.mxu0 0.0
      %2870 = vmatpush1.msra.mxu0 0.0
      %2871 = vmatprep.subr.mxu0 0.0
      %2872 = vmatpush1.msra.mxu0 0.0
      %2873 = vmatprep.subr.mxu0 0.0
      %2874 = vmatpush1.msra.mxu0 0.0
      %2875 = vmatprep.subr.mxu0 0.0
      %2876 = vmatpush1.msra.mxu0 0.0
      %2877 = vmatprep.subr.mxu0 0.0
      %2878 = vmatpush1.msra.mxu0 0.0
      %2879 = vmatprep.subr.mxu0 0.0
      %2880 = vmatpush1.msra.mxu0 0.0
      %2881 = vmatprep.subr.mxu0 0.0
      %2882 = vmatpush1.msra.mxu0 0.0
      %2883 = vmatprep.subr.mxu0 0.0
      %2884 = vmatpush1.msra.mxu0 0.0
      %2885 = vmatprep.subr.mxu0 0.0
      %2886 = vmatpush1.msra.mxu0 0.0
      %2887 = vmatprep.subr.mxu0 0.0
      %2888 = vmatpush1.msra.mxu0 0.0
      %2889 = vmatprep.subr.mxu0 0.0
      %2890 = vmatpush1.msra.mxu0 0.0
      %2891 = vmatprep.subr.mxu0 0.0
      %2892 = vmatpush1.msra.mxu0 0.0
      %2893 = vmatprep.subr.mxu0 0.0
      %2894 = vmatpush1.msra.mxu0 0.0
      %2895 = vmatprep.subr.mxu0 0.0
      %2896 = vmatpush1.msra.mxu0 0.0
      %2897 = vmatprep.mubr.f32.mxu0 0.0
      %2898 = vmatmul.mubr.f32.gmra.mrb[0].mxu0 %v1454
      %v2899 = vpop.f32.mrb[0].mxu0
      %v2900 = vadd.f32 0.0, %v2899
      %v2901 = vpop.f32.mrb[0].mxu0
      %v2902 = vadd.f32 0.0, %v2901
      %2903 = vdwg.mxu0
      %2904 = vmatprep.subr.mxu0 0.0
      %2905 = vmatpush1.msra.mxu0 %v2832
      %2906 = vmatprep.subr.mxu0 0.0
      %2907 = vmatpush1.msra.mxu0 0.0
      %2908 = vmatprep.subr.mxu0 0.0
      %2909 = vmatpush1.msra.mxu0 0.0
      %2910 = vmatprep.subr.mxu0 0.0
      %2911 = vmatpush1.msra.mxu0 0.0
      %2912 = vmatprep.subr.mxu0 0.0
      %2913 = vmatpush1.msra.mxu0 0.0
      %2914 = vmatprep.subr.mxu0 0.0
      %2915 = vmatpush1.msra.mxu0 0.0
      %2916 = vmatprep.subr.mxu0 0.0
      %2917 = vmatpush1.msra.mxu0 0.0
      %2918 = vmatprep.subr.mxu0 0.0
      %2919 = vmatpush1.msra.mxu0 0.0
      %2920 = vmatprep.subr.mxu0 0.0
      %2921 = vmatpush1.msra.mxu0 0.0
      %2922 = vmatprep.subr.mxu0 0.0
      %2923 = vmatpush1.msra.mxu0 0.0
      %2924 = vmatprep.subr.mxu0 0.0
      %2925 = vmatpush1.msra.mxu0 0.0
      %2926 = vmatprep.subr.mxu0 0.0
      %2927 = vmatpush1.msra.mxu0 0.0
      %2928 = vmatprep.subr.mxu0 0.0
      %2929 = vmatpush1.msra.mxu0 0.0
      %2930 = vmatprep.subr.mxu0 0.0
      %2931 = vmatpush1.msra.mxu0 0.0
      %2932 = vmatprep.subr.mxu0 0.0
      %2933 = vmatpush1.msra.mxu0 0.0
      %2934 = vmatprep.subr.mxu0 0.0
      %2935 = vmatpush1.msra.mxu0 0.0
      %2936 = vmatprep.subr.mxu0 0.0
      %2937 = vmatpush1.msra.mxu0 0.0
      %2938 = vmatprep.subr.mxu0 0.0
      %2939 = vmatpush1.msra.mxu0 0.0
      %2940 = vmatprep.subr.mxu0 0.0
      %2941 = vmatpush1.msra.mxu0 0.0
      %2942 = vmatprep.subr.mxu0 0.0
      %2943 = vmatpush1.msra.mxu0 0.0
      %2944 = vmatprep.subr.mxu0 0.0
      %2945 = vmatpush1.msra.mxu0 0.0
      %2946 = vmatprep.subr.mxu0 0.0
      %2947 = vmatpush1.msra.mxu0 0.0
      %2948 = vmatprep.subr.mxu0 0.0
      %2949 = vmatpush1.msra.mxu0 0.0
      %2950 = vmatprep.subr.mxu0 0.0
      %2951 = vmatpush1.msra.mxu0 0.0
      %2952 = vmatprep.subr.mxu0 0.0
      %2953 = vmatpush1.msra.mxu0 0.0
      %2954 = vmatprep.subr.mxu0 0.0
      %2955 = vmatpush1.msra.mxu0 0.0
      %2956 = vmatprep.subr.mxu0 0.0
      %2957 = vmatpush1.msra.mxu0 0.0
      %2958 = vmatprep.subr.mxu0 0.0
      %2959 = vmatpush1.msra.mxu0 0.0
      %2960 = vmatprep.subr.mxu0 0.0
      %2961 = vmatpush1.msra.mxu0 0.0
      %2962 = vmatprep.subr.mxu0 0.0
      %2963 = vmatpush1.msra.mxu0 0.0
      %2964 = vmatprep.subr.mxu0 0.0
      %2965 = vmatpush1.msra.mxu0 0.0
      %2966 = vmatprep.subr.mxu0 0.0
      %2967 = vmatpush1.msra.mxu0 0.0
      %2968 = vmatprep.mubr.f32.mxu0 0.0
      %2969 = vmatmul.mubr.f32.gmra.mrb[0].mxu0 %v1454
      %v2970 = vpop.f32.mrb[0].mxu0
      %v2971 = vadd.f32 0.0, %v2970
      %v2972 = vpop.f32.mrb[0].mxu0
      %2973 = vdwg.mxu0
      %v2974 = vadd.f32 %v2821, %v2900
      %v2975 = vadd.f32 %v2822, %v2902
      %v2976 = vadd.f32 %v2823, %v2971
      %v2977 = vadd.f32 %v2974, %v1603
      %v2978 = vadd.f32 %v2975, %v1603
      %v2979 = vadd.f32 %v2976, %v1603
      %s2980 = scalar_lea.vmem %s177, 24
      %2981 = vst [vmem:[%s2980] sm:$0xff] %v2977
      %2982 = vst [vmem:[%s2980 + $0x8] sm:$0xff] %v2978
      %2983 = vst [vmem:[%s2980 + $0x10] sm:$0xff] %v2979
      %s2984 = smul.u32 2, %s14
      %p2985 = scmp.lt.s32.totalorder %s2984, 15
      %s2986 = scalar_select %p2985, %s2984, 15
      %s2987 = smul.addr %s2986, 3
      %s2988 = smul.addr %s2987, 8
      %s2989 = scalar_lea.vmem %s3, %s2988
      // Predicated region
      $region33: #{time_distributed_forward.1} parent=31 // pred_check
        %p2990 = pneg %p100
      $region34: #{time_distributed_forward.1} parent=31 // pred_check_branch
        %2992 = sbr.rel (%p2990) target = $region36
      $region35: #{time_distributed_forward.1} parent=31 // pred_region
        %s2993 = smul.u32 2, %s14
      $region36: #{time_distributed_forward.1} parent=31 // pred_fallthru
        _
    $region32: #{time_distributed_forward.1} parent=5 // pred_fallthru
      _
    %p2994 = scmp.le.s32.totalorder 2, %s9
    // Predicated region
    $region37: #{time_distributed_forward.1} parent=5 // pred_check
      %p2995 = pneg %p2994
    $region38: #{time_distributed_forward.1} parent=5 // pred_check_branch
      %2997 = sbr.rel (%p2995) target = $region40
    $region39: #{time_distributed_forward.1} parent=5 // pred_region
      %s2998 = ssub.s32 %s9, 2
      // Predicated region
      $region41: #{time_distributed_forward.1} parent=39 // pred_check
        %p2999 = pneg %p106
      $region42: #{time_distributed_forward.1} parent=39 // pred_check_branch
        %3001 = sbr.rel (%p2999) target = $region44
      $region43: #{time_distributed_forward.1} parent=39 // pred_region
        %s3002 = smul.u32 2, %s15
        %p3003 = scmp.lt.s32.totalorder %s3002, 15
        %s3004 = scalar_select %p3003, %s3002, 15
        %s3005 = smul.addr %s3004, 3
        %s3006 = smul.addr %s3005, 8
        %s3007 = scalar_lea.vmem %s3, %s3006
      $region44: #{time_distributed_forward.1} parent=39 // pred_fallthru
        _
    $region40: #{time_distributed_forward.1} parent=5 // pred_fallthru
      _
  $region6: #{time_distributed_forward.1} parent=0 // loop_footer
    %s13 = sadd.s32 1, %s9
  $region7: #{time_distributed_forward.1} parent=0 // loop_footer_branch
    %8 = sbr.rel target = $region3
  $region8: #{time_distributed_forward.1} parent=0 // loop_exit
    _

</llo_original>
